<compile_context>
chip_gen: v5e
topology: v5e:2x2
jax: 0.10.0
libtpu: 0.0.40
codegen_flags: <defaults>
</compile_context>

<pallas_src>
import functools

import jax
import jax.numpy as jnp
from jax.experimental import pallas as pl
from jax.experimental.pallas import tpu as pltpu

LANE_BLOCK = 128  # one vreg lane width; the B*C axis is tiled in chunks of this


def _depth_corr_kernel(x_ref, k_ref, o_ref, *, hk, wk, ho, wo):
    """Depthwise valid cross-correlation over one 128-lane channel block.

    x_ref : (Hx, Wx, 128) VMEM   search feature,  lanes = channel block
    k_ref : (Hk, Wk, 128) VMEM   template kernel, lanes = channel block
    o_ref : (Ho, Wo, 128) VMEM   valid-correlation output
    """
    acc = jnp.zeros(o_ref.shape, jnp.float32)
    # Static unroll over the Hk*Wk taps.  Each tap window is loaded directly
    # from the VMEM ref (vld slots have headroom) instead of slicing a fully
    # loaded, register-resident x: this keeps live vregs low (acc ~18 vregs +
    # one transient window) and avoids per-tap register relayouts.  The tap
    # weight is likewise read straight from k_ref.  The multiply runs in the
    # input dtype (bf16 stays bf16 on v6e/v7x) and accumulates in f32.
    for p in range(hk):
        for q in range(wk):
            xt = x_ref[p:p + ho, q:q + wo, :]      # (Ho, Wo, 128) offset load
            kt = k_ref[p:p + 1, q:q + 1, :]        # (1, 1, 128) tap
            acc = acc + (xt * kt).astype(jnp.float32)
    o_ref[...] = acc.astype(o_ref.dtype)


def depth_corr(x, kernel):
    """Pallas equivalent of PyTorch `depth_corr` (F.conv2d with groups=B*C).

    x      : (B, C, Hx, Wx)   NCHW
    kernel : (B, C, Hk, Wk)   NCHW
    returns: (B, C, Ho, Wo)   NCHW, Ho = Hx-Hk+1, Wo = Wx-Wk+1
    """
    b, c, hx, wx = x.shape
    bk, ck, hk, wk = kernel.shape
    assert (b, c) == (bk, ck), "x / kernel batch+channel must match"
    ho, wo = hx - hk + 1, wx - wk + 1
    bc = b * c

    # NCHW -> channels-last (H, W, B*C), pad B*C up to a multiple of 128 so
    # every lane block is dense (unmasked stores) and the grid tiles evenly.
    bc_pad = pl.cdiv(bc, LANE_BLOCK) * LANE_BLOCK
    x_hwc = jnp.transpose(x.reshape(bc, hx, wx), (1, 2, 0))
    k_hwc = jnp.transpose(kernel.reshape(bc, hk, wk), (1, 2, 0))
    if bc_pad != bc:
        pad = ((0, 0), (0, 0), (0, bc_pad - bc))
        x_hwc = jnp.pad(x_hwc, pad)
        k_hwc = jnp.pad(k_hwc, pad)

    n_blk = bc_pad // LANE_BLOCK
    out_hwc = pl.pallas_call(
        functools.partial(_depth_corr_kernel, hk=hk, wk=wk, ho=ho, wo=wo),
        out_shape=jax.ShapeDtypeStruct((ho, wo, bc_pad), x.dtype),
        grid=(n_blk,),
        in_specs=[
            pl.BlockSpec((hx, wx, LANE_BLOCK), lambda i: (0, 0, i)),
            pl.BlockSpec((hk, wk, LANE_BLOCK), lambda i: (0, 0, i)),
        ],
        out_specs=pl.BlockSpec((ho, wo, LANE_BLOCK), lambda i: (0, 0, i)),
        compiler_params=pltpu.CompilerParams(
            dimension_semantics=("parallel",)),   # shards blocks across TCs (v7x)
    )(x_hwc, k_hwc)

    # Strip channel padding (padded lanes are exact zeros and never leak).
    out_hwc = out_hwc[:, :, :bc]
    # (Ho, Wo, B*C) -> NCHW
    return jnp.transpose(out_hwc, (2, 0, 1)).reshape(b, c, ho, wo)


def depth_corr_ref(x, kernel):
    """Pure-JAX reference matching PyTorch F.conv2d(groups=B*C) semantics."""
    _, _, hx, wx = x.shape
    _, _, hk, wk = kernel.shape
    ho, wo = hx - hk + 1, wx - wk + 1
    acc = jnp.zeros(x.shape[:2] + (ho, wo), jnp.float32)
    for p in range(hk):
        for q in range(wk):
            acc = acc + x[:, :, p:p + ho, q:q + wo].astype(jnp.float32) \
                      * kernel[:, :, p:p + 1, q:q + 1].astype(jnp.float32)
    return acc.astype(x.dtype)


if __name__ == "__main__":
    key = jax.random.PRNGKey(0)
    k1, k2, k3, k4 = jax.random.split(key, 4)

    # Shapes consistent with DepthCorr: layer3 feature 16x16 spatial,
    # pool_size=8 -> 8x8 template from PrRoIPool.
    Hx = Wx = 16
    POOL = 8

    # Case 1: B*C = 128 exactly -> one fully lane-dense block, no padding.
    B1, C1 = 2, 64
    feat_a = jax.random.normal(k1, (B1, C1, Hx, Wx), dtype=jnp.float32)
    tmpl_a = jax.random.normal(k2, (B1, C1, POOL, POOL), dtype=jnp.float32)
    out_a = jax.block_until_ready(depth_corr(feat_a, tmpl_a))
    ref_a = depth_corr_ref(feat_a, tmpl_a)
    assert out_a.shape == (B1, C1, Hx - POOL + 1, Wx - POOL + 1), out_a.shape
    assert jnp.allclose(out_a, ref_a, atol=1e-4, rtol=1e-4), "mismatch (case 1)"

    # Case 2: B*C = 32 -> exercises the lane-padding + strip path.
    B2, C2 = 2, 16
    feat_b = jax.random.normal(k3, (B2, C2, Hx, Wx), dtype=jnp.float32)
    tmpl_b = jax.random.normal(k4, (B2, C2, POOL, POOL), dtype=jnp.float32)
    out_b = jax.block_until_ready(depth_corr(feat_b, tmpl_b))
    ref_b = depth_corr_ref(feat_b, tmpl_b)
    assert out_b.shape == (B2, C2, Hx - POOL + 1, Wx - POOL + 1), out_b.shape
    assert jnp.allclose(out_b, ref_b, atol=1e-4, rtol=1e-4), "mismatch (case 2)"

    print("KERNEL_OK")
</pallas_src>

<mosaic_0001>
module attributes {stable_mosaic.version = 11 : i64} {
  func.func @_depth_corr_kernel(%arg0: i32, %arg1: memref<16x16x128xf32, #tpu.memory_space<vmem>>, %arg2: memref<8x8x128xf32, #tpu.memory_space<vmem>>, %arg3: memref<9x9x128xf32, #tpu.memory_space<vmem>>) attributes {dimension_semantics = [#tpu.dimension_semantics<parallel>], iteration_bounds = array<i64: 1>, scalar_prefetch = 0 : i64, scratch_operands = 0 : i64, tpu.core_type = #tpu.core_type<tc>, window_params = [{transform_indices = @transform_0, window_bounds = array<i64: 16, 16, 128>}, {transform_indices = @transform_1, window_bounds = array<i64: 8, 8, 128>}, {transform_indices = @transform_2, window_bounds = array<i64: 9, 9, 128>}]} {
    %cst = arith.constant 0.000000e+00 : f32
    %0 = vector.broadcast %cst : f32 to vector<9x9x128xf32>
    %c0 = arith.constant 0 : index
    %c0_0 = arith.constant 0 : index
    %c0_1 = arith.constant 0 : index
    %1 = vector.load %arg1[%c0, %c0_0, %c0_1] : memref<16x16x128xf32, #tpu.memory_space<vmem>>, vector<9x9x128xf32>
    %c0_2 = arith.constant 0 : index
    %c0_3 = arith.constant 0 : index
    %c0_4 = arith.constant 0 : index
    %2 = vector.load %arg2[%c0_2, %c0_3, %c0_4] : memref<8x8x128xf32, #tpu.memory_space<vmem>>, vector<1x1x128xf32>
    %3 = vector.broadcast %2 : vector<1x1x128xf32> to vector<9x9x128xf32>
    %4 = arith.mulf %1, %3 : vector<9x9x128xf32>
    %5 = arith.addf %0, %4 : vector<9x9x128xf32>
    %c0_5 = arith.constant 0 : index
    %c1 = arith.constant 1 : index
    %c0_6 = arith.constant 0 : index
    %6 = vector.load %arg1[%c0_5, %c1, %c0_6] : memref<16x16x128xf32, #tpu.memory_space<vmem>>, vector<9x9x128xf32>
    %c0_7 = arith.constant 0 : index
    %c1_8 = arith.constant 1 : index
    %c0_9 = arith.constant 0 : index
    %7 = vector.load %arg2[%c0_7, %c1_8, %c0_9] : memref<8x8x128xf32, #tpu.memory_space<vmem>>, vector<1x1x128xf32>
    %8 = vector.broadcast %7 : vector<1x1x128xf32> to vector<9x9x128xf32>
    %9 = arith.mulf %6, %8 : vector<9x9x128xf32>
    %10 = arith.addf %5, %9 : vector<9x9x128xf32>
    %c0_10 = arith.constant 0 : index
    %c2 = arith.constant 2 : index
    %c0_11 = arith.constant 0 : index
    %11 = vector.load %arg1[%c0_10, %c2, %c0_11] : memref<16x16x128xf32, #tpu.memory_space<vmem>>, vector<9x9x128xf32>
    %c0_12 = arith.constant 0 : index
    %c2_13 = arith.constant 2 : index
    %c0_14 = arith.constant 0 : index
    %12 = vector.load %arg2[%c0_12, %c2_13, %c0_14] : memref<8x8x128xf32, #tpu.memory_space<vmem>>, vector<1x1x128xf32>
    %13 = vector.broadcast %12 : vector<1x1x128xf32> to vector<9x9x128xf32>
    %14 = arith.mulf %11, %13 : vector<9x9x128xf32>
    %15 = arith.addf %10, %14 : vector<9x9x128xf32>
    %c0_15 = arith.constant 0 : index
    %c3 = arith.constant 3 : index
    %c0_16 = arith.constant 0 : index
    %16 = vector.load %arg1[%c0_15, %c3, %c0_16] : memref<16x16x128xf32, #tpu.memory_space<vmem>>, vector<9x9x128xf32>
    %c0_17 = arith.constant 0 : index
    %c3_18 = arith.constant 3 : index
    %c0_19 = arith.constant 0 : index
    %17 = vector.load %arg2[%c0_17, %c3_18, %c0_19] : memref<8x8x128xf32, #tpu.memory_space<vmem>>, vector<1x1x128xf32>
    %18 = vector.broadcast %17 : vector<1x1x128xf32> to vector<9x9x128xf32>
    %19 = arith.mulf %16, %18 : vector<9x9x128xf32>
    %20 = arith.addf %15, %19 : vector<9x9x128xf32>
    %c0_20 = arith.constant 0 : index
    %c4 = arith.constant 4 : index
    %c0_21 = arith.constant 0 : index
    %21 = vector.load %arg1[%c0_20, %c4, %c0_21] : memref<16x16x128xf32, #tpu.memory_space<vmem>>, vector<9x9x128xf32>
    %c0_22 = arith.constant 0 : index
    %c4_23 = arith.constant 4 : index
    %c0_24 = arith.constant 0 : index
    %22 = vector.load %arg2[%c0_22, %c4_23, %c0_24] : memref<8x8x128xf32, #tpu.memory_space<vmem>>, vector<1x1x128xf32>
    %23 = vector.broadcast %22 : vector<1x1x128xf32> to vector<9x9x128xf32>
    %24 = arith.mulf %21, %23 : vector<9x9x128xf32>
    %25 = arith.addf %20, %24 : vector<9x9x128xf32>
    %c0_25 = arith.constant 0 : index
    %c5 = arith.constant 5 : index
    %c0_26 = arith.constant 0 : index
    %26 = vector.load %arg1[%c0_25, %c5, %c0_26] : memref<16x16x128xf32, #tpu.memory_space<vmem>>, vector<9x9x128xf32>
    %c0_27 = arith.constant 0 : index
    %c5_28 = arith.constant 5 : index
    %c0_29 = arith.constant 0 : index
    %27 = vector.load %arg2[%c0_27, %c5_28, %c0_29] : memref<8x8x128xf32, #tpu.memory_space<vmem>>, vector<1x1x128xf32>
    %28 = vector.broadcast %27 : vector<1x1x128xf32> to vector<9x9x128xf32>
    %29 = arith.mulf %26, %28 : vector<9x9x128xf32>
    %30 = arith.addf %25, %29 : vector<9x9x128xf32>
    %c0_30 = arith.constant 0 : index
    %c6 = arith.constant 6 : index
    %c0_31 = arith.constant 0 : index
    %31 = vector.load %arg1[%c0_30, %c6, %c0_31] : memref<16x16x128xf32, #tpu.memory_space<vmem>>, vector<9x9x128xf32>
    %c0_32 = arith.constant 0 : index
    %c6_33 = arith.constant 6 : index
    %c0_34 = arith.constant 0 : index
    %32 = vector.load %arg2[%c0_32, %c6_33, %c0_34] : memref<8x8x128xf32, #tpu.memory_space<vmem>>, vector<1x1x128xf32>
    %33 = vector.broadcast %32 : vector<1x1x128xf32> to vector<9x9x128xf32>
    %34 = arith.mulf %31, %33 : vector<9x9x128xf32>
    %35 = arith.addf %30, %34 : vector<9x9x128xf32>
    %c0_35 = arith.constant 0 : index
    %c7 = arith.constant 7 : index
    %c0_36 = arith.constant 0 : index
    %36 = vector.load %arg1[%c0_35, %c7, %c0_36] : memref<16x16x128xf32, #tpu.memory_space<vmem>>, vector<9x9x128xf32>
    %c0_37 = arith.constant 0 : index
    %c7_38 = arith.constant 7 : index
    %c0_39 = arith.constant 0 : index
    %37 = vector.load %arg2[%c0_37, %c7_38, %c0_39] : memref<8x8x128xf32, #tpu.memory_space<vmem>>, vector<1x1x128xf32>
    %38 = vector.broadcast %37 : vector<1x1x128xf32> to vector<9x9x128xf32>
    %39 = arith.mulf %36, %38 : vector<9x9x128xf32>
    %40 = arith.addf %35, %39 : vector<9x9x128xf32>
    %c1_40 = arith.constant 1 : index
    %c0_41 = arith.constant 0 : index
    %c0_42 = arith.constant 0 : index
    %41 = vector.load %arg1[%c1_40, %c0_41, %c0_42] : memref<16x16x128xf32, #tpu.memory_space<vmem>>, vector<9x9x128xf32>
    %c1_43 = arith.constant 1 : index
    %c0_44 = arith.constant 0 : index
    %c0_45 = arith.constant 0 : index
    %42 = vector.load %arg2[%c1_43, %c0_44, %c0_45] : memref<8x8x128xf32, #tpu.memory_space<vmem>>, vector<1x1x128xf32>
    %43 = vector.broadcast %42 : vector<1x1x128xf32> to vector<9x9x128xf32>
    %44 = arith.mulf %41, %43 : vector<9x9x128xf32>
    %45 = arith.addf %40, %44 : vector<9x9x128xf32>
    %c1_46 = arith.constant 1 : index
    %c1_47 = arith.constant 1 : index
    %c0_48 = arith.constant 0 : index
    %46 = vector.load %arg1[%c1_46, %c1_47, %c0_48] : memref<16x16x128xf32, #tpu.memory_space<vmem>>, vector<9x9x128xf32>
    %c1_49 = arith.constant 1 : index
    %c1_50 = arith.constant 1 : index
    %c0_51 = arith.constant 0 : index
    %47 = vector.load %arg2[%c1_49, %c1_50, %c0_51] : memref<8x8x128xf32, #tpu.memory_space<vmem>>, vector<1x1x128xf32>
    %48 = vector.broadcast %47 : vector<1x1x128xf32> to vector<9x9x128xf32>
    %49 = arith.mulf %46, %48 : vector<9x9x128xf32>
    %50 = arith.addf %45, %49 : vector<9x9x128xf32>
    %c1_52 = arith.constant 1 : index
    %c2_53 = arith.constant 2 : index
    %c0_54 = arith.constant 0 : index
    %51 = vector.load %arg1[%c1_52, %c2_53, %c0_54] : memref<16x16x128xf32, #tpu.memory_space<vmem>>, vector<9x9x128xf32>
    %c1_55 = arith.constant 1 : index
    %c2_56 = arith.constant 2 : index
    %c0_57 = arith.constant 0 : index
    %52 = vector.load %arg2[%c1_55, %c2_56, %c0_57] : memref<8x8x128xf32, #tpu.memory_space<vmem>>, vector<1x1x128xf32>
    %53 = vector.broadcast %52 : vector<1x1x128xf32> to vector<9x9x128xf32>
    %54 = arith.mulf %51, %53 : vector<9x9x128xf32>
    %55 = arith.addf %50, %54 : vector<9x9x128xf32>
    %c1_58 = arith.constant 1 : index
    %c3_59 = arith.constant 3 : index
    %c0_60 = arith.constant 0 : index
    %56 = vector.load %arg1[%c1_58, %c3_59, %c0_60] : memref<16x16x128xf32, #tpu.memory_space<vmem>>, vector<9x9x128xf32>
    %c1_61 = arith.constant 1 : index
    %c3_62 = arith.constant 3 : index
    %c0_63 = arith.constant 0 : index
    %57 = vector.load %arg2[%c1_61, %c3_62, %c0_63] : memref<8x8x128xf32, #tpu.memory_space<vmem>>, vector<1x1x128xf32>
    %58 = vector.broadcast %57 : vector<1x1x128xf32> to vector<9x9x128xf32>
    %59 = arith.mulf %56, %58 : vector<9x9x128xf32>
    %60 = arith.addf %55, %59 : vector<9x9x128xf32>
    %c1_64 = arith.constant 1 : index
    %c4_65 = arith.constant 4 : index
    %c0_66 = arith.constant 0 : index
    %61 = vector.load %arg1[%c1_64, %c4_65, %c0_66] : memref<16x16x128xf32, #tpu.memory_space<vmem>>, vector<9x9x128xf32>
    %c1_67 = arith.constant 1 : index
    %c4_68 = arith.constant 4 : index
    %c0_69 = arith.constant 0 : index
    %62 = vector.load %arg2[%c1_67, %c4_68, %c0_69] : memref<8x8x128xf32, #tpu.memory_space<vmem>>, vector<1x1x128xf32>
    %63 = vector.broadcast %62 : vector<1x1x128xf32> to vector<9x9x128xf32>
    %64 = arith.mulf %61, %63 : vector<9x9x128xf32>
    %65 = arith.addf %60, %64 : vector<9x9x128xf32>
    %c1_70 = arith.constant 1 : index
    %c5_71 = arith.constant 5 : index
    %c0_72 = arith.constant 0 : index
    %66 = vector.load %arg1[%c1_70, %c5_71, %c0_72] : memref<16x16x128xf32, #tpu.memory_space<vmem>>, vector<9x9x128xf32>
    %c1_73 = arith.constant 1 : index
    %c5_74 = arith.constant 5 : index
    %c0_75 = arith.constant 0 : index
    %67 = vector.load %arg2[%c1_73, %c5_74, %c0_75] : memref<8x8x128xf32, #tpu.memory_space<vmem>>, vector<1x1x128xf32>
    %68 = vector.broadcast %67 : vector<1x1x128xf32> to vector<9x9x128xf32>
    %69 = arith.mulf %66, %68 : vector<9x9x128xf32>
    %70 = arith.addf %65, %69 : vector<9x9x128xf32>
    %c1_76 = arith.constant 1 : index
    %c6_77 = arith.constant 6 : index
    %c0_78 = arith.constant 0 : index
    %71 = vector.load %arg1[%c1_76, %c6_77, %c0_78] : memref<16x16x128xf32, #tpu.memory_space<vmem>>, vector<9x9x128xf32>
    %c1_79 = arith.constant 1 : index
    %c6_80 = arith.constant 6 : index
    %c0_81 = arith.constant 0 : index
    %72 = vector.load %arg2[%c1_79, %c6_80, %c0_81] : memref<8x8x128xf32, #tpu.memory_space<vmem>>, vector<1x1x128xf32>
    %73 = vector.broadcast %72 : vector<1x1x128xf32> to vector<9x9x128xf32>
    %74 = arith.mulf %71, %73 : vector<9x9x128xf32>
    %75 = arith.addf %70, %74 : vector<9x9x128xf32>
    %c1_82 = arith.constant 1 : index
    %c7_83 = arith.constant 7 : index
    %c0_84 = arith.constant 0 : index
    %76 = vector.load %arg1[%c1_82, %c7_83, %c0_84] : memref<16x16x128xf32, #tpu.memory_space<vmem>>, vector<9x9x128xf32>
    %c1_85 = arith.constant 1 : index
    %c7_86 = arith.constant 7 : index
    %c0_87 = arith.constant 0 : index
    %77 = vector.load %arg2[%c1_85, %c7_86, %c0_87] : memref<8x8x128xf32, #tpu.memory_space<vmem>>, vector<1x1x128xf32>
    %78 = vector.broadcast %77 : vector<1x1x128xf32> to vector<9x9x128xf32>
    %79 = arith.mulf %76, %78 : vector<9x9x128xf32>
    %80 = arith.addf %75, %79 : vector<9x9x128xf32>
    %c2_88 = arith.constant 2 : index
    %c0_89 = arith.constant 0 : index
    %c0_90 = arith.constant 0 : index
    %81 = vector.load %arg1[%c2_88, %c0_89, %c0_90] : memref<16x16x128xf32, #tpu.memory_space<vmem>>, vector<9x9x128xf32>
    %c2_91 = arith.constant 2 : index
    %c0_92 = arith.constant 0 : index
    %c0_93 = arith.constant 0 : index
    %82 = vector.load %arg2[%c2_91, %c0_92, %c0_93] : memref<8x8x128xf32, #tpu.memory_space<vmem>>, vector<1x1x128xf32>
    %83 = vector.broadcast %82 : vector<1x1x128xf32> to vector<9x9x128xf32>
    %84 = arith.mulf %81, %83 : vector<9x9x128xf32>
    %85 = arith.addf %80, %84 : vector<9x9x128xf32>
    %c2_94 = arith.constant 2 : index
    %c1_95 = arith.constant 1 : index
    %c0_96 = arith.constant 0 : index
    %86 = vector.load %arg1[%c2_94, %c1_95, %c0_96] : memref<16x16x128xf32, #tpu.memory_space<vmem>>, vector<9x9x128xf32>
    %c2_97 = arith.constant 2 : index
    %c1_98 = arith.constant 1 : index
    %c0_99 = arith.constant 0 : index
    %87 = vector.load %arg2[%c2_97, %c1_98, %c0_99] : memref<8x8x128xf32, #tpu.memory_space<vmem>>, vector<1x1x128xf32>
    %88 = vector.broadcast %87 : vector<1x1x128xf32> to vector<9x9x128xf32>
    %89 = arith.mulf %86, %88 : vector<9x9x128xf32>
    %90 = arith.addf %85, %89 : vector<9x9x128xf32>
    %c2_100 = arith.constant 2 : index
    %c2_101 = arith.constant 2 : index
    %c0_102 = arith.constant 0 : index
    %91 = vector.load %arg1[%c2_100, %c2_101, %c0_102] : memref<16x16x128xf32, #tpu.memory_space<vmem>>, vector<9x9x128xf32>
    %c2_103 = arith.constant 2 : index
    %c2_104 = arith.constant 2 : index
    %c0_105 = arith.constant 0 : index
    %92 = vector.load %arg2[%c2_103, %c2_104, %c0_105] : memref<8x8x128xf32, #tpu.memory_space<vmem>>, vector<1x1x128xf32>
    %93 = vector.broadcast %92 : vector<1x1x128xf32> to vector<9x9x128xf32>
    %94 = arith.mulf %91, %93 : vector<9x9x128xf32>
    %95 = arith.addf %90, %94 : vector<9x9x128xf32>
    %c2_106 = arith.constant 2 : index
    %c3_107 = arith.constant 3 : index
    %c0_108 = arith.constant 0 : index
    %96 = vector.load %arg1[%c2_106, %c3_107, %c0_108] : memref<16x16x128xf32, #tpu.memory_space<vmem>>, vector<9x9x128xf32>
    %c2_109 = arith.constant 2 : index
    %c3_110 = arith.constant 3 : index
    %c0_111 = arith.constant 0 : index
    %97 = vector.load %arg2[%c2_109, %c3_110, %c0_111] : memref<8x8x128xf32, #tpu.memory_space<vmem>>, vector<1x1x128xf32>
    %98 = vector.broadcast %97 : vector<1x1x128xf32> to vector<9x9x128xf32>
    %99 = arith.mulf %96, %98 : vector<9x9x128xf32>
    %100 = arith.addf %95, %99 : vector<9x9x128xf32>
    %c2_112 = arith.constant 2 : index
    %c4_113 = arith.constant 4 : index
    %c0_114 = arith.constant 0 : index
    %101 = vector.load %arg1[%c2_112, %c4_113, %c0_114] : memref<16x16x128xf32, #tpu.memory_space<vmem>>, vector<9x9x128xf32>
    %c2_115 = arith.constant 2 : index
    %c4_116 = arith.constant 4 : index
    %c0_117 = arith.constant 0 : index
    %102 = vector.load %arg2[%c2_115, %c4_116, %c0_117] : memref<8x8x128xf32, #tpu.memory_space<vmem>>, vector<1x1x128xf32>
    %103 = vector.broadcast %102 : vector<1x1x128xf32> to vector<9x9x128xf32>
    %104 = arith.mulf %101, %103 : vector<9x9x128xf32>
    %105 = arith.addf %100, %104 : vector<9x9x128xf32>
    %c2_118 = arith.constant 2 : index
    %c5_119 = arith.constant 5 : index
    %c0_120 = arith.constant 0 : index
    %106 = vector.load %arg1[%c2_118, %c5_119, %c0_120] : memref<16x16x128xf32, #tpu.memory_space<vmem>>, vector<9x9x128xf32>
    %c2_121 = arith.constant 2 : index
    %c5_122 = arith.constant 5 : index
    %c0_123 = arith.constant 0 : index
    %107 = vector.load %arg2[%c2_121, %c5_122, %c0_123] : memref<8x8x128xf32, #tpu.memory_space<vmem>>, vector<1x1x128xf32>
    %108 = vector.broadcast %107 : vector<1x1x128xf32> to vector<9x9x128xf32>
    %109 = arith.mulf %106, %108 : vector<9x9x128xf32>
    %110 = arith.addf %105, %109 : vector<9x9x128xf32>
    %c2_124 = arith.constant 2 : index
    %c6_125 = arith.constant 6 : index
    %c0_126 = arith.constant 0 : index
    %111 = vector.load %arg1[%c2_124, %c6_125, %c0_126] : memref<16x16x128xf32, #tpu.memory_space<vmem>>, vector<9x9x128xf32>
    %c2_127 = arith.constant 2 : index
    %c6_128 = arith.constant 6 : index
    %c0_129 = arith.constant 0 : index
    %112 = vector.load %arg2[%c2_127, %c6_128, %c0_129] : memref<8x8x128xf32, #tpu.memory_space<vmem>>, vector<1x1x128xf32>
    %113 = vector.broadcast %112 : vector<1x1x128xf32> to vector<9x9x128xf32>
    %114 = arith.mulf %111, %113 : vector<9x9x128xf32>
    %115 = arith.addf %110, %114 : vector<9x9x128xf32>
    %c2_130 = arith.constant 2 : index
    %c7_131 = arith.constant 7 : index
    %c0_132 = arith.constant 0 : index
    %116 = vector.load %arg1[%c2_130, %c7_131, %c0_132] : memref<16x16x128xf32, #tpu.memory_space<vmem>>, vector<9x9x128xf32>
    %c2_133 = arith.constant 2 : index
    %c7_134 = arith.constant 7 : index
    %c0_135 = arith.constant 0 : index
    %117 = vector.load %arg2[%c2_133, %c7_134, %c0_135] : memref<8x8x128xf32, #tpu.memory_space<vmem>>, vector<1x1x128xf32>
    %118 = vector.broadcast %117 : vector<1x1x128xf32> to vector<9x9x128xf32>
    %119 = arith.mulf %116, %118 : vector<9x9x128xf32>
    %120 = arith.addf %115, %119 : vector<9x9x128xf32>
    %c3_136 = arith.constant 3 : index
    %c0_137 = arith.constant 0 : index
    %c0_138 = arith.constant 0 : index
    %121 = vector.load %arg1[%c3_136, %c0_137, %c0_138] : memref<16x16x128xf32, #tpu.memory_space<vmem>>, vector<9x9x128xf32>
    %c3_139 = arith.constant 3 : index
    %c0_140 = arith.constant 0 : index
    %c0_141 = arith.constant 0 : index
    %122 = vector.load %arg2[%c3_139, %c0_140, %c0_141] : memref<8x8x128xf32, #tpu.memory_space<vmem>>, vector<1x1x128xf32>
    %123 = vector.broadcast %122 : vector<1x1x128xf32> to vector<9x9x128xf32>
    %124 = arith.mulf %121, %123 : vector<9x9x128xf32>
    %125 = arith.addf %120, %124 : vector<9x9x128xf32>
    %c3_142 = arith.constant 3 : index
    %c1_143 = arith.constant 1 : index
    %c0_144 = arith.constant 0 : index
    %126 = vector.load %arg1[%c3_142, %c1_143, %c0_144] : memref<16x16x128xf32, #tpu.memory_space<vmem>>, vector<9x9x128xf32>
    %c3_145 = arith.constant 3 : index
    %c1_146 = arith.constant 1 : index
    %c0_147 = arith.constant 0 : index
    %127 = vector.load %arg2[%c3_145, %c1_146, %c0_147] : memref<8x8x128xf32, #tpu.memory_space<vmem>>, vector<1x1x128xf32>
    %128 = vector.broadcast %127 : vector<1x1x128xf32> to vector<9x9x128xf32>
    %129 = arith.mulf %126, %128 : vector<9x9x128xf32>
    %130 = arith.addf %125, %129 : vector<9x9x128xf32>
    %c3_148 = arith.constant 3 : index
    %c2_149 = arith.constant 2 : index
    %c0_150 = arith.constant 0 : index
    %131 = vector.load %arg1[%c3_148, %c2_149, %c0_150] : memref<16x16x128xf32, #tpu.memory_space<vmem>>, vector<9x9x128xf32>
    %c3_151 = arith.constant 3 : index
    %c2_152 = arith.constant 2 : index
    %c0_153 = arith.constant 0 : index
    %132 = vector.load %arg2[%c3_151, %c2_152, %c0_153] : memref<8x8x128xf32, #tpu.memory_space<vmem>>, vector<1x1x128xf32>
    %133 = vector.broadcast %132 : vector<1x1x128xf32> to vector<9x9x128xf32>
    %134 = arith.mulf %131, %133 : vector<9x9x128xf32>
    %135 = arith.addf %130, %134 : vector<9x9x128xf32>
    %c3_154 = arith.constant 3 : index
    %c3_155 = arith.constant 3 : index
    %c0_156 = arith.constant 0 : index
    %136 = vector.load %arg1[%c3_154, %c3_155, %c0_156] : memref<16x16x128xf32, #tpu.memory_space<vmem>>, vector<9x9x128xf32>
    %c3_157 = arith.constant 3 : index
    %c3_158 = arith.constant 3 : index
    %c0_159 = arith.constant 0 : index
    %137 = vector.load %arg2[%c3_157, %c3_158, %c0_159] : memref<8x8x128xf32, #tpu.memory_space<vmem>>, vector<1x1x128xf32>
    %138 = vector.broadcast %137 : vector<1x1x128xf32> to vector<9x9x128xf32>
    %139 = arith.mulf %136, %138 : vector<9x9x128xf32>
    %140 = arith.addf %135, %139 : vector<9x9x128xf32>
    %c3_160 = arith.constant 3 : index
    %c4_161 = arith.constant 4 : index
    %c0_162 = arith.constant 0 : index
    %141 = vector.load %arg1[%c3_160, %c4_161, %c0_162] : memref<16x16x128xf32, #tpu.memory_space<vmem>>, vector<9x9x128xf32>
    %c3_163 = arith.constant 3 : index
    %c4_164 = arith.constant 4 : index
    %c0_165 = arith.constant 0 : index
    %142 = vector.load %arg2[%c3_163, %c4_164, %c0_165] : memref<8x8x128xf32, #tpu.memory_space<vmem>>, vector<1x1x128xf32>
    %143 = vector.broadcast %142 : vector<1x1x128xf32> to vector<9x9x128xf32>
    %144 = arith.mulf %141, %143 : vector<9x9x128xf32>
    %145 = arith.addf %140, %144 : vector<9x9x128xf32>
    %c3_166 = arith.constant 3 : index
    %c5_167 = arith.constant 5 : index
    %c0_168 = arith.constant 0 : index
    %146 = vector.load %arg1[%c3_166, %c5_167, %c0_168] : memref<16x16x128xf32, #tpu.memory_space<vmem>>, vector<9x9x128xf32>
    %c3_169 = arith.constant 3 : index
    %c5_170 = arith.constant 5 : index
    %c0_171 = arith.constant 0 : index
    %147 = vector.load %arg2[%c3_169, %c5_170, %c0_171] : memref<8x8x128xf32, #tpu.memory_space<vmem>>, vector<1x1x128xf32>
    %148 = vector.broadcast %147 : vector<1x1x128xf32> to vector<9x9x128xf32>
    %149 = arith.mulf %146, %148 : vector<9x9x128xf32>
    %150 = arith.addf %145, %149 : vector<9x9x128xf32>
    %c3_172 = arith.constant 3 : index
    %c6_173 = arith.constant 6 : index
    %c0_174 = arith.constant 0 : index
    %151 = vector.load %arg1[%c3_172, %c6_173, %c0_174] : memref<16x16x128xf32, #tpu.memory_space<vmem>>, vector<9x9x128xf32>
    %c3_175 = arith.constant 3 : index
    %c6_176 = arith.constant 6 : index
    %c0_177 = arith.constant 0 : index
    %152 = vector.load %arg2[%c3_175, %c6_176, %c0_177] : memref<8x8x128xf32, #tpu.memory_space<vmem>>, vector<1x1x128xf32>
    %153 = vector.broadcast %152 : vector<1x1x128xf32> to vector<9x9x128xf32>
    %154 = arith.mulf %151, %153 : vector<9x9x128xf32>
    %155 = arith.addf %150, %154 : vector<9x9x128xf32>
    %c3_178 = arith.constant 3 : index
    %c7_179 = arith.constant 7 : index
    %c0_180 = arith.constant 0 : index
    %156 = vector.load %arg1[%c3_178, %c7_179, %c0_180] : memref<16x16x128xf32, #tpu.memory_space<vmem>>, vector<9x9x128xf32>
    %c3_181 = arith.constant 3 : index
    %c7_182 = arith.constant 7 : index
    %c0_183 = arith.constant 0 : index
    %157 = vector.load %arg2[%c3_181, %c7_182, %c0_183] : memref<8x8x128xf32, #tpu.memory_space<vmem>>, vector<1x1x128xf32>
    %158 = vector.broadcast %157 : vector<1x1x128xf32> to vector<9x9x128xf32>
    %159 = arith.mulf %156, %158 : vector<9x9x128xf32>
    %160 = arith.addf %155, %159 : vector<9x9x128xf32>
    %c4_184 = arith.constant 4 : index
    %c0_185 = arith.constant 0 : index
    %c0_186 = arith.constant 0 : index
    %161 = vector.load %arg1[%c4_184, %c0_185, %c0_186] : memref<16x16x128xf32, #tpu.memory_space<vmem>>, vector<9x9x128xf32>
    %c4_187 = arith.constant 4 : index
    %c0_188 = arith.constant 0 : index
    %c0_189 = arith.constant 0 : index
    %162 = vector.load %arg2[%c4_187, %c0_188, %c0_189] : memref<8x8x128xf32, #tpu.memory_space<vmem>>, vector<1x1x128xf32>
    %163 = vector.broadcast %162 : vector<1x1x128xf32> to vector<9x9x128xf32>
    %164 = arith.mulf %161, %163 : vector<9x9x128xf32>
    %165 = arith.addf %160, %164 : vector<9x9x128xf32>
    %c4_190 = arith.constant 4 : index
    %c1_191 = arith.constant 1 : index
    %c0_192 = arith.constant 0 : index
    %166 = vector.load %arg1[%c4_190, %c1_191, %c0_192] : memref<16x16x128xf32, #tpu.memory_space<vmem>>, vector<9x9x128xf32>
    %c4_193 = arith.constant 4 : index
    %c1_194 = arith.constant 1 : index
    %c0_195 = arith.constant 0 : index
    %167 = vector.load %arg2[%c4_193, %c1_194, %c0_195] : memref<8x8x128xf32, #tpu.memory_space<vmem>>, vector<1x1x128xf32>
    %168 = vector.broadcast %167 : vector<1x1x128xf32> to vector<9x9x128xf32>
    %169 = arith.mulf %166, %168 : vector<9x9x128xf32>
    %170 = arith.addf %165, %169 : vector<9x9x128xf32>
    %c4_196 = arith.constant 4 : index
    %c2_197 = arith.constant 2 : index
    %c0_198 = arith.constant 0 : index
    %171 = vector.load %arg1[%c4_196, %c2_197, %c0_198] : memref<16x16x128xf32, #tpu.memory_space<vmem>>, vector<9x9x128xf32>
    %c4_199 = arith.constant 4 : index
    %c2_200 = arith.constant 2 : index
    %c0_201 = arith.constant 0 : index
    %172 = vector.load %arg2[%c4_199, %c2_200, %c0_201] : memref<8x8x128xf32, #tpu.memory_space<vmem>>, vector<1x1x128xf32>
    %173 = vector.broadcast %172 : vector<1x1x128xf32> to vector<9x9x128xf32>
    %174 = arith.mulf %171, %173 : vector<9x9x128xf32>
    %175 = arith.addf %170, %174 : vector<9x9x128xf32>
    %c4_202 = arith.constant 4 : index
    %c3_203 = arith.constant 3 : index
    %c0_204 = arith.constant 0 : index
    %176 = vector.load %arg1[%c4_202, %c3_203, %c0_204] : memref<16x16x128xf32, #tpu.memory_space<vmem>>, vector<9x9x128xf32>
    %c4_205 = arith.constant 4 : index
    %c3_206 = arith.constant 3 : index
    %c0_207 = arith.constant 0 : index
    %177 = vector.load %arg2[%c4_205, %c3_206, %c0_207] : memref<8x8x128xf32, #tpu.memory_space<vmem>>, vector<1x1x128xf32>
    %178 = vector.broadcast %177 : vector<1x1x128xf32> to vector<9x9x128xf32>
    %179 = arith.mulf %176, %178 : vector<9x9x128xf32>
    %180 = arith.addf %175, %179 : vector<9x9x128xf32>
    %c4_208 = arith.constant 4 : index
    %c4_209 = arith.constant 4 : index
    %c0_210 = arith.constant 0 : index
    %181 = vector.load %arg1[%c4_208, %c4_209, %c0_210] : memref<16x16x128xf32, #tpu.memory_space<vmem>>, vector<9x9x128xf32>
    %c4_211 = arith.constant 4 : index
    %c4_212 = arith.constant 4 : index
    %c0_213 = arith.constant 0 : index
    %182 = vector.load %arg2[%c4_211, %c4_212, %c0_213] : memref<8x8x128xf32, #tpu.memory_space<vmem>>, vector<1x1x128xf32>
    %183 = vector.broadcast %182 : vector<1x1x128xf32> to vector<9x9x128xf32>
    %184 = arith.mulf %181, %183 : vector<9x9x128xf32>
    %185 = arith.addf %180, %184 : vector<9x9x128xf32>
    %c4_214 = arith.constant 4 : index
    %c5_215 = arith.constant 5 : index
    %c0_216 = arith.constant 0 : index
    %186 = vector.load %arg1[%c4_214, %c5_215, %c0_216] : memref<16x16x128xf32, #tpu.memory_space<vmem>>, vector<9x9x128xf32>
    %c4_217 = arith.constant 4 : index
    %c5_218 = arith.constant 5 : index
    %c0_219 = arith.constant 0 : index
    %187 = vector.load %arg2[%c4_217, %c5_218, %c0_219] : memref<8x8x128xf32, #tpu.memory_space<vmem>>, vector<1x1x128xf32>
    %188 = vector.broadcast %187 : vector<1x1x128xf32> to vector<9x9x128xf32>
    %189 = arith.mulf %186, %188 : vector<9x9x128xf32>
    %190 = arith.addf %185, %189 : vector<9x9x128xf32>
    %c4_220 = arith.constant 4 : index
    %c6_221 = arith.constant 6 : index
    %c0_222 = arith.constant 0 : index
    %191 = vector.load %arg1[%c4_220, %c6_221, %c0_222] : memref<16x16x128xf32, #tpu.memory_space<vmem>>, vector<9x9x128xf32>
    %c4_223 = arith.constant 4 : index
    %c6_224 = arith.constant 6 : index
    %c0_225 = arith.constant 0 : index
    %192 = vector.load %arg2[%c4_223, %c6_224, %c0_225] : memref<8x8x128xf32, #tpu.memory_space<vmem>>, vector<1x1x128xf32>
    %193 = vector.broadcast %192 : vector<1x1x128xf32> to vector<9x9x128xf32>
    %194 = arith.mulf %191, %193 : vector<9x9x128xf32>
    %195 = arith.addf %190, %194 : vector<9x9x128xf32>
    %c4_226 = arith.constant 4 : index
    %c7_227 = arith.constant 7 : index
    %c0_228 = arith.constant 0 : index
    %196 = vector.load %arg1[%c4_226, %c7_227, %c0_228] : memref<16x16x128xf32, #tpu.memory_space<vmem>>, vector<9x9x128xf32>
    %c4_229 = arith.constant 4 : index
    %c7_230 = arith.constant 7 : index
    %c0_231 = arith.constant 0 : index
    %197 = vector.load %arg2[%c4_229, %c7_230, %c0_231] : memref<8x8x128xf32, #tpu.memory_space<vmem>>, vector<1x1x128xf32>
    %198 = vector.broadcast %197 : vector<1x1x128xf32> to vector<9x9x128xf32>
    %199 = arith.mulf %196, %198 : vector<9x9x128xf32>
    %200 = arith.addf %195, %199 : vector<9x9x128xf32>
    %c5_232 = arith.constant 5 : index
    %c0_233 = arith.constant 0 : index
    %c0_234 = arith.constant 0 : index
    %201 = vector.load %arg1[%c5_232, %c0_233, %c0_234] : memref<16x16x128xf32, #tpu.memory_space<vmem>>, vector<9x9x128xf32>
    %c5_235 = arith.constant 5 : index
    %c0_236 = arith.constant 0 : index
    %c0_237 = arith.constant 0 : index
    %202 = vector.load %arg2[%c5_235, %c0_236, %c0_237] : memref<8x8x128xf32, #tpu.memory_space<vmem>>, vector<1x1x128xf32>
    %203 = vector.broadcast %202 : vector<1x1x128xf32> to vector<9x9x128xf32>
    %204 = arith.mulf %201, %203 : vector<9x9x128xf32>
    %205 = arith.addf %200, %204 : vector<9x9x128xf32>
    %c5_238 = arith.constant 5 : index
    %c1_239 = arith.constant 1 : index
    %c0_240 = arith.constant 0 : index
    %206 = vector.load %arg1[%c5_238, %c1_239, %c0_240] : memref<16x16x128xf32, #tpu.memory_space<vmem>>, vector<9x9x128xf32>
    %c5_241 = arith.constant 5 : index
    %c1_242 = arith.constant 1 : index
    %c0_243 = arith.constant 0 : index
    %207 = vector.load %arg2[%c5_241, %c1_242, %c0_243] : memref<8x8x128xf32, #tpu.memory_space<vmem>>, vector<1x1x128xf32>
    %208 = vector.broadcast %207 : vector<1x1x128xf32> to vector<9x9x128xf32>
    %209 = arith.mulf %206, %208 : vector<9x9x128xf32>
    %210 = arith.addf %205, %209 : vector<9x9x128xf32>
    %c5_244 = arith.constant 5 : index
    %c2_245 = arith.constant 2 : index
    %c0_246 = arith.constant 0 : index
    %211 = vector.load %arg1[%c5_244, %c2_245, %c0_246] : memref<16x16x128xf32, #tpu.memory_space<vmem>>, vector<9x9x128xf32>
    %c5_247 = arith.constant 5 : index
    %c2_248 = arith.constant 2 : index
    %c0_249 = arith.constant 0 : index
    %212 = vector.load %arg2[%c5_247, %c2_248, %c0_249] : memref<8x8x128xf32, #tpu.memory_space<vmem>>, vector<1x1x128xf32>
    %213 = vector.broadcast %212 : vector<1x1x128xf32> to vector<9x9x128xf32>
    %214 = arith.mulf %211, %213 : vector<9x9x128xf32>
    %215 = arith.addf %210, %214 : vector<9x9x128xf32>
    %c5_250 = arith.constant 5 : index
    %c3_251 = arith.constant 3 : index
    %c0_252 = arith.constant 0 : index
    %216 = vector.load %arg1[%c5_250, %c3_251, %c0_252] : memref<16x16x128xf32, #tpu.memory_space<vmem>>, vector<9x9x128xf32>
    %c5_253 = arith.constant 5 : index
    %c3_254 = arith.constant 3 : index
    %c0_255 = arith.constant 0 : index
    %217 = vector.load %arg2[%c5_253, %c3_254, %c0_255] : memref<8x8x128xf32, #tpu.memory_space<vmem>>, vector<1x1x128xf32>
    %218 = vector.broadcast %217 : vector<1x1x128xf32> to vector<9x9x128xf32>
    %219 = arith.mulf %216, %218 : vector<9x9x128xf32>
    %220 = arith.addf %215, %219 : vector<9x9x128xf32>
    %c5_256 = arith.constant 5 : index
    %c4_257 = arith.constant 4 : index
    %c0_258 = arith.constant 0 : index
    %221 = vector.load %arg1[%c5_256, %c4_257, %c0_258] : memref<16x16x128xf32, #tpu.memory_space<vmem>>, vector<9x9x128xf32>
    %c5_259 = arith.constant 5 : index
    %c4_260 = arith.constant 4 : index
    %c0_261 = arith.constant 0 : index
    %222 = vector.load %arg2[%c5_259, %c4_260, %c0_261] : memref<8x8x128xf32, #tpu.memory_space<vmem>>, vector<1x1x128xf32>
    %223 = vector.broadcast %222 : vector<1x1x128xf32> to vector<9x9x128xf32>
    %224 = arith.mulf %221, %223 : vector<9x9x128xf32>
    %225 = arith.addf %220, %224 : vector<9x9x128xf32>
    %c5_262 = arith.constant 5 : index
    %c5_263 = arith.constant 5 : index
    %c0_264 = arith.constant 0 : index
    %226 = vector.load %arg1[%c5_262, %c5_263, %c0_264] : memref<16x16x128xf32, #tpu.memory_space<vmem>>, vector<9x9x128xf32>
    %c5_265 = arith.constant 5 : index
    %c5_266 = arith.constant 5 : index
    %c0_267 = arith.constant 0 : index
    %227 = vector.load %arg2[%c5_265, %c5_266, %c0_267] : memref<8x8x128xf32, #tpu.memory_space<vmem>>, vector<1x1x128xf32>
    %228 = vector.broadcast %227 : vector<1x1x128xf32> to vector<9x9x128xf32>
    %229 = arith.mulf %226, %228 : vector<9x9x128xf32>
    %230 = arith.addf %225, %229 : vector<9x9x128xf32>
    %c5_268 = arith.constant 5 : index
    %c6_269 = arith.constant 6 : index
    %c0_270 = arith.constant 0 : index
    %231 = vector.load %arg1[%c5_268, %c6_269, %c0_270] : memref<16x16x128xf32, #tpu.memory_space<vmem>>, vector<9x9x128xf32>
    %c5_271 = arith.constant 5 : index
    %c6_272 = arith.constant 6 : index
    %c0_273 = arith.constant 0 : index
    %232 = vector.load %arg2[%c5_271, %c6_272, %c0_273] : memref<8x8x128xf32, #tpu.memory_space<vmem>>, vector<1x1x128xf32>
    %233 = vector.broadcast %232 : vector<1x1x128xf32> to vector<9x9x128xf32>
    %234 = arith.mulf %231, %233 : vector<9x9x128xf32>
    %235 = arith.addf %230, %234 : vector<9x9x128xf32>
    %c5_274 = arith.constant 5 : index
    %c7_275 = arith.constant 7 : index
    %c0_276 = arith.constant 0 : index
    %236 = vector.load %arg1[%c5_274, %c7_275, %c0_276] : memref<16x16x128xf32, #tpu.memory_space<vmem>>, vector<9x9x128xf32>
    %c5_277 = arith.constant 5 : index
    %c7_278 = arith.constant 7 : index
    %c0_279 = arith.constant 0 : index
    %237 = vector.load %arg2[%c5_277, %c7_278, %c0_279] : memref<8x8x128xf32, #tpu.memory_space<vmem>>, vector<1x1x128xf32>
    %238 = vector.broadcast %237 : vector<1x1x128xf32> to vector<9x9x128xf32>
    %239 = arith.mulf %236, %238 : vector<9x9x128xf32>
    %240 = arith.addf %235, %239 : vector<9x9x128xf32>
    %c6_280 = arith.constant 6 : index
    %c0_281 = arith.constant 0 : index
    %c0_282 = arith.constant 0 : index
    %241 = vector.load %arg1[%c6_280, %c0_281, %c0_282] : memref<16x16x128xf32, #tpu.memory_space<vmem>>, vector<9x9x128xf32>
    %c6_283 = arith.constant 6 : index
    %c0_284 = arith.constant 0 : index
    %c0_285 = arith.constant 0 : index
    %242 = vector.load %arg2[%c6_283, %c0_284, %c0_285] : memref<8x8x128xf32, #tpu.memory_space<vmem>>, vector<1x1x128xf32>
    %243 = vector.broadcast %242 : vector<1x1x128xf32> to vector<9x9x128xf32>
    %244 = arith.mulf %241, %243 : vector<9x9x128xf32>
    %245 = arith.addf %240, %244 : vector<9x9x128xf32>
    %c6_286 = arith.constant 6 : index
    %c1_287 = arith.constant 1 : index
    %c0_288 = arith.constant 0 : index
    %246 = vector.load %arg1[%c6_286, %c1_287, %c0_288] : memref<16x16x128xf32, #tpu.memory_space<vmem>>, vector<9x9x128xf32>
    %c6_289 = arith.constant 6 : index
    %c1_290 = arith.constant 1 : index
    %c0_291 = arith.constant 0 : index
    %247 = vector.load %arg2[%c6_289, %c1_290, %c0_291] : memref<8x8x128xf32, #tpu.memory_space<vmem>>, vector<1x1x128xf32>
    %248 = vector.broadcast %247 : vector<1x1x128xf32> to vector<9x9x128xf32>
    %249 = arith.mulf %246, %248 : vector<9x9x128xf32>
    %250 = arith.addf %245, %249 : vector<9x9x128xf32>
    %c6_292 = arith.constant 6 : index
    %c2_293 = arith.constant 2 : index
    %c0_294 = arith.constant 0 : index
    %251 = vector.load %arg1[%c6_292, %c2_293, %c0_294] : memref<16x16x128xf32, #tpu.memory_space<vmem>>, vector<9x9x128xf32>
    %c6_295 = arith.constant 6 : index
    %c2_296 = arith.constant 2 : index
    %c0_297 = arith.constant 0 : index
    %252 = vector.load %arg2[%c6_295, %c2_296, %c0_297] : memref<8x8x128xf32, #tpu.memory_space<vmem>>, vector<1x1x128xf32>
    %253 = vector.broadcast %252 : vector<1x1x128xf32> to vector<9x9x128xf32>
    %254 = arith.mulf %251, %253 : vector<9x9x128xf32>
    %255 = arith.addf %250, %254 : vector<9x9x128xf32>
    %c6_298 = arith.constant 6 : index
    %c3_299 = arith.constant 3 : index
    %c0_300 = arith.constant 0 : index
    %256 = vector.load %arg1[%c6_298, %c3_299, %c0_300] : memref<16x16x128xf32, #tpu.memory_space<vmem>>, vector<9x9x128xf32>
    %c6_301 = arith.constant 6 : index
    %c3_302 = arith.constant 3 : index
    %c0_303 = arith.constant 0 : index
    %257 = vector.load %arg2[%c6_301, %c3_302, %c0_303] : memref<8x8x128xf32, #tpu.memory_space<vmem>>, vector<1x1x128xf32>
    %258 = vector.broadcast %257 : vector<1x1x128xf32> to vector<9x9x128xf32>
    %259 = arith.mulf %256, %258 : vector<9x9x128xf32>
    %260 = arith.addf %255, %259 : vector<9x9x128xf32>
    %c6_304 = arith.constant 6 : index
    %c4_305 = arith.constant 4 : index
    %c0_306 = arith.constant 0 : index
    %261 = vector.load %arg1[%c6_304, %c4_305, %c0_306] : memref<16x16x128xf32, #tpu.memory_space<vmem>>, vector<9x9x128xf32>
    %c6_307 = arith.constant 6 : index
    %c4_308 = arith.constant 4 : index
    %c0_309 = arith.constant 0 : index
    %262 = vector.load %arg2[%c6_307, %c4_308, %c0_309] : memref<8x8x128xf32, #tpu.memory_space<vmem>>, vector<1x1x128xf32>
    %263 = vector.broadcast %262 : vector<1x1x128xf32> to vector<9x9x128xf32>
    %264 = arith.mulf %261, %263 : vector<9x9x128xf32>
    %265 = arith.addf %260, %264 : vector<9x9x128xf32>
    %c6_310 = arith.constant 6 : index
    %c5_311 = arith.constant 5 : index
    %c0_312 = arith.constant 0 : index
    %266 = vector.load %arg1[%c6_310, %c5_311, %c0_312] : memref<16x16x128xf32, #tpu.memory_space<vmem>>, vector<9x9x128xf32>
    %c6_313 = arith.constant 6 : index
    %c5_314 = arith.constant 5 : index
    %c0_315 = arith.constant 0 : index
    %267 = vector.load %arg2[%c6_313, %c5_314, %c0_315] : memref<8x8x128xf32, #tpu.memory_space<vmem>>, vector<1x1x128xf32>
    %268 = vector.broadcast %267 : vector<1x1x128xf32> to vector<9x9x128xf32>
    %269 = arith.mulf %266, %268 : vector<9x9x128xf32>
    %270 = arith.addf %265, %269 : vector<9x9x128xf32>
    %c6_316 = arith.constant 6 : index
    %c6_317 = arith.constant 6 : index
    %c0_318 = arith.constant 0 : index
    %271 = vector.load %arg1[%c6_316, %c6_317, %c0_318] : memref<16x16x128xf32, #tpu.memory_space<vmem>>, vector<9x9x128xf32>
    %c6_319 = arith.constant 6 : index
    %c6_320 = arith.constant 6 : index
    %c0_321 = arith.constant 0 : index
    %272 = vector.load %arg2[%c6_319, %c6_320, %c0_321] : memref<8x8x128xf32, #tpu.memory_space<vmem>>, vector<1x1x128xf32>
    %273 = vector.broadcast %272 : vector<1x1x128xf32> to vector<9x9x128xf32>
    %274 = arith.mulf %271, %273 : vector<9x9x128xf32>
    %275 = arith.addf %270, %274 : vector<9x9x128xf32>
    %c6_322 = arith.constant 6 : index
    %c7_323 = arith.constant 7 : index
    %c0_324 = arith.constant 0 : index
    %276 = vector.load %arg1[%c6_322, %c7_323, %c0_324] : memref<16x16x128xf32, #tpu.memory_space<vmem>>, vector<9x9x128xf32>
    %c6_325 = arith.constant 6 : index
    %c7_326 = arith.constant 7 : index
    %c0_327 = arith.constant 0 : index
    %277 = vector.load %arg2[%c6_325, %c7_326, %c0_327] : memref<8x8x128xf32, #tpu.memory_space<vmem>>, vector<1x1x128xf32>
    %278 = vector.broadcast %277 : vector<1x1x128xf32> to vector<9x9x128xf32>
    %279 = arith.mulf %276, %278 : vector<9x9x128xf32>
    %280 = arith.addf %275, %279 : vector<9x9x128xf32>
    %c7_328 = arith.constant 7 : index
    %c0_329 = arith.constant 0 : index
    %c0_330 = arith.constant 0 : index
    %281 = vector.load %arg1[%c7_328, %c0_329, %c0_330] : memref<16x16x128xf32, #tpu.memory_space<vmem>>, vector<9x9x128xf32>
    %c7_331 = arith.constant 7 : index
    %c0_332 = arith.constant 0 : index
    %c0_333 = arith.constant 0 : index
    %282 = vector.load %arg2[%c7_331, %c0_332, %c0_333] : memref<8x8x128xf32, #tpu.memory_space<vmem>>, vector<1x1x128xf32>
    %283 = vector.broadcast %282 : vector<1x1x128xf32> to vector<9x9x128xf32>
    %284 = arith.mulf %281, %283 : vector<9x9x128xf32>
    %285 = arith.addf %280, %284 : vector<9x9x128xf32>
    %c7_334 = arith.constant 7 : index
    %c1_335 = arith.constant 1 : index
    %c0_336 = arith.constant 0 : index
    %286 = vector.load %arg1[%c7_334, %c1_335, %c0_336] : memref<16x16x128xf32, #tpu.memory_space<vmem>>, vector<9x9x128xf32>
    %c7_337 = arith.constant 7 : index
    %c1_338 = arith.constant 1 : index
    %c0_339 = arith.constant 0 : index
    %287 = vector.load %arg2[%c7_337, %c1_338, %c0_339] : memref<8x8x128xf32, #tpu.memory_space<vmem>>, vector<1x1x128xf32>
    %288 = vector.broadcast %287 : vector<1x1x128xf32> to vector<9x9x128xf32>
    %289 = arith.mulf %286, %288 : vector<9x9x128xf32>
    %290 = arith.addf %285, %289 : vector<9x9x128xf32>
    %c7_340 = arith.constant 7 : index
    %c2_341 = arith.constant 2 : index
    %c0_342 = arith.constant 0 : index
    %291 = vector.load %arg1[%c7_340, %c2_341, %c0_342] : memref<16x16x128xf32, #tpu.memory_space<vmem>>, vector<9x9x128xf32>
    %c7_343 = arith.constant 7 : index
    %c2_344 = arith.constant 2 : index
    %c0_345 = arith.constant 0 : index
    %292 = vector.load %arg2[%c7_343, %c2_344, %c0_345] : memref<8x8x128xf32, #tpu.memory_space<vmem>>, vector<1x1x128xf32>
    %293 = vector.broadcast %292 : vector<1x1x128xf32> to vector<9x9x128xf32>
    %294 = arith.mulf %291, %293 : vector<9x9x128xf32>
    %295 = arith.addf %290, %294 : vector<9x9x128xf32>
    %c7_346 = arith.constant 7 : index
    %c3_347 = arith.constant 3 : index
    %c0_348 = arith.constant 0 : index
    %296 = vector.load %arg1[%c7_346, %c3_347, %c0_348] : memref<16x16x128xf32, #tpu.memory_space<vmem>>, vector<9x9x128xf32>
    %c7_349 = arith.constant 7 : index
    %c3_350 = arith.constant 3 : index
    %c0_351 = arith.constant 0 : index
    %297 = vector.load %arg2[%c7_349, %c3_350, %c0_351] : memref<8x8x128xf32, #tpu.memory_space<vmem>>, vector<1x1x128xf32>
    %298 = vector.broadcast %297 : vector<1x1x128xf32> to vector<9x9x128xf32>
    %299 = arith.mulf %296, %298 : vector<9x9x128xf32>
    %300 = arith.addf %295, %299 : vector<9x9x128xf32>
    %c7_352 = arith.constant 7 : index
    %c4_353 = arith.constant 4 : index
    %c0_354 = arith.constant 0 : index
    %301 = vector.load %arg1[%c7_352, %c4_353, %c0_354] : memref<16x16x128xf32, #tpu.memory_space<vmem>>, vector<9x9x128xf32>
    %c7_355 = arith.constant 7 : index
    %c4_356 = arith.constant 4 : index
    %c0_357 = arith.constant 0 : index
    %302 = vector.load %arg2[%c7_355, %c4_356, %c0_357] : memref<8x8x128xf32, #tpu.memory_space<vmem>>, vector<1x1x128xf32>
    %303 = vector.broadcast %302 : vector<1x1x128xf32> to vector<9x9x128xf32>
    %304 = arith.mulf %301, %303 : vector<9x9x128xf32>
    %305 = arith.addf %300, %304 : vector<9x9x128xf32>
    %c7_358 = arith.constant 7 : index
    %c5_359 = arith.constant 5 : index
    %c0_360 = arith.constant 0 : index
    %306 = vector.load %arg1[%c7_358, %c5_359, %c0_360] : memref<16x16x128xf32, #tpu.memory_space<vmem>>, vector<9x9x128xf32>
    %c7_361 = arith.constant 7 : index
    %c5_362 = arith.constant 5 : index
    %c0_363 = arith.constant 0 : index
    %307 = vector.load %arg2[%c7_361, %c5_362, %c0_363] : memref<8x8x128xf32, #tpu.memory_space<vmem>>, vector<1x1x128xf32>
    %308 = vector.broadcast %307 : vector<1x1x128xf32> to vector<9x9x128xf32>
    %309 = arith.mulf %306, %308 : vector<9x9x128xf32>
    %310 = arith.addf %305, %309 : vector<9x9x128xf32>
    %c7_364 = arith.constant 7 : index
    %c6_365 = arith.constant 6 : index
    %c0_366 = arith.constant 0 : index
    %311 = vector.load %arg1[%c7_364, %c6_365, %c0_366] : memref<16x16x128xf32, #tpu.memory_space<vmem>>, vector<9x9x128xf32>
    %c7_367 = arith.constant 7 : index
    %c6_368 = arith.constant 6 : index
    %c0_369 = arith.constant 0 : index
    %312 = vector.load %arg2[%c7_367, %c6_368, %c0_369] : memref<8x8x128xf32, #tpu.memory_space<vmem>>, vector<1x1x128xf32>
    %313 = vector.broadcast %312 : vector<1x1x128xf32> to vector<9x9x128xf32>
    %314 = arith.mulf %311, %313 : vector<9x9x128xf32>
    %315 = arith.addf %310, %314 : vector<9x9x128xf32>
    %c7_370 = arith.constant 7 : index
    %c7_371 = arith.constant 7 : index
    %c0_372 = arith.constant 0 : index
    %316 = vector.load %arg1[%c7_370, %c7_371, %c0_372] : memref<16x16x128xf32, #tpu.memory_space<vmem>>, vector<9x9x128xf32>
    %c7_373 = arith.constant 7 : index
    %c7_374 = arith.constant 7 : index
    %c0_375 = arith.constant 0 : index
    %317 = vector.load %arg2[%c7_373, %c7_374, %c0_375] : memref<8x8x128xf32, #tpu.memory_space<vmem>>, vector<1x1x128xf32>
    %318 = vector.broadcast %317 : vector<1x1x128xf32> to vector<9x9x128xf32>
    %319 = arith.mulf %316, %318 : vector<9x9x128xf32>
    %320 = arith.addf %315, %319 : vector<9x9x128xf32>
    %c0_376 = arith.constant 0 : index
    %c0_377 = arith.constant 0 : index
    %c0_378 = arith.constant 0 : index
    %321 = vector.load %arg3[%c0_376, %c0_377, %c0_378] : memref<9x9x128xf32, #tpu.memory_space<vmem>>, vector<9x9x128xf32>
    tpu.vector_store %arg3[%c0_376, %c0_377, %c0_378], %320 {strides = array<i32>} : memref<9x9x128xf32, #tpu.memory_space<vmem>>, vector<9x9x128xf32>,
    return
  }
  func.func @transform_0(%arg0: i32) -> (i32, i32, i32) {
    %c0_i32 = arith.constant 0 : i32
    %c0_i32_0 = arith.constant 0 : i32
    %c0_i32_1 = arith.constant 0 : i32
    return %c0_i32, %c0_i32_0, %arg0 : i32, i32, i32
  }
  func.func @transform_1(%arg0: i32) -> (i32, i32, i32) {
    %c0_i32 = arith.constant 0 : i32
    %c0_i32_0 = arith.constant 0 : i32
    %c0_i32_1 = arith.constant 0 : i32
    return %c0_i32, %c0_i32_0, %arg0 : i32, i32, i32
  }
  func.func @transform_2(%arg0: i32) -> (i32, i32, i32) {
    %c0_i32 = arith.constant 0 : i32
    %c0_i32_0 = arith.constant 0 : i32
    %c0_i32_1 = arith.constant 0 : i32
    return %c0_i32, %c0_i32_0, %arg0 : i32, i32, i32
  }
}

</mosaic_0001>

<llo_original>
// kernel: tpu_custom_call.1
$region0: #{tpu_custom_call.1}
  #allocation0 [shape = 'u32[]', space=smem, size = 0x4, offset = 0x4, fixed_abs, tag = 'smem constant byte address 0x4 - core index']
  #allocation1 [shape = 'u32[72,128]{1,0:T(1,128)}', space=vmem, size = 0x9000, scoped, tag = 'internal scratch']
  %s0 = inlined_call_operand.hbm [shape: f32[16,16,128], index: 0, kind: input, shape index: {}]
  %s1 = inlined_call_operand.hbm [shape: f32[8,8,128], index: 1, kind: input, shape index: {}]
  %s2 = inlined_call_operand.hbm [shape: f32[9,9,128], index: 2, kind: output, shape index: {}]
  %s3 = sld [smem:[#allocation0]]
  $region26: #{tpu_custom_call.1} parent=0
    _
  %s5 = ssub.s32 1, %s3
  %s6 = scalar_select 0, %s5, %s3
  $region1: #{tpu_custom_call.1} parent=0
    #allocation2 [shape = 'u8[131072]{0}', space=vmem, size = 0x20000, scoped, tag = 'input window, operand 0, single buffered']
    #allocation3 [shape = 's32[1]{0}', space=sflag, size = 0x4, scoped, tag = 'scoped memory for tpu_custom_call.1']
    #allocation4 [shape = 's32[1]{0}', space=sflag, size = 0x4, scoped, tag = 'scoped memory for tpu_custom_call.1']
    #allocation5 [shape = 'u8[32768]{0}', space=vmem, size = 0x8000, scoped, tag = 'input window, operand 1, single buffered']
    #allocation6 [shape = 's32[1]{0}', space=sflag, size = 0x4, scoped, tag = 'scoped memory for tpu_custom_call.1']
    #allocation7 [shape = 'u8[73728]{0}', space=vmem, size = 0x12000, scoped, tag = 'output window, operand 0, single buffered']
    %7 = vsyncpa [#allocation3], 0
    %8 = vsyncpa [#allocation6], 0
    %9 = vsyncpa [#allocation4], 0
    // Predicated region
    $region2: #{tpu_custom_call.1} parent=1 // pred_check
      _
    $region3: #{tpu_custom_call.1} parent=1 // pred_check_branch
      %11 = sbr.rel (0) target = $region5
    $region4: #{tpu_custom_call.1} parent=1 // pred_region
      %13 = vsyncadd [#allocation3], 0
      %s14 = sshll.u32 %s0, 4
      %s15 = int_to_ptr.hbm [resolvable:$true] %s14
      %s16 = sshll.u32 [#allocation2], 4
      %s17 = int_to_ptr.vmem [resolvable:$true] %s16
      %22 = dma.hbm_to_vmem [thread:$0]  %s15, 4096, %s17, [#allocation3], 128, 128, 8
    $region5: #{tpu_custom_call.1} parent=1 // pred_fallthru
      _
    // Predicated region
    $region6: #{tpu_custom_call.1} parent=1 // pred_check
      _
    $region7: #{tpu_custom_call.1} parent=1 // pred_check_branch
      %24 = sbr.rel (0) target = $region9
    $region8: #{tpu_custom_call.1} parent=1 // pred_region
      %26 = vsyncadd [#allocation6], 0
      %s27 = sshll.u32 %s1, 4
      %s28 = int_to_ptr.hbm [resolvable:$true] %s27
      %s29 = sshll.u32 [#allocation5], 4
      %s30 = int_to_ptr.vmem [resolvable:$true] %s29
      %35 = dma.hbm_to_vmem [thread:$0]  %s28, 1024, %s30, [#allocation6], 128, 128, 8
    $region9: #{tpu_custom_call.1} parent=1 // pred_fallthru
      _
    // Predicated region
    $region10: #{tpu_custom_call.1} parent=1 // pred_check
      _
    $region11: #{tpu_custom_call.1} parent=1 // pred_check_branch
      %37 = sbr.rel (0) target = $region13
    $region12: #{tpu_custom_call.1} parent=1 // pred_region
      %39 = dma.done [#allocation3], 4096
    $region13: #{tpu_custom_call.1} parent=1 // pred_fallthru
      _
    // Predicated region
    $region14: #{tpu_custom_call.1} parent=1 // pred_check
      _
    $region15: #{tpu_custom_call.1} parent=1 // pred_check_branch
      %41 = sbr.rel (0) target = $region17
    $region16: #{tpu_custom_call.1} parent=1 // pred_region
      %43 = dma.done [#allocation6], 1024
    $region17: #{tpu_custom_call.1} parent=1 // pred_fallthru
      _
    %v44 = vld [vmem:[#allocation2] sm:$0xff]
    %v45 = vld [vmem:[#allocation2 + $0x8] sm:$0x1]
    %v46 = vld [vmem:[#allocation2 + $0x10] sm:$0xff]
    %v47 = vld [vmem:[#allocation2 + $0x18] sm:$0x1]
    %v48 = vld [vmem:[#allocation2 + $0x20] sm:$0xff]
    %v49 = vld [vmem:[#allocation2 + $0x28] sm:$0x1]
    %v50 = vld [vmem:[#allocation2 + $0x30] sm:$0xff]
    %v51 = vld [vmem:[#allocation2 + $0x38] sm:$0x1]
    %v52 = vld [vmem:[#allocation2 + $0x40] sm:$0xff]
    %v53 = vld [vmem:[#allocation2 + $0x48] sm:$0x1]
    %v54 = vld [vmem:[#allocation2 + $0x50] sm:$0xff]
    %v55 = vld [vmem:[#allocation2 + $0x58] sm:$0x1]
    %v56 = vld [vmem:[#allocation2 + $0x60] sm:$0xff]
    %v57 = vld [vmem:[#allocation2 + $0x68] sm:$0x1]
    %v58 = vld [vmem:[#allocation2 + $0x70] sm:$0xff]
    %v59 = vld [vmem:[#allocation2 + $0x78] sm:$0x1]
    %v60 = vld [vmem:[#allocation2 + $0x80] sm:$0xff]
    %v61 = vld [vmem:[#allocation2 + $0x88] sm:$0x1]
    %v62 = vld [vmem:[#allocation5] sm:$0x1]
    %v63 = vperm.slane %v62, 0
    %v64 = vmul.f32 %v44, %v63
    %v65 = vmul.f32 %v45, %v63
    %v66 = vmul.f32 %v46, %v63
    %v67 = vmul.f32 %v47, %v63
    %v68 = vmul.f32 %v48, %v63
    %v69 = vmul.f32 %v49, %v63
    %v70 = vmul.f32 %v50, %v63
    %v71 = vmul.f32 %v51, %v63
    %v72 = vmul.f32 %v52, %v63
    %v73 = vmul.f32 %v53, %v63
    %v74 = vmul.f32 %v54, %v63
    %v75 = vmul.f32 %v55, %v63
    %v76 = vmul.f32 %v56, %v63
    %v77 = vmul.f32 %v57, %v63
    %v78 = vmul.f32 %v58, %v63
    %v79 = vmul.f32 %v59, %v63
    %v80 = vmul.f32 %v60, %v63
    %v81 = vmul.f32 %v61, %v63
    %v82 = vadd.f32 %v64, 0.0
    %v83 = vadd.f32 %v65, 0.0
    %v84 = vadd.f32 %v66, 0.0
    %v85 = vadd.f32 %v67, 0.0
    %v86 = vadd.f32 %v68, 0.0
    %v87 = vadd.f32 %v69, 0.0
    %v88 = vadd.f32 %v70, 0.0
    %v89 = vadd.f32 %v71, 0.0
    %v90 = vadd.f32 %v72, 0.0
    %v91 = vadd.f32 %v73, 0.0
    %v92 = vadd.f32 %v74, 0.0
    %v93 = vadd.f32 %v75, 0.0
    %v94 = vadd.f32 %v76, 0.0
    %v95 = vadd.f32 %v77, 0.0
    %v96 = vadd.f32 %v78, 0.0
    %v97 = vadd.f32 %v79, 0.0
    %v98 = vadd.f32 %v80, 0.0
    %v99 = vadd.f32 %v81, 0.0
    %v100 = vld [vmem:[#allocation2 + $0x1] sm:$0xff]
    %v101 = vld [vmem:[#allocation2 + $0x9] sm:$0x1]
    %v102 = vld [vmem:[#allocation2 + $0x11] sm:$0xff]
    %v103 = vld [vmem:[#allocation2 + $0x19] sm:$0x1]
    %v104 = vld [vmem:[#allocation2 + $0x21] sm:$0xff]
    %v105 = vld [vmem:[#allocation2 + $0x29] sm:$0x1]
    %v106 = vld [vmem:[#allocation2 + $0x31] sm:$0xff]
    %v107 = vld [vmem:[#allocation2 + $0x39] sm:$0x1]
    %v108 = vld [vmem:[#allocation2 + $0x41] sm:$0xff]
    %v109 = vld [vmem:[#allocation2 + $0x49] sm:$0x1]
    %v110 = vld [vmem:[#allocation2 + $0x51] sm:$0xff]
    %v111 = vld [vmem:[#allocation2 + $0x59] sm:$0x1]
    %v112 = vld [vmem:[#allocation2 + $0x61] sm:$0xff]
    %v113 = vld [vmem:[#allocation2 + $0x69] sm:$0x1]
    %v114 = vld [vmem:[#allocation2 + $0x71] sm:$0xff]
    %v115 = vld [vmem:[#allocation2 + $0x79] sm:$0x1]
    %v116 = vld [vmem:[#allocation2 + $0x81] sm:$0xff]
    %v117 = vld [vmem:[#allocation2 + $0x89] sm:$0x1]
    %v118 = vld [vmem:[#allocation5 + $0x1] sm:$0x1]
    %v119 = vperm.slane %v118, 0
    %v120 = vmul.f32 %v100, %v119
    %v121 = vmul.f32 %v101, %v119
    %v122 = vmul.f32 %v102, %v119
    %v123 = vmul.f32 %v103, %v119
    %v124 = vmul.f32 %v104, %v119
    %v125 = vmul.f32 %v105, %v119
    %v126 = vmul.f32 %v106, %v119
    %v127 = vmul.f32 %v107, %v119
    %v128 = vmul.f32 %v108, %v119
    %v129 = vmul.f32 %v109, %v119
    %v130 = vmul.f32 %v110, %v119
    %v131 = vmul.f32 %v111, %v119
    %v132 = vmul.f32 %v112, %v119
    %v133 = vmul.f32 %v113, %v119
    %v134 = vmul.f32 %v114, %v119
    %v135 = vmul.f32 %v115, %v119
    %v136 = vmul.f32 %v116, %v119
    %v137 = vmul.f32 %v117, %v119
    %v138 = vadd.f32 %v82, %v120
    %v139 = vadd.f32 %v83, %v121
    %v140 = vadd.f32 %v84, %v122
    %v141 = vadd.f32 %v85, %v123
    %v142 = vadd.f32 %v86, %v124
    %v143 = vadd.f32 %v87, %v125
    %v144 = vadd.f32 %v88, %v126
    %v145 = vadd.f32 %v89, %v127
    %v146 = vadd.f32 %v90, %v128
    %v147 = vadd.f32 %v91, %v129
    %v148 = vadd.f32 %v92, %v130
    %v149 = vadd.f32 %v93, %v131
    %v150 = vadd.f32 %v94, %v132
    %v151 = vadd.f32 %v95, %v133
    %v152 = vadd.f32 %v96, %v134
    %v153 = vadd.f32 %v97, %v135
    %v154 = vadd.f32 %v98, %v136
    %v155 = vadd.f32 %v99, %v137
    %v156 = vld [vmem:[#allocation2 + $0x2] sm:$0xff]
    %v157 = vld [vmem:[#allocation2 + $0xa] sm:$0x1]
    %v158 = vld [vmem:[#allocation2 + $0x12] sm:$0xff]
    %v159 = vld [vmem:[#allocation2 + $0x1a] sm:$0x1]
    %v160 = vld [vmem:[#allocation2 + $0x22] sm:$0xff]
    %v161 = vld [vmem:[#allocation2 + $0x2a] sm:$0x1]
    %v162 = vld [vmem:[#allocation2 + $0x32] sm:$0xff]
    %v163 = vld [vmem:[#allocation2 + $0x3a] sm:$0x1]
    %v164 = vld [vmem:[#allocation2 + $0x42] sm:$0xff]
    %v165 = vld [vmem:[#allocation2 + $0x4a] sm:$0x1]
    %v166 = vld [vmem:[#allocation2 + $0x52] sm:$0xff]
    %v167 = vld [vmem:[#allocation2 + $0x5a] sm:$0x1]
    %v168 = vld [vmem:[#allocation2 + $0x62] sm:$0xff]
    %v169 = vld [vmem:[#allocation2 + $0x6a] sm:$0x1]
    %v170 = vld [vmem:[#allocation2 + $0x72] sm:$0xff]
    %v171 = vld [vmem:[#allocation2 + $0x7a] sm:$0x1]
    %v172 = vld [vmem:[#allocation2 + $0x82] sm:$0xff]
    %v173 = vld [vmem:[#allocation2 + $0x8a] sm:$0x1]
    %v174 = vld [vmem:[#allocation5 + $0x2] sm:$0x1]
    %v175 = vperm.slane %v174, 0
    %v176 = vmul.f32 %v156, %v175
    %v177 = vmul.f32 %v157, %v175
    %v178 = vmul.f32 %v158, %v175
    %v179 = vmul.f32 %v159, %v175
    %v180 = vmul.f32 %v160, %v175
    %v181 = vmul.f32 %v161, %v175
    %v182 = vmul.f32 %v162, %v175
    %v183 = vmul.f32 %v163, %v175
    %v184 = vmul.f32 %v164, %v175
    %v185 = vmul.f32 %v165, %v175
    %v186 = vmul.f32 %v166, %v175
    %v187 = vmul.f32 %v167, %v175
    %v188 = vmul.f32 %v168, %v175
    %v189 = vmul.f32 %v169, %v175
    %v190 = vmul.f32 %v170, %v175
    %v191 = vmul.f32 %v171, %v175
    %v192 = vmul.f32 %v172, %v175
    %v193 = vmul.f32 %v173, %v175
    %v194 = vadd.f32 %v138, %v176
    %v195 = vadd.f32 %v139, %v177
    %v196 = vadd.f32 %v140, %v178
    %v197 = vadd.f32 %v141, %v179
    %v198 = vadd.f32 %v142, %v180
    %v199 = vadd.f32 %v143, %v181
    %v200 = vadd.f32 %v144, %v182
    %v201 = vadd.f32 %v145, %v183
    %v202 = vadd.f32 %v146, %v184
    %v203 = vadd.f32 %v147, %v185
    %v204 = vadd.f32 %v148, %v186
    %v205 = vadd.f32 %v149, %v187
    %v206 = vadd.f32 %v150, %v188
    %v207 = vadd.f32 %v151, %v189
    %v208 = vadd.f32 %v152, %v190
    %v209 = vadd.f32 %v153, %v191
    %v210 = vadd.f32 %v154, %v192
    %v211 = vadd.f32 %v155, %v193
    %v212 = vld [vmem:[#allocation2 + $0x3] sm:$0xff]
    %v213 = vld [vmem:[#allocation2 + $0xb] sm:$0x1]
    %v214 = vld [vmem:[#allocation2 + $0x13] sm:$0xff]
    %v215 = vld [vmem:[#allocation2 + $0x1b] sm:$0x1]
    %v216 = vld [vmem:[#allocation2 + $0x23] sm:$0xff]
    %v217 = vld [vmem:[#allocation2 + $0x2b] sm:$0x1]
    %v218 = vld [vmem:[#allocation2 + $0x33] sm:$0xff]
    %v219 = vld [vmem:[#allocation2 + $0x3b] sm:$0x1]
    %v220 = vld [vmem:[#allocation2 + $0x43] sm:$0xff]
    %v221 = vld [vmem:[#allocation2 + $0x4b] sm:$0x1]
    %v222 = vld [vmem:[#allocation2 + $0x53] sm:$0xff]
    %v223 = vld [vmem:[#allocation2 + $0x5b] sm:$0x1]
    %v224 = vld [vmem:[#allocation2 + $0x63] sm:$0xff]
    %v225 = vld [vmem:[#allocation2 + $0x6b] sm:$0x1]
    %v226 = vld [vmem:[#allocation2 + $0x73] sm:$0xff]
    %v227 = vld [vmem:[#allocation2 + $0x7b] sm:$0x1]
    %v228 = vld [vmem:[#allocation2 + $0x83] sm:$0xff]
    %v229 = vld [vmem:[#allocation2 + $0x8b] sm:$0x1]
    %v230 = vld [vmem:[#allocation5 + $0x3] sm:$0x1]
    %v231 = vperm.slane %v230, 0
    %v232 = vmul.f32 %v212, %v231
    %v233 = vmul.f32 %v213, %v231
    %v234 = vmul.f32 %v214, %v231
    %v235 = vmul.f32 %v215, %v231
    %v236 = vmul.f32 %v216, %v231
    %v237 = vmul.f32 %v217, %v231
    %v238 = vmul.f32 %v218, %v231
    %v239 = vmul.f32 %v219, %v231
    %v240 = vmul.f32 %v220, %v231
    %v241 = vmul.f32 %v221, %v231
    %v242 = vmul.f32 %v222, %v231
    %v243 = vmul.f32 %v223, %v231
    %v244 = vmul.f32 %v224, %v231
    %v245 = vmul.f32 %v225, %v231
    %v246 = vmul.f32 %v226, %v231
    %v247 = vmul.f32 %v227, %v231
    %v248 = vmul.f32 %v228, %v231
    %v249 = vmul.f32 %v229, %v231
    %v250 = vadd.f32 %v194, %v232
    %v251 = vadd.f32 %v195, %v233
    %v252 = vadd.f32 %v196, %v234
    %v253 = vadd.f32 %v197, %v235
    %v254 = vadd.f32 %v198, %v236
    %v255 = vadd.f32 %v199, %v237
    %v256 = vadd.f32 %v200, %v238
    %v257 = vadd.f32 %v201, %v239
    %v258 = vadd.f32 %v202, %v240
    %v259 = vadd.f32 %v203, %v241
    %v260 = vadd.f32 %v204, %v242
    %v261 = vadd.f32 %v205, %v243
    %v262 = vadd.f32 %v206, %v244
    %v263 = vadd.f32 %v207, %v245
    %v264 = vadd.f32 %v208, %v246
    %v265 = vadd.f32 %v209, %v247
    %v266 = vadd.f32 %v210, %v248
    %v267 = vadd.f32 %v211, %v249
    %v268 = vld [vmem:[#allocation2 + $0x4] sm:$0xff]
    %v269 = vld [vmem:[#allocation2 + $0xc] sm:$0x1]
    %v270 = vld [vmem:[#allocation2 + $0x14] sm:$0xff]
    %v271 = vld [vmem:[#allocation2 + $0x1c] sm:$0x1]
    %v272 = vld [vmem:[#allocation2 + $0x24] sm:$0xff]
    %v273 = vld [vmem:[#allocation2 + $0x2c] sm:$0x1]
    %v274 = vld [vmem:[#allocation2 + $0x34] sm:$0xff]
    %v275 = vld [vmem:[#allocation2 + $0x3c] sm:$0x1]
    %v276 = vld [vmem:[#allocation2 + $0x44] sm:$0xff]
    %v277 = vld [vmem:[#allocation2 + $0x4c] sm:$0x1]
    %v278 = vld [vmem:[#allocation2 + $0x54] sm:$0xff]
    %v279 = vld [vmem:[#allocation2 + $0x5c] sm:$0x1]
    %v280 = vld [vmem:[#allocation2 + $0x64] sm:$0xff]
    %v281 = vld [vmem:[#allocation2 + $0x6c] sm:$0x1]
    %v282 = vld [vmem:[#allocation2 + $0x74] sm:$0xff]
    %v283 = vld [vmem:[#allocation2 + $0x7c] sm:$0x1]
    %v284 = vld [vmem:[#allocation2 + $0x84] sm:$0xff]
    %v285 = vld [vmem:[#allocation2 + $0x8c] sm:$0x1]
    %v286 = vld [vmem:[#allocation5 + $0x4] sm:$0x1]
    %v287 = vperm.slane %v286, 0
    %v288 = vmul.f32 %v268, %v287
    %v289 = vmul.f32 %v269, %v287
    %v290 = vmul.f32 %v270, %v287
    %v291 = vmul.f32 %v271, %v287
    %v292 = vmul.f32 %v272, %v287
    %v293 = vmul.f32 %v273, %v287
    %v294 = vmul.f32 %v274, %v287
    %v295 = vmul.f32 %v275, %v287
    %v296 = vmul.f32 %v276, %v287
    %v297 = vmul.f32 %v277, %v287
    %v298 = vmul.f32 %v278, %v287
    %v299 = vmul.f32 %v279, %v287
    %v300 = vmul.f32 %v280, %v287
    %v301 = vmul.f32 %v281, %v287
    %v302 = vmul.f32 %v282, %v287
    %v303 = vmul.f32 %v283, %v287
    %v304 = vmul.f32 %v284, %v287
    %v305 = vmul.f32 %v285, %v287
    %v306 = vadd.f32 %v250, %v288
    %v307 = vadd.f32 %v251, %v289
    %v308 = vadd.f32 %v252, %v290
    %v309 = vadd.f32 %v253, %v291
    %v310 = vadd.f32 %v254, %v292
    %v311 = vadd.f32 %v255, %v293
    %v312 = vadd.f32 %v256, %v294
    %v313 = vadd.f32 %v257, %v295
    %v314 = vadd.f32 %v258, %v296
    %v315 = vadd.f32 %v259, %v297
    %v316 = vadd.f32 %v260, %v298
    %v317 = vadd.f32 %v261, %v299
    %v318 = vadd.f32 %v262, %v300
    %v319 = vadd.f32 %v263, %v301
    %v320 = vadd.f32 %v264, %v302
    %v321 = vadd.f32 %v265, %v303
    %v322 = vadd.f32 %v266, %v304
    %v323 = vadd.f32 %v267, %v305
    %v324 = vld [vmem:[#allocation2 + $0x5] sm:$0xff]
    %v325 = vld [vmem:[#allocation2 + $0xd] sm:$0x1]
    %v326 = vld [vmem:[#allocation2 + $0x15] sm:$0xff]
    %v327 = vld [vmem:[#allocation2 + $0x1d] sm:$0x1]
    %v328 = vld [vmem:[#allocation2 + $0x25] sm:$0xff]
    %v329 = vld [vmem:[#allocation2 + $0x2d] sm:$0x1]
    %v330 = vld [vmem:[#allocation2 + $0x35] sm:$0xff]
    %v331 = vld [vmem:[#allocation2 + $0x3d] sm:$0x1]
    %v332 = vld [vmem:[#allocation2 + $0x45] sm:$0xff]
    %v333 = vld [vmem:[#allocation2 + $0x4d] sm:$0x1]
    %v334 = vld [vmem:[#allocation2 + $0x55] sm:$0xff]
    %v335 = vld [vmem:[#allocation2 + $0x5d] sm:$0x1]
    %v336 = vld [vmem:[#allocation2 + $0x65] sm:$0xff]
    %v337 = vld [vmem:[#allocation2 + $0x6d] sm:$0x1]
    %v338 = vld [vmem:[#allocation2 + $0x75] sm:$0xff]
    %v339 = vld [vmem:[#allocation2 + $0x7d] sm:$0x1]
    %v340 = vld [vmem:[#allocation2 + $0x85] sm:$0xff]
    %v341 = vld [vmem:[#allocation2 + $0x8d] sm:$0x1]
    %v342 = vld [vmem:[#allocation5 + $0x5] sm:$0x1]
    %v343 = vperm.slane %v342, 0
    %v344 = vmul.f32 %v324, %v343
    %v345 = vmul.f32 %v325, %v343
    %v346 = vmul.f32 %v326, %v343
    %v347 = vmul.f32 %v327, %v343
    %v348 = vmul.f32 %v328, %v343
    %v349 = vmul.f32 %v329, %v343
    %v350 = vmul.f32 %v330, %v343
    %v351 = vmul.f32 %v331, %v343
    %v352 = vmul.f32 %v332, %v343
    %v353 = vmul.f32 %v333, %v343
    %v354 = vmul.f32 %v334, %v343
    %v355 = vmul.f32 %v335, %v343
    %v356 = vmul.f32 %v336, %v343
    %v357 = vmul.f32 %v337, %v343
    %v358 = vmul.f32 %v338, %v343
    %v359 = vmul.f32 %v339, %v343
    %v360 = vmul.f32 %v340, %v343
    %v361 = vmul.f32 %v341, %v343
    %v362 = vadd.f32 %v306, %v344
    %v363 = vadd.f32 %v307, %v345
    %v364 = vadd.f32 %v308, %v346
    %v365 = vadd.f32 %v309, %v347
    %v366 = vadd.f32 %v310, %v348
    %v367 = vadd.f32 %v311, %v349
    %v368 = vadd.f32 %v312, %v350
    %v369 = vadd.f32 %v313, %v351
    %v370 = vadd.f32 %v314, %v352
    %v371 = vadd.f32 %v315, %v353
    %v372 = vadd.f32 %v316, %v354
    %v373 = vadd.f32 %v317, %v355
    %v374 = vadd.f32 %v318, %v356
    %v375 = vadd.f32 %v319, %v357
    %v376 = vadd.f32 %v320, %v358
    %v377 = vadd.f32 %v321, %v359
    %v378 = vadd.f32 %v322, %v360
    %v379 = vadd.f32 %v323, %v361
    %v380 = vld [vmem:[#allocation2 + $0x6] sm:$0xff]
    %v381 = vld [vmem:[#allocation2 + $0xe] sm:$0x1]
    %v382 = vld [vmem:[#allocation2 + $0x16] sm:$0xff]
    %v383 = vld [vmem:[#allocation2 + $0x1e] sm:$0x1]
    %v384 = vld [vmem:[#allocation2 + $0x26] sm:$0xff]
    %v385 = vld [vmem:[#allocation2 + $0x2e] sm:$0x1]
    %v386 = vld [vmem:[#allocation2 + $0x36] sm:$0xff]
    %v387 = vld [vmem:[#allocation2 + $0x3e] sm:$0x1]
    %v388 = vld [vmem:[#allocation2 + $0x46] sm:$0xff]
    %v389 = vld [vmem:[#allocation2 + $0x4e] sm:$0x1]
    %v390 = vld [vmem:[#allocation2 + $0x56] sm:$0xff]
    %v391 = vld [vmem:[#allocation2 + $0x5e] sm:$0x1]
    %v392 = vld [vmem:[#allocation2 + $0x66] sm:$0xff]
    %v393 = vld [vmem:[#allocation2 + $0x6e] sm:$0x1]
    %v394 = vld [vmem:[#allocation2 + $0x76] sm:$0xff]
    %v395 = vld [vmem:[#allocation2 + $0x7e] sm:$0x1]
    %v396 = vld [vmem:[#allocation2 + $0x86] sm:$0xff]
    %v397 = vld [vmem:[#allocation2 + $0x8e] sm:$0x1]
    %v398 = vld [vmem:[#allocation5 + $0x6] sm:$0x1]
    %v399 = vperm.slane %v398, 0
    %v400 = vmul.f32 %v380, %v399
    %v401 = vmul.f32 %v381, %v399
    %v402 = vmul.f32 %v382, %v399
    %v403 = vmul.f32 %v383, %v399
    %v404 = vmul.f32 %v384, %v399
    %v405 = vmul.f32 %v385, %v399
    %v406 = vmul.f32 %v386, %v399
    %v407 = vmul.f32 %v387, %v399
    %v408 = vmul.f32 %v388, %v399
    %v409 = vmul.f32 %v389, %v399
    %v410 = vmul.f32 %v390, %v399
    %v411 = vmul.f32 %v391, %v399
    %v412 = vmul.f32 %v392, %v399
    %v413 = vmul.f32 %v393, %v399
    %v414 = vmul.f32 %v394, %v399
    %v415 = vmul.f32 %v395, %v399
    %v416 = vmul.f32 %v396, %v399
    %v417 = vmul.f32 %v397, %v399
    %v418 = vadd.f32 %v362, %v400
    %v419 = vadd.f32 %v363, %v401
    %v420 = vadd.f32 %v364, %v402
    %v421 = vadd.f32 %v365, %v403
    %v422 = vadd.f32 %v366, %v404
    %v423 = vadd.f32 %v367, %v405
    %v424 = vadd.f32 %v368, %v406
    %v425 = vadd.f32 %v369, %v407
    %v426 = vadd.f32 %v370, %v408
    %v427 = vadd.f32 %v371, %v409
    %v428 = vadd.f32 %v372, %v410
    %v429 = vadd.f32 %v373, %v411
    %v430 = vadd.f32 %v374, %v412
    %v431 = vadd.f32 %v375, %v413
    %v432 = vadd.f32 %v376, %v414
    %v433 = vadd.f32 %v377, %v415
    %v434 = vadd.f32 %v378, %v416
    %v435 = vadd.f32 %v379, %v417
    %v436 = vld [vmem:[#allocation2 + $0x7] sm:$0xff]
    %v437 = vld [vmem:[#allocation2 + $0xf] sm:$0x1]
    %v438 = vld [vmem:[#allocation2 + $0x17] sm:$0xff]
    %v439 = vld [vmem:[#allocation2 + $0x1f] sm:$0x1]
    %v440 = vld [vmem:[#allocation2 + $0x27] sm:$0xff]
    %v441 = vld [vmem:[#allocation2 + $0x2f] sm:$0x1]
    %v442 = vld [vmem:[#allocation2 + $0x37] sm:$0xff]
    %v443 = vld [vmem:[#allocation2 + $0x3f] sm:$0x1]
    %v444 = vld [vmem:[#allocation2 + $0x47] sm:$0xff]
    %v445 = vld [vmem:[#allocation2 + $0x4f] sm:$0x1]
    %v446 = vld [vmem:[#allocation2 + $0x57] sm:$0xff]
    %v447 = vld [vmem:[#allocation2 + $0x5f] sm:$0x1]
    %v448 = vld [vmem:[#allocation2 + $0x67] sm:$0xff]
    %v449 = vld [vmem:[#allocation2 + $0x6f] sm:$0x1]
    %v450 = vld [vmem:[#allocation2 + $0x77] sm:$0xff]
    %v451 = vld [vmem:[#allocation2 + $0x7f] sm:$0x1]
    %v452 = vld [vmem:[#allocation2 + $0x87] sm:$0xff]
    %v453 = vld [vmem:[#allocation2 + $0x8f] sm:$0x1]
    %v454 = vld [vmem:[#allocation5 + $0x7] sm:$0x1]
    %v455 = vperm.slane %v454, 0
    %v456 = vmul.f32 %v436, %v455
    %v457 = vmul.f32 %v437, %v455
    %v458 = vmul.f32 %v438, %v455
    %v459 = vmul.f32 %v439, %v455
    %v460 = vmul.f32 %v440, %v455
    %v461 = vmul.f32 %v441, %v455
    %v462 = vmul.f32 %v442, %v455
    %v463 = vmul.f32 %v443, %v455
    %v464 = vmul.f32 %v444, %v455
    %v465 = vmul.f32 %v445, %v455
    %v466 = vmul.f32 %v446, %v455
    %v467 = vmul.f32 %v447, %v455
    %v468 = vmul.f32 %v448, %v455
    %v469 = vmul.f32 %v449, %v455
    %v470 = vmul.f32 %v450, %v455
    %v471 = vmul.f32 %v451, %v455
    %v472 = vmul.f32 %v452, %v455
    %v473 = vmul.f32 %v453, %v455
    %v474 = vadd.f32 %v418, %v456
    %v475 = vadd.f32 %v419, %v457
    %v476 = vadd.f32 %v420, %v458
    %v477 = vadd.f32 %v421, %v459
    %v478 = vadd.f32 %v422, %v460
    %v479 = vadd.f32 %v423, %v461
    %v480 = vadd.f32 %v424, %v462
    %v481 = vadd.f32 %v425, %v463
    %v482 = vadd.f32 %v426, %v464
    %v483 = vadd.f32 %v427, %v465
    %v484 = vadd.f32 %v428, %v466
    %v485 = vadd.f32 %v429, %v467
    %v486 = vadd.f32 %v430, %v468
    %v487 = vadd.f32 %v431, %v469
    %v488 = vadd.f32 %v432, %v470
    %v489 = vadd.f32 %v433, %v471
    %v490 = vadd.f32 %v434, %v472
    %v491 = vadd.f32 %v435, %v473
    %s492 = scalar_lea.vmem [#allocation2], 16
    %v493 = vld [vmem:[%s492] sm:$0xff]
    %v494 = vld [vmem:[%s492 + $0x8] sm:$0x1]
    %v495 = vld [vmem:[%s492 + $0x10] sm:$0xff]
    %v496 = vld [vmem:[%s492 + $0x18] sm:$0x1]
    %v497 = vld [vmem:[%s492 + $0x20] sm:$0xff]
    %v498 = vld [vmem:[%s492 + $0x28] sm:$0x1]
    %v499 = vld [vmem:[%s492 + $0x30] sm:$0xff]
    %v500 = vld [vmem:[%s492 + $0x38] sm:$0x1]
    %v501 = vld [vmem:[%s492 + $0x40] sm:$0xff]
    %v502 = vld [vmem:[%s492 + $0x48] sm:$0x1]
    %v503 = vld [vmem:[%s492 + $0x50] sm:$0xff]
    %v504 = vld [vmem:[%s492 + $0x58] sm:$0x1]
    %v505 = vld [vmem:[%s492 + $0x60] sm:$0xff]
    %v506 = vld [vmem:[%s492 + $0x68] sm:$0x1]
    %v507 = vld [vmem:[%s492 + $0x70] sm:$0xff]
    %v508 = vld [vmem:[%s492 + $0x78] sm:$0x1]
    %v509 = vld [vmem:[%s492 + $0x80] sm:$0xff]
    %v510 = vld [vmem:[%s492 + $0x88] sm:$0x1]
    %s511 = scalar_lea.vmem [#allocation5], 8
    %v512 = vld [vmem:[%s511] sm:$0x1]
    %v513 = vperm.slane %v512, 0
    %v514 = vmul.f32 %v493, %v513
    %v515 = vmul.f32 %v494, %v513
    %v516 = vmul.f32 %v495, %v513
    %v517 = vmul.f32 %v496, %v513
    %v518 = vmul.f32 %v497, %v513
    %v519 = vmul.f32 %v498, %v513
    %v520 = vmul.f32 %v499, %v513
    %v521 = vmul.f32 %v500, %v513
    %v522 = vmul.f32 %v501, %v513
    %v523 = vmul.f32 %v502, %v513
    %v524 = vmul.f32 %v503, %v513
    %v525 = vmul.f32 %v504, %v513
    %v526 = vmul.f32 %v505, %v513
    %v527 = vmul.f32 %v506, %v513
    %v528 = vmul.f32 %v507, %v513
    %v529 = vmul.f32 %v508, %v513
    %v530 = vmul.f32 %v509, %v513
    %v531 = vmul.f32 %v510, %v513
    %v532 = vadd.f32 %v474, %v514
    %v533 = vadd.f32 %v475, %v515
    %v534 = vadd.f32 %v476, %v516
    %v535 = vadd.f32 %v477, %v517
    %v536 = vadd.f32 %v478, %v518
    %v537 = vadd.f32 %v479, %v519
    %v538 = vadd.f32 %v480, %v520
    %v539 = vadd.f32 %v481, %v521
    %v540 = vadd.f32 %v482, %v522
    %v541 = vadd.f32 %v483, %v523
    %v542 = vadd.f32 %v484, %v524
    %v543 = vadd.f32 %v485, %v525
    %v544 = vadd.f32 %v486, %v526
    %v545 = vadd.f32 %v487, %v527
    %v546 = vadd.f32 %v488, %v528
    %v547 = vadd.f32 %v489, %v529
    %v548 = vadd.f32 %v490, %v530
    %v549 = vadd.f32 %v491, %v531
    %v550 = vld [vmem:[%s492 + $0x1] sm:$0xff]
    %v551 = vld [vmem:[%s492 + $0x9] sm:$0x1]
    %v552 = vld [vmem:[%s492 + $0x11] sm:$0xff]
    %v553 = vld [vmem:[%s492 + $0x19] sm:$0x1]
    %v554 = vld [vmem:[%s492 + $0x21] sm:$0xff]
    %v555 = vld [vmem:[%s492 + $0x29] sm:$0x1]
    %v556 = vld [vmem:[%s492 + $0x31] sm:$0xff]
    %v557 = vld [vmem:[%s492 + $0x39] sm:$0x1]
    %v558 = vld [vmem:[%s492 + $0x41] sm:$0xff]
    %v559 = vld [vmem:[%s492 + $0x49] sm:$0x1]
    %v560 = vld [vmem:[%s492 + $0x51] sm:$0xff]
    %v561 = vld [vmem:[%s492 + $0x59] sm:$0x1]
    %v562 = vld [vmem:[%s492 + $0x61] sm:$0xff]
    %v563 = vld [vmem:[%s492 + $0x69] sm:$0x1]
    %v564 = vld [vmem:[%s492 + $0x71] sm:$0xff]
    %v565 = vld [vmem:[%s492 + $0x79] sm:$0x1]
    %v566 = vld [vmem:[%s492 + $0x81] sm:$0xff]
    %v567 = vld [vmem:[%s492 + $0x89] sm:$0x1]
    %v568 = vld [vmem:[%s511 + $0x1] sm:$0x1]
    %v569 = vperm.slane %v568, 0
    %v570 = vmul.f32 %v550, %v569
    %v571 = vmul.f32 %v551, %v569
    %v572 = vmul.f32 %v552, %v569
    %v573 = vmul.f32 %v553, %v569
    %v574 = vmul.f32 %v554, %v569
    %v575 = vmul.f32 %v555, %v569
    %v576 = vmul.f32 %v556, %v569
    %v577 = vmul.f32 %v557, %v569
    %v578 = vmul.f32 %v558, %v569
    %v579 = vmul.f32 %v559, %v569
    %v580 = vmul.f32 %v560, %v569
    %v581 = vmul.f32 %v561, %v569
    %v582 = vmul.f32 %v562, %v569
    %v583 = vmul.f32 %v563, %v569
    %v584 = vmul.f32 %v564, %v569
    %v585 = vmul.f32 %v565, %v569
    %v586 = vmul.f32 %v566, %v569
    %v587 = vmul.f32 %v567, %v569
    %v588 = vadd.f32 %v532, %v570
    %v589 = vadd.f32 %v533, %v571
    %v590 = vadd.f32 %v534, %v572
    %v591 = vadd.f32 %v535, %v573
    %v592 = vadd.f32 %v536, %v574
    %v593 = vadd.f32 %v537, %v575
    %v594 = vadd.f32 %v538, %v576
    %v595 = vadd.f32 %v539, %v577
    %v596 = vadd.f32 %v540, %v578
    %v597 = vadd.f32 %v541, %v579
    %v598 = vadd.f32 %v542, %v580
    %v599 = vadd.f32 %v543, %v581
    %v600 = vadd.f32 %v544, %v582
    %v601 = vadd.f32 %v545, %v583
    %v602 = vadd.f32 %v546, %v584
    %v603 = vadd.f32 %v547, %v585
    %v604 = vadd.f32 %v548, %v586
    %v605 = vadd.f32 %v549, %v587
    %v606 = vld [vmem:[%s492 + $0x2] sm:$0xff]
    %v607 = vld [vmem:[%s492 + $0xa] sm:$0x1]
    %v608 = vld [vmem:[%s492 + $0x12] sm:$0xff]
    %v609 = vld [vmem:[%s492 + $0x1a] sm:$0x1]
    %v610 = vld [vmem:[%s492 + $0x22] sm:$0xff]
    %v611 = vld [vmem:[%s492 + $0x2a] sm:$0x1]
    %v612 = vld [vmem:[%s492 + $0x32] sm:$0xff]
    %v613 = vld [vmem:[%s492 + $0x3a] sm:$0x1]
    %v614 = vld [vmem:[%s492 + $0x42] sm:$0xff]
    %v615 = vld [vmem:[%s492 + $0x4a] sm:$0x1]
    %v616 = vld [vmem:[%s492 + $0x52] sm:$0xff]
    %v617 = vld [vmem:[%s492 + $0x5a] sm:$0x1]
    %v618 = vld [vmem:[%s492 + $0x62] sm:$0xff]
    %v619 = vld [vmem:[%s492 + $0x6a] sm:$0x1]
    %v620 = vld [vmem:[%s492 + $0x72] sm:$0xff]
    %v621 = vld [vmem:[%s492 + $0x7a] sm:$0x1]
    %v622 = vld [vmem:[%s492 + $0x82] sm:$0xff]
    %v623 = vld [vmem:[%s492 + $0x8a] sm:$0x1]
    %v624 = vld [vmem:[%s511 + $0x2] sm:$0x1]
    %v625 = vperm.slane %v624, 0
    %v626 = vmul.f32 %v606, %v625
    %v627 = vmul.f32 %v607, %v625
    %v628 = vmul.f32 %v608, %v625
    %v629 = vmul.f32 %v609, %v625
    %v630 = vmul.f32 %v610, %v625
    %v631 = vmul.f32 %v611, %v625
    %v632 = vmul.f32 %v612, %v625
    %v633 = vmul.f32 %v613, %v625
    %v634 = vmul.f32 %v614, %v625
    %v635 = vmul.f32 %v615, %v625
    %v636 = vmul.f32 %v616, %v625
    %v637 = vmul.f32 %v617, %v625
    %v638 = vmul.f32 %v618, %v625
    %v639 = vmul.f32 %v619, %v625
    %v640 = vmul.f32 %v620, %v625
    %v641 = vmul.f32 %v621, %v625
    %v642 = vmul.f32 %v622, %v625
    %v643 = vmul.f32 %v623, %v625
    %v644 = vadd.f32 %v588, %v626
    %v645 = vadd.f32 %v589, %v627
    %v646 = vadd.f32 %v590, %v628
    %v647 = vadd.f32 %v591, %v629
    %v648 = vadd.f32 %v592, %v630
    %v649 = vadd.f32 %v593, %v631
    %v650 = vadd.f32 %v594, %v632
    %v651 = vadd.f32 %v595, %v633
    %v652 = vadd.f32 %v596, %v634
    %v653 = vadd.f32 %v597, %v635
    %v654 = vadd.f32 %v598, %v636
    %v655 = vadd.f32 %v599, %v637
    %v656 = vadd.f32 %v600, %v638
    %v657 = vadd.f32 %v601, %v639
    %v658 = vadd.f32 %v602, %v640
    %v659 = vadd.f32 %v603, %v641
    %v660 = vadd.f32 %v604, %v642
    %v661 = vadd.f32 %v605, %v643
    %v662 = vld [vmem:[%s492 + $0x3] sm:$0xff]
    %v663 = vld [vmem:[%s492 + $0xb] sm:$0x1]
    %v664 = vld [vmem:[%s492 + $0x13] sm:$0xff]
    %v665 = vld [vmem:[%s492 + $0x1b] sm:$0x1]
    %v666 = vld [vmem:[%s492 + $0x23] sm:$0xff]
    %v667 = vld [vmem:[%s492 + $0x2b] sm:$0x1]
    %v668 = vld [vmem:[%s492 + $0x33] sm:$0xff]
    %v669 = vld [vmem:[%s492 + $0x3b] sm:$0x1]
    %v670 = vld [vmem:[%s492 + $0x43] sm:$0xff]
    %v671 = vld [vmem:[%s492 + $0x4b] sm:$0x1]
    %v672 = vld [vmem:[%s492 + $0x53] sm:$0xff]
    %v673 = vld [vmem:[%s492 + $0x5b] sm:$0x1]
    %v674 = vld [vmem:[%s492 + $0x63] sm:$0xff]
    %v675 = vld [vmem:[%s492 + $0x6b] sm:$0x1]
    %v676 = vld [vmem:[%s492 + $0x73] sm:$0xff]
    %v677 = vld [vmem:[%s492 + $0x7b] sm:$0x1]
    %v678 = vld [vmem:[%s492 + $0x83] sm:$0xff]
    %v679 = vld [vmem:[%s492 + $0x8b] sm:$0x1]
    %v680 = vld [vmem:[%s511 + $0x3] sm:$0x1]
    %v681 = vperm.slane %v680, 0
    %v682 = vmul.f32 %v662, %v681
    %v683 = vmul.f32 %v663, %v681
    %v684 = vmul.f32 %v664, %v681
    %v685 = vmul.f32 %v665, %v681
    %v686 = vmul.f32 %v666, %v681
    %v687 = vmul.f32 %v667, %v681
    %v688 = vmul.f32 %v668, %v681
    %v689 = vmul.f32 %v669, %v681
    %v690 = vmul.f32 %v670, %v681
    %v691 = vmul.f32 %v671, %v681
    %v692 = vmul.f32 %v672, %v681
    %v693 = vmul.f32 %v673, %v681
    %v694 = vmul.f32 %v674, %v681
    %v695 = vmul.f32 %v675, %v681
    %v696 = vmul.f32 %v676, %v681
    %v697 = vmul.f32 %v677, %v681
    %v698 = vmul.f32 %v678, %v681
    %v699 = vmul.f32 %v679, %v681
    %v700 = vadd.f32 %v644, %v682
    %v701 = vadd.f32 %v645, %v683
    %v702 = vadd.f32 %v646, %v684
    %v703 = vadd.f32 %v647, %v685
    %v704 = vadd.f32 %v648, %v686
    %v705 = vadd.f32 %v649, %v687
    %v706 = vadd.f32 %v650, %v688
    %v707 = vadd.f32 %v651, %v689
    %v708 = vadd.f32 %v652, %v690
    %v709 = vadd.f32 %v653, %v691
    %v710 = vadd.f32 %v654, %v692
    %v711 = vadd.f32 %v655, %v693
    %v712 = vadd.f32 %v656, %v694
    %v713 = vadd.f32 %v657, %v695
    %v714 = vadd.f32 %v658, %v696
    %v715 = vadd.f32 %v659, %v697
    %v716 = vadd.f32 %v660, %v698
    %v717 = vadd.f32 %v661, %v699
    %v718 = vld [vmem:[%s492 + $0x4] sm:$0xff]
    %v719 = vld [vmem:[%s492 + $0xc] sm:$0x1]
    %v720 = vld [vmem:[%s492 + $0x14] sm:$0xff]
    %v721 = vld [vmem:[%s492 + $0x1c] sm:$0x1]
    %v722 = vld [vmem:[%s492 + $0x24] sm:$0xff]
    %v723 = vld [vmem:[%s492 + $0x2c] sm:$0x1]
    %v724 = vld [vmem:[%s492 + $0x34] sm:$0xff]
    %v725 = vld [vmem:[%s492 + $0x3c] sm:$0x1]
    %v726 = vld [vmem:[%s492 + $0x44] sm:$0xff]
    %v727 = vld [vmem:[%s492 + $0x4c] sm:$0x1]
    %v728 = vld [vmem:[%s492 + $0x54] sm:$0xff]
    %v729 = vld [vmem:[%s492 + $0x5c] sm:$0x1]
    %v730 = vld [vmem:[%s492 + $0x64] sm:$0xff]
    %v731 = vld [vmem:[%s492 + $0x6c] sm:$0x1]
    %v732 = vld [vmem:[%s492 + $0x74] sm:$0xff]
    %v733 = vld [vmem:[%s492 + $0x7c] sm:$0x1]
    %v734 = vld [vmem:[%s492 + $0x84] sm:$0xff]
    %v735 = vld [vmem:[%s492 + $0x8c] sm:$0x1]
    %v736 = vld [vmem:[%s511 + $0x4] sm:$0x1]
    %v737 = vperm.slane %v736, 0
    %v738 = vmul.f32 %v718, %v737
    %v739 = vmul.f32 %v719, %v737
    %v740 = vmul.f32 %v720, %v737
    %v741 = vmul.f32 %v721, %v737
    %v742 = vmul.f32 %v722, %v737
    %v743 = vmul.f32 %v723, %v737
    %v744 = vmul.f32 %v724, %v737
    %v745 = vmul.f32 %v725, %v737
    %v746 = vmul.f32 %v726, %v737
    %v747 = vmul.f32 %v727, %v737
    %v748 = vmul.f32 %v728, %v737
    %v749 = vmul.f32 %v729, %v737
    %v750 = vmul.f32 %v730, %v737
    %v751 = vmul.f32 %v731, %v737
    %v752 = vmul.f32 %v732, %v737
    %v753 = vmul.f32 %v733, %v737
    %v754 = vmul.f32 %v734, %v737
    %v755 = vmul.f32 %v735, %v737
    %v756 = vadd.f32 %v700, %v738
    %v757 = vadd.f32 %v701, %v739
    %v758 = vadd.f32 %v702, %v740
    %v759 = vadd.f32 %v703, %v741
    %v760 = vadd.f32 %v704, %v742
    %v761 = vadd.f32 %v705, %v743
    %v762 = vadd.f32 %v706, %v744
    %v763 = vadd.f32 %v707, %v745
    %v764 = vadd.f32 %v708, %v746
    %v765 = vadd.f32 %v709, %v747
    %v766 = vadd.f32 %v710, %v748
    %v767 = vadd.f32 %v711, %v749
    %v768 = vadd.f32 %v712, %v750
    %v769 = vadd.f32 %v713, %v751
    %v770 = vadd.f32 %v714, %v752
    %v771 = vadd.f32 %v715, %v753
    %v772 = vadd.f32 %v716, %v754
    %v773 = vadd.f32 %v717, %v755
    %v774 = vld [vmem:[%s492 + $0x5] sm:$0xff]
    %v775 = vld [vmem:[%s492 + $0xd] sm:$0x1]
    %v776 = vld [vmem:[%s492 + $0x15] sm:$0xff]
    %v777 = vld [vmem:[%s492 + $0x1d] sm:$0x1]
    %v778 = vld [vmem:[%s492 + $0x25] sm:$0xff]
    %v779 = vld [vmem:[%s492 + $0x2d] sm:$0x1]
    %v780 = vld [vmem:[%s492 + $0x35] sm:$0xff]
    %v781 = vld [vmem:[%s492 + $0x3d] sm:$0x1]
    %v782 = vld [vmem:[%s492 + $0x45] sm:$0xff]
    %v783 = vld [vmem:[%s492 + $0x4d] sm:$0x1]
    %v784 = vld [vmem:[%s492 + $0x55] sm:$0xff]
    %v785 = vld [vmem:[%s492 + $0x5d] sm:$0x1]
    %v786 = vld [vmem:[%s492 + $0x65] sm:$0xff]
    %v787 = vld [vmem:[%s492 + $0x6d] sm:$0x1]
    %v788 = vld [vmem:[%s492 + $0x75] sm:$0xff]
    %v789 = vld [vmem:[%s492 + $0x7d] sm:$0x1]
    %v790 = vld [vmem:[%s492 + $0x85] sm:$0xff]
    %v791 = vld [vmem:[%s492 + $0x8d] sm:$0x1]
    %v792 = vld [vmem:[%s511 + $0x5] sm:$0x1]
    %v793 = vperm.slane %v792, 0
    %v794 = vmul.f32 %v774, %v793
    %v795 = vmul.f32 %v775, %v793
    %v796 = vmul.f32 %v776, %v793
    %v797 = vmul.f32 %v777, %v793
    %v798 = vmul.f32 %v778, %v793
    %v799 = vmul.f32 %v779, %v793
    %v800 = vmul.f32 %v780, %v793
    %v801 = vmul.f32 %v781, %v793
    %v802 = vmul.f32 %v782, %v793
    %v803 = vmul.f32 %v783, %v793
    %v804 = vmul.f32 %v784, %v793
    %v805 = vmul.f32 %v785, %v793
    %v806 = vmul.f32 %v786, %v793
    %v807 = vmul.f32 %v787, %v793
    %v808 = vmul.f32 %v788, %v793
    %v809 = vmul.f32 %v789, %v793
    %v810 = vmul.f32 %v790, %v793
    %v811 = vmul.f32 %v791, %v793
    %v812 = vadd.f32 %v756, %v794
    %v813 = vadd.f32 %v757, %v795
    %v814 = vadd.f32 %v758, %v796
    %v815 = vadd.f32 %v759, %v797
    %v816 = vadd.f32 %v760, %v798
    %v817 = vadd.f32 %v761, %v799
    %v818 = vadd.f32 %v762, %v800
    %v819 = vadd.f32 %v763, %v801
    %v820 = vadd.f32 %v764, %v802
    %v821 = vadd.f32 %v765, %v803
    %v822 = vadd.f32 %v766, %v804
    %v823 = vadd.f32 %v767, %v805
    %v824 = vadd.f32 %v768, %v806
    %v825 = vadd.f32 %v769, %v807
    %v826 = vadd.f32 %v770, %v808
    %v827 = vadd.f32 %v771, %v809
    %v828 = vadd.f32 %v772, %v810
    %v829 = vadd.f32 %v773, %v811
    %v830 = vld [vmem:[%s492 + $0x6] sm:$0xff]
    %v831 = vld [vmem:[%s492 + $0xe] sm:$0x1]
    %v832 = vld [vmem:[%s492 + $0x16] sm:$0xff]
    %v833 = vld [vmem:[%s492 + $0x1e] sm:$0x1]
    %v834 = vld [vmem:[%s492 + $0x26] sm:$0xff]
    %v835 = vld [vmem:[%s492 + $0x2e] sm:$0x1]
    %v836 = vld [vmem:[%s492 + $0x36] sm:$0xff]
    %v837 = vld [vmem:[%s492 + $0x3e] sm:$0x1]
    %v838 = vld [vmem:[%s492 + $0x46] sm:$0xff]
    %v839 = vld [vmem:[%s492 + $0x4e] sm:$0x1]
    %v840 = vld [vmem:[%s492 + $0x56] sm:$0xff]
    %v841 = vld [vmem:[%s492 + $0x5e] sm:$0x1]
    %v842 = vld [vmem:[%s492 + $0x66] sm:$0xff]
    %v843 = vld [vmem:[%s492 + $0x6e] sm:$0x1]
    %v844 = vld [vmem:[%s492 + $0x76] sm:$0xff]
    %v845 = vld [vmem:[%s492 + $0x7e] sm:$0x1]
    %v846 = vld [vmem:[%s492 + $0x86] sm:$0xff]
    %v847 = vld [vmem:[%s492 + $0x8e] sm:$0x1]
    %v848 = vld [vmem:[%s511 + $0x6] sm:$0x1]
    %v849 = vperm.slane %v848, 0
    %v850 = vmul.f32 %v830, %v849
    %v851 = vmul.f32 %v831, %v849
    %v852 = vmul.f32 %v832, %v849
    %v853 = vmul.f32 %v833, %v849
    %v854 = vmul.f32 %v834, %v849
    %v855 = vmul.f32 %v835, %v849
    %v856 = vmul.f32 %v836, %v849
    %v857 = vmul.f32 %v837, %v849
    %v858 = vmul.f32 %v838, %v849
    %v859 = vmul.f32 %v839, %v849
    %v860 = vmul.f32 %v840, %v849
    %v861 = vmul.f32 %v841, %v849
    %v862 = vmul.f32 %v842, %v849
    %v863 = vmul.f32 %v843, %v849
    %v864 = vmul.f32 %v844, %v849
    %v865 = vmul.f32 %v845, %v849
    %v866 = vmul.f32 %v846, %v849
    %v867 = vmul.f32 %v847, %v849
    %v868 = vadd.f32 %v812, %v850
    %v869 = vadd.f32 %v813, %v851
    %v870 = vadd.f32 %v814, %v852
    %v871 = vadd.f32 %v815, %v853
    %v872 = vadd.f32 %v816, %v854
    %v873 = vadd.f32 %v817, %v855
    %v874 = vadd.f32 %v818, %v856
    %v875 = vadd.f32 %v819, %v857
    %v876 = vadd.f32 %v820, %v858
    %v877 = vadd.f32 %v821, %v859
    %v878 = vadd.f32 %v822, %v860
    %v879 = vadd.f32 %v823, %v861
    %v880 = vadd.f32 %v824, %v862
    %v881 = vadd.f32 %v825, %v863
    %v882 = vadd.f32 %v826, %v864
    %v883 = vadd.f32 %v827, %v865
    %v884 = vadd.f32 %v828, %v866
    %v885 = vadd.f32 %v829, %v867
    %v886 = vld [vmem:[%s492 + $0x7] sm:$0xff]
    %v887 = vld [vmem:[%s492 + $0xf] sm:$0x1]
    %v888 = vld [vmem:[%s492 + $0x17] sm:$0xff]
    %v889 = vld [vmem:[%s492 + $0x1f] sm:$0x1]
    %v890 = vld [vmem:[%s492 + $0x27] sm:$0xff]
    %v891 = vld [vmem:[%s492 + $0x2f] sm:$0x1]
    %v892 = vld [vmem:[%s492 + $0x37] sm:$0xff]
    %v893 = vld [vmem:[%s492 + $0x3f] sm:$0x1]
    %v894 = vld [vmem:[%s492 + $0x47] sm:$0xff]
    %v895 = vld [vmem:[%s492 + $0x4f] sm:$0x1]
    %v896 = vld [vmem:[%s492 + $0x57] sm:$0xff]
    %v897 = vld [vmem:[%s492 + $0x5f] sm:$0x1]
    %v898 = vld [vmem:[%s492 + $0x67] sm:$0xff]
    %v899 = vld [vmem:[%s492 + $0x6f] sm:$0x1]
    %v900 = vld [vmem:[%s492 + $0x77] sm:$0xff]
    %v901 = vld [vmem:[%s492 + $0x7f] sm:$0x1]
    %v902 = vld [vmem:[%s492 + $0x87] sm:$0xff]
    %v903 = vld [vmem:[%s492 + $0x8f] sm:$0x1]
    %v904 = vld [vmem:[%s511 + $0x7] sm:$0x1]
    %v905 = vperm.slane %v904, 0
    %v906 = vmul.f32 %v886, %v905
    %v907 = vmul.f32 %v887, %v905
    %v908 = vmul.f32 %v888, %v905
    %v909 = vmul.f32 %v889, %v905
    %v910 = vmul.f32 %v890, %v905
    %v911 = vmul.f32 %v891, %v905
    %v912 = vmul.f32 %v892, %v905
    %v913 = vmul.f32 %v893, %v905
    %v914 = vmul.f32 %v894, %v905
    %v915 = vmul.f32 %v895, %v905
    %v916 = vmul.f32 %v896, %v905
    %v917 = vmul.f32 %v897, %v905
    %v918 = vmul.f32 %v898, %v905
    %v919 = vmul.f32 %v899, %v905
    %v920 = vmul.f32 %v900, %v905
    %v921 = vmul.f32 %v901, %v905
    %v922 = vmul.f32 %v902, %v905
    %v923 = vmul.f32 %v903, %v905
    %v924 = vadd.f32 %v868, %v906
    %v925 = vadd.f32 %v869, %v907
    %v926 = vadd.f32 %v870, %v908
    %v927 = vadd.f32 %v871, %v909
    %v928 = vadd.f32 %v872, %v910
    %v929 = vadd.f32 %v873, %v911
    %v930 = vadd.f32 %v874, %v912
    %v931 = vadd.f32 %v875, %v913
    %v932 = vadd.f32 %v876, %v914
    %v933 = vadd.f32 %v877, %v915
    %v934 = vadd.f32 %v878, %v916
    %v935 = vadd.f32 %v879, %v917
    %v936 = vadd.f32 %v880, %v918
    %v937 = vadd.f32 %v881, %v919
    %v938 = vadd.f32 %v882, %v920
    %v939 = vadd.f32 %v883, %v921
    %v940 = vadd.f32 %v884, %v922
    %v941 = vadd.f32 %v885, %v923
    %s942 = scalar_lea.vmem [#allocation2], 32
    %v943 = vld [vmem:[%s942] sm:$0xff]
    %v944 = vld [vmem:[%s942 + $0x8] sm:$0x1]
    %v945 = vld [vmem:[%s942 + $0x10] sm:$0xff]
    %v946 = vld [vmem:[%s942 + $0x18] sm:$0x1]
    %v947 = vld [vmem:[%s942 + $0x20] sm:$0xff]
    %v948 = vld [vmem:[%s942 + $0x28] sm:$0x1]
    %v949 = vld [vmem:[%s942 + $0x30] sm:$0xff]
    %v950 = vld [vmem:[%s942 + $0x38] sm:$0x1]
    %v951 = vld [vmem:[%s942 + $0x40] sm:$0xff]
    %v952 = vld [vmem:[%s942 + $0x48] sm:$0x1]
    %v953 = vld [vmem:[%s942 + $0x50] sm:$0xff]
    %v954 = vld [vmem:[%s942 + $0x58] sm:$0x1]
    %v955 = vld [vmem:[%s942 + $0x60] sm:$0xff]
    %v956 = vld [vmem:[%s942 + $0x68] sm:$0x1]
    %v957 = vld [vmem:[%s942 + $0x70] sm:$0xff]
    %v958 = vld [vmem:[%s942 + $0x78] sm:$0x1]
    %v959 = vld [vmem:[%s942 + $0x80] sm:$0xff]
    %v960 = vld [vmem:[%s942 + $0x88] sm:$0x1]
    %s961 = scalar_lea.vmem [#allocation5], 16
    %v962 = vld [vmem:[%s961] sm:$0x1]
    %v963 = vperm.slane %v962, 0
    %v964 = vmul.f32 %v943, %v963
    %v965 = vmul.f32 %v944, %v963
    %v966 = vmul.f32 %v945, %v963
    %v967 = vmul.f32 %v946, %v963
    %v968 = vmul.f32 %v947, %v963
    %v969 = vmul.f32 %v948, %v963
    %v970 = vmul.f32 %v949, %v963
    %v971 = vmul.f32 %v950, %v963
    %v972 = vmul.f32 %v951, %v963
    %v973 = vmul.f32 %v952, %v963
    %v974 = vmul.f32 %v953, %v963
    %v975 = vmul.f32 %v954, %v963
    %v976 = vmul.f32 %v955, %v963
    %v977 = vmul.f32 %v956, %v963
    %v978 = vmul.f32 %v957, %v963
    %v979 = vmul.f32 %v958, %v963
    %v980 = vmul.f32 %v959, %v963
    %v981 = vmul.f32 %v960, %v963
    %v982 = vadd.f32 %v924, %v964
    %v983 = vadd.f32 %v925, %v965
    %v984 = vadd.f32 %v926, %v966
    %v985 = vadd.f32 %v927, %v967
    %v986 = vadd.f32 %v928, %v968
    %v987 = vadd.f32 %v929, %v969
    %v988 = vadd.f32 %v930, %v970
    %v989 = vadd.f32 %v931, %v971
    %v990 = vadd.f32 %v932, %v972
    %v991 = vadd.f32 %v933, %v973
    %v992 = vadd.f32 %v934, %v974
    %v993 = vadd.f32 %v935, %v975
    %v994 = vadd.f32 %v936, %v976
    %v995 = vadd.f32 %v937, %v977
    %v996 = vadd.f32 %v938, %v978
    %v997 = vadd.f32 %v939, %v979
    %v998 = vadd.f32 %v940, %v980
    %v999 = vadd.f32 %v941, %v981
    %v1000 = vld [vmem:[%s942 + $0x1] sm:$0xff]
    %v1001 = vld [vmem:[%s942 + $0x9] sm:$0x1]
    %v1002 = vld [vmem:[%s942 + $0x11] sm:$0xff]
    %v1003 = vld [vmem:[%s942 + $0x19] sm:$0x1]
    %v1004 = vld [vmem:[%s942 + $0x21] sm:$0xff]
    %v1005 = vld [vmem:[%s942 + $0x29] sm:$0x1]
    %v1006 = vld [vmem:[%s942 + $0x31] sm:$0xff]
    %v1007 = vld [vmem:[%s942 + $0x39] sm:$0x1]
    %v1008 = vld [vmem:[%s942 + $0x41] sm:$0xff]
    %v1009 = vld [vmem:[%s942 + $0x49] sm:$0x1]
    %v1010 = vld [vmem:[%s942 + $0x51] sm:$0xff]
    %v1011 = vld [vmem:[%s942 + $0x59] sm:$0x1]
    %v1012 = vld [vmem:[%s942 + $0x61] sm:$0xff]
    %v1013 = vld [vmem:[%s942 + $0x69] sm:$0x1]
    %v1014 = vld [vmem:[%s942 + $0x71] sm:$0xff]
    %v1015 = vld [vmem:[%s942 + $0x79] sm:$0x1]
    %v1016 = vld [vmem:[%s942 + $0x81] sm:$0xff]
    %v1017 = vld [vmem:[%s942 + $0x89] sm:$0x1]
    %v1018 = vld [vmem:[%s961 + $0x1] sm:$0x1]
    %v1019 = vperm.slane %v1018, 0
    %v1020 = vmul.f32 %v1000, %v1019
    %v1021 = vmul.f32 %v1001, %v1019
    %v1022 = vmul.f32 %v1002, %v1019
    %v1023 = vmul.f32 %v1003, %v1019
    %v1024 = vmul.f32 %v1004, %v1019
    %v1025 = vmul.f32 %v1005, %v1019
    %v1026 = vmul.f32 %v1006, %v1019
    %v1027 = vmul.f32 %v1007, %v1019
    %v1028 = vmul.f32 %v1008, %v1019
    %v1029 = vmul.f32 %v1009, %v1019
    %v1030 = vmul.f32 %v1010, %v1019
    %v1031 = vmul.f32 %v1011, %v1019
    %v1032 = vmul.f32 %v1012, %v1019
    %v1033 = vmul.f32 %v1013, %v1019
    %v1034 = vmul.f32 %v1014, %v1019
    %v1035 = vmul.f32 %v1015, %v1019
    %v1036 = vmul.f32 %v1016, %v1019
    %v1037 = vmul.f32 %v1017, %v1019
    %v1038 = vadd.f32 %v982, %v1020
    %v1039 = vadd.f32 %v983, %v1021
    %v1040 = vadd.f32 %v984, %v1022
    %v1041 = vadd.f32 %v985, %v1023
    %v1042 = vadd.f32 %v986, %v1024
    %v1043 = vadd.f32 %v987, %v1025
    %v1044 = vadd.f32 %v988, %v1026
    %v1045 = vadd.f32 %v989, %v1027
    %v1046 = vadd.f32 %v990, %v1028
    %v1047 = vadd.f32 %v991, %v1029
    %v1048 = vadd.f32 %v992, %v1030
    %v1049 = vadd.f32 %v993, %v1031
    %v1050 = vadd.f32 %v994, %v1032
    %v1051 = vadd.f32 %v995, %v1033
    %v1052 = vadd.f32 %v996, %v1034
    %v1053 = vadd.f32 %v997, %v1035
    %v1054 = vadd.f32 %v998, %v1036
    %v1055 = vadd.f32 %v999, %v1037
    %v1056 = vld [vmem:[%s942 + $0x2] sm:$0xff]
    %v1057 = vld [vmem:[%s942 + $0xa] sm:$0x1]
    %v1058 = vld [vmem:[%s942 + $0x12] sm:$0xff]
    %v1059 = vld [vmem:[%s942 + $0x1a] sm:$0x1]
    %v1060 = vld [vmem:[%s942 + $0x22] sm:$0xff]
    %v1061 = vld [vmem:[%s942 + $0x2a] sm:$0x1]
    %v1062 = vld [vmem:[%s942 + $0x32] sm:$0xff]
    %v1063 = vld [vmem:[%s942 + $0x3a] sm:$0x1]
    %v1064 = vld [vmem:[%s942 + $0x42] sm:$0xff]
    %v1065 = vld [vmem:[%s942 + $0x4a] sm:$0x1]
    %v1066 = vld [vmem:[%s942 + $0x52] sm:$0xff]
    %v1067 = vld [vmem:[%s942 + $0x5a] sm:$0x1]
    %v1068 = vld [vmem:[%s942 + $0x62] sm:$0xff]
    %v1069 = vld [vmem:[%s942 + $0x6a] sm:$0x1]
    %v1070 = vld [vmem:[%s942 + $0x72] sm:$0xff]
    %v1071 = vld [vmem:[%s942 + $0x7a] sm:$0x1]
    %v1072 = vld [vmem:[%s942 + $0x82] sm:$0xff]
    %v1073 = vld [vmem:[%s942 + $0x8a] sm:$0x1]
    %v1074 = vld [vmem:[%s961 + $0x2] sm:$0x1]
    %v1075 = vperm.slane %v1074, 0
    %v1076 = vmul.f32 %v1056, %v1075
    %v1077 = vmul.f32 %v1057, %v1075
    %v1078 = vmul.f32 %v1058, %v1075
    %v1079 = vmul.f32 %v1059, %v1075
    %v1080 = vmul.f32 %v1060, %v1075
    %v1081 = vmul.f32 %v1061, %v1075
    %v1082 = vmul.f32 %v1062, %v1075
    %v1083 = vmul.f32 %v1063, %v1075
    %v1084 = vmul.f32 %v1064, %v1075
    %v1085 = vmul.f32 %v1065, %v1075
    %v1086 = vmul.f32 %v1066, %v1075
    %v1087 = vmul.f32 %v1067, %v1075
    %v1088 = vmul.f32 %v1068, %v1075
    %v1089 = vmul.f32 %v1069, %v1075
    %v1090 = vmul.f32 %v1070, %v1075
    %v1091 = vmul.f32 %v1071, %v1075
    %v1092 = vmul.f32 %v1072, %v1075
    %v1093 = vmul.f32 %v1073, %v1075
    %v1094 = vadd.f32 %v1038, %v1076
    %v1095 = vadd.f32 %v1039, %v1077
    %v1096 = vadd.f32 %v1040, %v1078
    %v1097 = vadd.f32 %v1041, %v1079
    %v1098 = vadd.f32 %v1042, %v1080
    %v1099 = vadd.f32 %v1043, %v1081
    %v1100 = vadd.f32 %v1044, %v1082
    %v1101 = vadd.f32 %v1045, %v1083
    %v1102 = vadd.f32 %v1046, %v1084
    %v1103 = vadd.f32 %v1047, %v1085
    %v1104 = vadd.f32 %v1048, %v1086
    %v1105 = vadd.f32 %v1049, %v1087
    %v1106 = vadd.f32 %v1050, %v1088
    %v1107 = vadd.f32 %v1051, %v1089
    %v1108 = vadd.f32 %v1052, %v1090
    %v1109 = vadd.f32 %v1053, %v1091
    %v1110 = vadd.f32 %v1054, %v1092
    %v1111 = vadd.f32 %v1055, %v1093
    %v1112 = vld [vmem:[%s942 + $0x3] sm:$0xff]
    %v1113 = vld [vmem:[%s942 + $0xb] sm:$0x1]
    %v1114 = vld [vmem:[%s942 + $0x13] sm:$0xff]
    %v1115 = vld [vmem:[%s942 + $0x1b] sm:$0x1]
    %v1116 = vld [vmem:[%s942 + $0x23] sm:$0xff]
    %v1117 = vld [vmem:[%s942 + $0x2b] sm:$0x1]
    %v1118 = vld [vmem:[%s942 + $0x33] sm:$0xff]
    %v1119 = vld [vmem:[%s942 + $0x3b] sm:$0x1]
    %v1120 = vld [vmem:[%s942 + $0x43] sm:$0xff]
    %v1121 = vld [vmem:[%s942 + $0x4b] sm:$0x1]
    %v1122 = vld [vmem:[%s942 + $0x53] sm:$0xff]
    %v1123 = vld [vmem:[%s942 + $0x5b] sm:$0x1]
    %v1124 = vld [vmem:[%s942 + $0x63] sm:$0xff]
    %v1125 = vld [vmem:[%s942 + $0x6b] sm:$0x1]
    %v1126 = vld [vmem:[%s942 + $0x73] sm:$0xff]
    %v1127 = vld [vmem:[%s942 + $0x7b] sm:$0x1]
    %v1128 = vld [vmem:[%s942 + $0x83] sm:$0xff]
    %v1129 = vld [vmem:[%s942 + $0x8b] sm:$0x1]
    %v1130 = vld [vmem:[%s961 + $0x3] sm:$0x1]
    %v1131 = vperm.slane %v1130, 0
    %v1132 = vmul.f32 %v1112, %v1131
    %v1133 = vmul.f32 %v1113, %v1131
    %v1134 = vmul.f32 %v1114, %v1131
    %v1135 = vmul.f32 %v1115, %v1131
    %v1136 = vmul.f32 %v1116, %v1131
    %v1137 = vmul.f32 %v1117, %v1131
    %v1138 = vmul.f32 %v1118, %v1131
    %v1139 = vmul.f32 %v1119, %v1131
    %v1140 = vmul.f32 %v1120, %v1131
    %v1141 = vmul.f32 %v1121, %v1131
    %v1142 = vmul.f32 %v1122, %v1131
    %v1143 = vmul.f32 %v1123, %v1131
    %v1144 = vmul.f32 %v1124, %v1131
    %v1145 = vmul.f32 %v1125, %v1131
    %v1146 = vmul.f32 %v1126, %v1131
    %v1147 = vmul.f32 %v1127, %v1131
    %v1148 = vmul.f32 %v1128, %v1131
    %v1149 = vmul.f32 %v1129, %v1131
    %v1150 = vadd.f32 %v1094, %v1132
    %v1151 = vadd.f32 %v1095, %v1133
    %v1152 = vadd.f32 %v1096, %v1134
    %v1153 = vadd.f32 %v1097, %v1135
    %v1154 = vadd.f32 %v1098, %v1136
    %v1155 = vadd.f32 %v1099, %v1137
    %v1156 = vadd.f32 %v1100, %v1138
    %v1157 = vadd.f32 %v1101, %v1139
    %v1158 = vadd.f32 %v1102, %v1140
    %v1159 = vadd.f32 %v1103, %v1141
    %v1160 = vadd.f32 %v1104, %v1142
    %v1161 = vadd.f32 %v1105, %v1143
    %v1162 = vadd.f32 %v1106, %v1144
    %v1163 = vadd.f32 %v1107, %v1145
    %v1164 = vadd.f32 %v1108, %v1146
    %v1165 = vadd.f32 %v1109, %v1147
    %v1166 = vadd.f32 %v1110, %v1148
    %v1167 = vadd.f32 %v1111, %v1149
    %v1168 = vld [vmem:[%s942 + $0x4] sm:$0xff]
    %v1169 = vld [vmem:[%s942 + $0xc] sm:$0x1]
    %v1170 = vld [vmem:[%s942 + $0x14] sm:$0xff]
    %v1171 = vld [vmem:[%s942 + $0x1c] sm:$0x1]
    %v1172 = vld [vmem:[%s942 + $0x24] sm:$0xff]
    %v1173 = vld [vmem:[%s942 + $0x2c] sm:$0x1]
    %v1174 = vld [vmem:[%s942 + $0x34] sm:$0xff]
    %v1175 = vld [vmem:[%s942 + $0x3c] sm:$0x1]
    %v1176 = vld [vmem:[%s942 + $0x44] sm:$0xff]
    %v1177 = vld [vmem:[%s942 + $0x4c] sm:$0x1]
    %v1178 = vld [vmem:[%s942 + $0x54] sm:$0xff]
    %v1179 = vld [vmem:[%s942 + $0x5c] sm:$0x1]
    %v1180 = vld [vmem:[%s942 + $0x64] sm:$0xff]
    %v1181 = vld [vmem:[%s942 + $0x6c] sm:$0x1]
    %v1182 = vld [vmem:[%s942 + $0x74] sm:$0xff]
    %v1183 = vld [vmem:[%s942 + $0x7c] sm:$0x1]
    %v1184 = vld [vmem:[%s942 + $0x84] sm:$0xff]
    %v1185 = vld [vmem:[%s942 + $0x8c] sm:$0x1]
    %v1186 = vld [vmem:[%s961 + $0x4] sm:$0x1]
    %v1187 = vperm.slane %v1186, 0
    %v1188 = vmul.f32 %v1168, %v1187
    %v1189 = vmul.f32 %v1169, %v1187
    %v1190 = vmul.f32 %v1170, %v1187
    %v1191 = vmul.f32 %v1171, %v1187
    %v1192 = vmul.f32 %v1172, %v1187
    %v1193 = vmul.f32 %v1173, %v1187
    %v1194 = vmul.f32 %v1174, %v1187
    %v1195 = vmul.f32 %v1175, %v1187
    %v1196 = vmul.f32 %v1176, %v1187
    %v1197 = vmul.f32 %v1177, %v1187
    %v1198 = vmul.f32 %v1178, %v1187
    %v1199 = vmul.f32 %v1179, %v1187
    %v1200 = vmul.f32 %v1180, %v1187
    %v1201 = vmul.f32 %v1181, %v1187
    %v1202 = vmul.f32 %v1182, %v1187
    %v1203 = vmul.f32 %v1183, %v1187
    %v1204 = vmul.f32 %v1184, %v1187
    %v1205 = vmul.f32 %v1185, %v1187
    %v1206 = vadd.f32 %v1150, %v1188
    %v1207 = vadd.f32 %v1151, %v1189
    %v1208 = vadd.f32 %v1152, %v1190
    %v1209 = vadd.f32 %v1153, %v1191
    %v1210 = vadd.f32 %v1154, %v1192
    %v1211 = vadd.f32 %v1155, %v1193
    %v1212 = vadd.f32 %v1156, %v1194
    %v1213 = vadd.f32 %v1157, %v1195
    %v1214 = vadd.f32 %v1158, %v1196
    %v1215 = vadd.f32 %v1159, %v1197
    %v1216 = vadd.f32 %v1160, %v1198
    %v1217 = vadd.f32 %v1161, %v1199
    %v1218 = vadd.f32 %v1162, %v1200
    %v1219 = vadd.f32 %v1163, %v1201
    %v1220 = vadd.f32 %v1164, %v1202
    %v1221 = vadd.f32 %v1165, %v1203
    %v1222 = vadd.f32 %v1166, %v1204
    %v1223 = vadd.f32 %v1167, %v1205
    %v1224 = vld [vmem:[%s942 + $0x5] sm:$0xff]
    %v1225 = vld [vmem:[%s942 + $0xd] sm:$0x1]
    %v1226 = vld [vmem:[%s942 + $0x15] sm:$0xff]
    %v1227 = vld [vmem:[%s942 + $0x1d] sm:$0x1]
    %v1228 = vld [vmem:[%s942 + $0x25] sm:$0xff]
    %v1229 = vld [vmem:[%s942 + $0x2d] sm:$0x1]
    %v1230 = vld [vmem:[%s942 + $0x35] sm:$0xff]
    %v1231 = vld [vmem:[%s942 + $0x3d] sm:$0x1]
    %v1232 = vld [vmem:[%s942 + $0x45] sm:$0xff]
    %v1233 = vld [vmem:[%s942 + $0x4d] sm:$0x1]
    %v1234 = vld [vmem:[%s942 + $0x55] sm:$0xff]
    %v1235 = vld [vmem:[%s942 + $0x5d] sm:$0x1]
    %v1236 = vld [vmem:[%s942 + $0x65] sm:$0xff]
    %v1237 = vld [vmem:[%s942 + $0x6d] sm:$0x1]
    %v1238 = vld [vmem:[%s942 + $0x75] sm:$0xff]
    %v1239 = vld [vmem:[%s942 + $0x7d] sm:$0x1]
    %v1240 = vld [vmem:[%s942 + $0x85] sm:$0xff]
    %v1241 = vld [vmem:[%s942 + $0x8d] sm:$0x1]
    %v1242 = vld [vmem:[%s961 + $0x5] sm:$0x1]
    %v1243 = vperm.slane %v1242, 0
    %v1244 = vmul.f32 %v1224, %v1243
    %v1245 = vmul.f32 %v1225, %v1243
    %v1246 = vmul.f32 %v1226, %v1243
    %v1247 = vmul.f32 %v1227, %v1243
    %v1248 = vmul.f32 %v1228, %v1243
    %v1249 = vmul.f32 %v1229, %v1243
    %v1250 = vmul.f32 %v1230, %v1243
    %v1251 = vmul.f32 %v1231, %v1243
    %v1252 = vmul.f32 %v1232, %v1243
    %v1253 = vmul.f32 %v1233, %v1243
    %v1254 = vmul.f32 %v1234, %v1243
    %v1255 = vmul.f32 %v1235, %v1243
    %v1256 = vmul.f32 %v1236, %v1243
    %v1257 = vmul.f32 %v1237, %v1243
    %v1258 = vmul.f32 %v1238, %v1243
    %v1259 = vmul.f32 %v1239, %v1243
    %v1260 = vmul.f32 %v1240, %v1243
    %v1261 = vmul.f32 %v1241, %v1243
    %v1262 = vadd.f32 %v1206, %v1244
    %v1263 = vadd.f32 %v1207, %v1245
    %v1264 = vadd.f32 %v1208, %v1246
    %v1265 = vadd.f32 %v1209, %v1247
    %v1266 = vadd.f32 %v1210, %v1248
    %v1267 = vadd.f32 %v1211, %v1249
    %v1268 = vadd.f32 %v1212, %v1250
    %v1269 = vadd.f32 %v1213, %v1251
    %v1270 = vadd.f32 %v1214, %v1252
    %v1271 = vadd.f32 %v1215, %v1253
    %v1272 = vadd.f32 %v1216, %v1254
    %v1273 = vadd.f32 %v1217, %v1255
    %v1274 = vadd.f32 %v1218, %v1256
    %v1275 = vadd.f32 %v1219, %v1257
    %v1276 = vadd.f32 %v1220, %v1258
    %v1277 = vadd.f32 %v1221, %v1259
    %v1278 = vadd.f32 %v1222, %v1260
    %v1279 = vadd.f32 %v1223, %v1261
    %v1280 = vld [vmem:[%s942 + $0x6] sm:$0xff]
    %v1281 = vld [vmem:[%s942 + $0xe] sm:$0x1]
    %v1282 = vld [vmem:[%s942 + $0x16] sm:$0xff]
    %v1283 = vld [vmem:[%s942 + $0x1e] sm:$0x1]
    %v1284 = vld [vmem:[%s942 + $0x26] sm:$0xff]
    %v1285 = vld [vmem:[%s942 + $0x2e] sm:$0x1]
    %v1286 = vld [vmem:[%s942 + $0x36] sm:$0xff]
    %v1287 = vld [vmem:[%s942 + $0x3e] sm:$0x1]
    %v1288 = vld [vmem:[%s942 + $0x46] sm:$0xff]
    %v1289 = vld [vmem:[%s942 + $0x4e] sm:$0x1]
    %v1290 = vld [vmem:[%s942 + $0x56] sm:$0xff]
    %v1291 = vld [vmem:[%s942 + $0x5e] sm:$0x1]
    %v1292 = vld [vmem:[%s942 + $0x66] sm:$0xff]
    %v1293 = vld [vmem:[%s942 + $0x6e] sm:$0x1]
    %v1294 = vld [vmem:[%s942 + $0x76] sm:$0xff]
    %v1295 = vld [vmem:[%s942 + $0x7e] sm:$0x1]
    %v1296 = vld [vmem:[%s942 + $0x86] sm:$0xff]
    %v1297 = vld [vmem:[%s942 + $0x8e] sm:$0x1]
    %v1298 = vld [vmem:[%s961 + $0x6] sm:$0x1]
    %v1299 = vperm.slane %v1298, 0
    %v1300 = vmul.f32 %v1280, %v1299
    %v1301 = vmul.f32 %v1281, %v1299
    %v1302 = vmul.f32 %v1282, %v1299
    %v1303 = vmul.f32 %v1283, %v1299
    %v1304 = vmul.f32 %v1284, %v1299
    %v1305 = vmul.f32 %v1285, %v1299
    %v1306 = vmul.f32 %v1286, %v1299
    %v1307 = vmul.f32 %v1287, %v1299
    %v1308 = vmul.f32 %v1288, %v1299
    %v1309 = vmul.f32 %v1289, %v1299
    %v1310 = vmul.f32 %v1290, %v1299
    %v1311 = vmul.f32 %v1291, %v1299
    %v1312 = vmul.f32 %v1292, %v1299
    %v1313 = vmul.f32 %v1293, %v1299
    %v1314 = vmul.f32 %v1294, %v1299
    %v1315 = vmul.f32 %v1295, %v1299
    %v1316 = vmul.f32 %v1296, %v1299
    %v1317 = vmul.f32 %v1297, %v1299
    %v1318 = vadd.f32 %v1262, %v1300
    %v1319 = vadd.f32 %v1263, %v1301
    %v1320 = vadd.f32 %v1264, %v1302
    %v1321 = vadd.f32 %v1265, %v1303
    %v1322 = vadd.f32 %v1266, %v1304
    %v1323 = vadd.f32 %v1267, %v1305
    %v1324 = vadd.f32 %v1268, %v1306
    %v1325 = vadd.f32 %v1269, %v1307
    %v1326 = vadd.f32 %v1270, %v1308
    %v1327 = vadd.f32 %v1271, %v1309
    %v1328 = vadd.f32 %v1272, %v1310
    %v1329 = vadd.f32 %v1273, %v1311
    %v1330 = vadd.f32 %v1274, %v1312
    %v1331 = vadd.f32 %v1275, %v1313
    %v1332 = vadd.f32 %v1276, %v1314
    %v1333 = vadd.f32 %v1277, %v1315
    %v1334 = vadd.f32 %v1278, %v1316
    %v1335 = vadd.f32 %v1279, %v1317
    %v1336 = vld [vmem:[%s942 + $0x7] sm:$0xff]
    %v1337 = vld [vmem:[%s942 + $0xf] sm:$0x1]
    %v1338 = vld [vmem:[%s942 + $0x17] sm:$0xff]
    %v1339 = vld [vmem:[%s942 + $0x1f] sm:$0x1]
    %v1340 = vld [vmem:[%s942 + $0x27] sm:$0xff]
    %v1341 = vld [vmem:[%s942 + $0x2f] sm:$0x1]
    %v1342 = vld [vmem:[%s942 + $0x37] sm:$0xff]
    %v1343 = vld [vmem:[%s942 + $0x3f] sm:$0x1]
    %v1344 = vld [vmem:[%s942 + $0x47] sm:$0xff]
    %v1345 = vld [vmem:[%s942 + $0x4f] sm:$0x1]
    %v1346 = vld [vmem:[%s942 + $0x57] sm:$0xff]
    %v1347 = vld [vmem:[%s942 + $0x5f] sm:$0x1]
    %v1348 = vld [vmem:[%s942 + $0x67] sm:$0xff]
    %v1349 = vld [vmem:[%s942 + $0x6f] sm:$0x1]
    %v1350 = vld [vmem:[%s942 + $0x77] sm:$0xff]
    %v1351 = vld [vmem:[%s942 + $0x7f] sm:$0x1]
    %v1352 = vld [vmem:[%s942 + $0x87] sm:$0xff]
    %v1353 = vld [vmem:[%s942 + $0x8f] sm:$0x1]
    %v1354 = vld [vmem:[%s961 + $0x7] sm:$0x1]
    %v1355 = vperm.slane %v1354, 0
    %v1356 = vmul.f32 %v1336, %v1355
    %v1357 = vmul.f32 %v1337, %v1355
    %v1358 = vmul.f32 %v1338, %v1355
    %v1359 = vmul.f32 %v1339, %v1355
    %v1360 = vmul.f32 %v1340, %v1355
    %v1361 = vmul.f32 %v1341, %v1355
    %v1362 = vmul.f32 %v1342, %v1355
    %v1363 = vmul.f32 %v1343, %v1355
    %v1364 = vmul.f32 %v1344, %v1355
    %v1365 = vmul.f32 %v1345, %v1355
    %v1366 = vmul.f32 %v1346, %v1355
    %v1367 = vmul.f32 %v1347, %v1355
    %v1368 = vmul.f32 %v1348, %v1355
    %v1369 = vmul.f32 %v1349, %v1355
    %v1370 = vmul.f32 %v1350, %v1355
    %v1371 = vmul.f32 %v1351, %v1355
    %v1372 = vmul.f32 %v1352, %v1355
    %v1373 = vmul.f32 %v1353, %v1355
    %v1374 = vadd.f32 %v1318, %v1356
    %v1375 = vadd.f32 %v1319, %v1357
    %v1376 = vadd.f32 %v1320, %v1358
    %v1377 = vadd.f32 %v1321, %v1359
    %v1378 = vadd.f32 %v1322, %v1360
    %v1379 = vadd.f32 %v1323, %v1361
    %v1380 = vadd.f32 %v1324, %v1362
    %v1381 = vadd.f32 %v1325, %v1363
    %v1382 = vadd.f32 %v1326, %v1364
    %v1383 = vadd.f32 %v1327, %v1365
    %v1384 = vadd.f32 %v1328, %v1366
    %v1385 = vadd.f32 %v1329, %v1367
    %v1386 = vadd.f32 %v1330, %v1368
    %v1387 = vadd.f32 %v1331, %v1369
    %v1388 = vadd.f32 %v1332, %v1370
    %v1389 = vadd.f32 %v1333, %v1371
    %v1390 = vadd.f32 %v1334, %v1372
    %v1391 = vadd.f32 %v1335, %v1373
    %s1392 = scalar_lea.vmem [#allocation2], 48
    %v1393 = vld [vmem:[%s1392] sm:$0xff]
    %v1394 = vld [vmem:[%s1392 + $0x8] sm:$0x1]
    %v1395 = vld [vmem:[%s1392 + $0x10] sm:$0xff]
    %v1396 = vld [vmem:[%s1392 + $0x18] sm:$0x1]
    %v1397 = vld [vmem:[%s1392 + $0x20] sm:$0xff]
    %v1398 = vld [vmem:[%s1392 + $0x28] sm:$0x1]
    %v1399 = vld [vmem:[%s1392 + $0x30] sm:$0xff]
    %v1400 = vld [vmem:[%s1392 + $0x38] sm:$0x1]
    %v1401 = vld [vmem:[%s1392 + $0x40] sm:$0xff]
    %v1402 = vld [vmem:[%s1392 + $0x48] sm:$0x1]
    %v1403 = vld [vmem:[%s1392 + $0x50] sm:$0xff]
    %v1404 = vld [vmem:[%s1392 + $0x58] sm:$0x1]
    %v1405 = vld [vmem:[%s1392 + $0x60] sm:$0xff]
    %v1406 = vld [vmem:[%s1392 + $0x68] sm:$0x1]
    %v1407 = vld [vmem:[%s1392 + $0x70] sm:$0xff]
    %v1408 = vld [vmem:[%s1392 + $0x78] sm:$0x1]
    %v1409 = vld [vmem:[%s1392 + $0x80] sm:$0xff]
    %v1410 = vld [vmem:[%s1392 + $0x88] sm:$0x1]
    %s1411 = scalar_lea.vmem [#allocation5], 24
    %v1412 = vld [vmem:[%s1411] sm:$0x1]
    %v1413 = vperm.slane %v1412, 0
    %v1414 = vmul.f32 %v1393, %v1413
    %v1415 = vmul.f32 %v1394, %v1413
    %v1416 = vmul.f32 %v1395, %v1413
    %v1417 = vmul.f32 %v1396, %v1413
    %v1418 = vmul.f32 %v1397, %v1413
    %v1419 = vmul.f32 %v1398, %v1413
    %v1420 = vmul.f32 %v1399, %v1413
    %v1421 = vmul.f32 %v1400, %v1413
    %v1422 = vmul.f32 %v1401, %v1413
    %v1423 = vmul.f32 %v1402, %v1413
    %v1424 = vmul.f32 %v1403, %v1413
    %v1425 = vmul.f32 %v1404, %v1413
    %v1426 = vmul.f32 %v1405, %v1413
    %v1427 = vmul.f32 %v1406, %v1413
    %v1428 = vmul.f32 %v1407, %v1413
    %v1429 = vmul.f32 %v1408, %v1413
    %v1430 = vmul.f32 %v1409, %v1413
    %v1431 = vmul.f32 %v1410, %v1413
    %v1432 = vadd.f32 %v1374, %v1414
    %v1433 = vadd.f32 %v1375, %v1415
    %v1434 = vadd.f32 %v1376, %v1416
    %v1435 = vadd.f32 %v1377, %v1417
    %v1436 = vadd.f32 %v1378, %v1418
    %v1437 = vadd.f32 %v1379, %v1419
    %v1438 = vadd.f32 %v1380, %v1420
    %v1439 = vadd.f32 %v1381, %v1421
    %v1440 = vadd.f32 %v1382, %v1422
    %v1441 = vadd.f32 %v1383, %v1423
    %v1442 = vadd.f32 %v1384, %v1424
    %v1443 = vadd.f32 %v1385, %v1425
    %v1444 = vadd.f32 %v1386, %v1426
    %v1445 = vadd.f32 %v1387, %v1427
    %v1446 = vadd.f32 %v1388, %v1428
    %v1447 = vadd.f32 %v1389, %v1429
    %v1448 = vadd.f32 %v1390, %v1430
    %v1449 = vadd.f32 %v1391, %v1431
    %v1450 = vld [vmem:[%s1392 + $0x1] sm:$0xff]
    %v1451 = vld [vmem:[%s1392 + $0x9] sm:$0x1]
    %v1452 = vld [vmem:[%s1392 + $0x11] sm:$0xff]
    %v1453 = vld [vmem:[%s1392 + $0x19] sm:$0x1]
    %v1454 = vld [vmem:[%s1392 + $0x21] sm:$0xff]
    %v1455 = vld [vmem:[%s1392 + $0x29] sm:$0x1]
    %v1456 = vld [vmem:[%s1392 + $0x31] sm:$0xff]
    %v1457 = vld [vmem:[%s1392 + $0x39] sm:$0x1]
    %v1458 = vld [vmem:[%s1392 + $0x41] sm:$0xff]
    %v1459 = vld [vmem:[%s1392 + $0x49] sm:$0x1]
    %v1460 = vld [vmem:[%s1392 + $0x51] sm:$0xff]
    %v1461 = vld [vmem:[%s1392 + $0x59] sm:$0x1]
    %v1462 = vld [vmem:[%s1392 + $0x61] sm:$0xff]
    %v1463 = vld [vmem:[%s1392 + $0x69] sm:$0x1]
    %v1464 = vld [vmem:[%s1392 + $0x71] sm:$0xff]
    %v1465 = vld [vmem:[%s1392 + $0x79] sm:$0x1]
    %v1466 = vld [vmem:[%s1392 + $0x81] sm:$0xff]
    %v1467 = vld [vmem:[%s1392 + $0x89] sm:$0x1]
    %v1468 = vld [vmem:[%s1411 + $0x1] sm:$0x1]
    %v1469 = vperm.slane %v1468, 0
    %v1470 = vmul.f32 %v1450, %v1469
    %v1471 = vmul.f32 %v1451, %v1469
    %v1472 = vmul.f32 %v1452, %v1469
    %v1473 = vmul.f32 %v1453, %v1469
    %v1474 = vmul.f32 %v1454, %v1469
    %v1475 = vmul.f32 %v1455, %v1469
    %v1476 = vmul.f32 %v1456, %v1469
    %v1477 = vmul.f32 %v1457, %v1469
    %v1478 = vmul.f32 %v1458, %v1469
    %v1479 = vmul.f32 %v1459, %v1469
    %v1480 = vmul.f32 %v1460, %v1469
    %v1481 = vmul.f32 %v1461, %v1469
    %v1482 = vmul.f32 %v1462, %v1469
    %v1483 = vmul.f32 %v1463, %v1469
    %v1484 = vmul.f32 %v1464, %v1469
    %v1485 = vmul.f32 %v1465, %v1469
    %v1486 = vmul.f32 %v1466, %v1469
    %v1487 = vmul.f32 %v1467, %v1469
    %v1488 = vadd.f32 %v1432, %v1470
    %v1489 = vadd.f32 %v1433, %v1471
    %v1490 = vadd.f32 %v1434, %v1472
    %v1491 = vadd.f32 %v1435, %v1473
    %v1492 = vadd.f32 %v1436, %v1474
    %v1493 = vadd.f32 %v1437, %v1475
    %v1494 = vadd.f32 %v1438, %v1476
    %v1495 = vadd.f32 %v1439, %v1477
    %v1496 = vadd.f32 %v1440, %v1478
    %v1497 = vadd.f32 %v1441, %v1479
    %v1498 = vadd.f32 %v1442, %v1480
    %v1499 = vadd.f32 %v1443, %v1481
    %v1500 = vadd.f32 %v1444, %v1482
    %v1501 = vadd.f32 %v1445, %v1483
    %v1502 = vadd.f32 %v1446, %v1484
    %v1503 = vadd.f32 %v1447, %v1485
    %v1504 = vadd.f32 %v1448, %v1486
    %v1505 = vadd.f32 %v1449, %v1487
    %v1506 = vld [vmem:[%s1392 + $0x2] sm:$0xff]
    %v1507 = vld [vmem:[%s1392 + $0xa] sm:$0x1]
    %v1508 = vld [vmem:[%s1392 + $0x12] sm:$0xff]
    %v1509 = vld [vmem:[%s1392 + $0x1a] sm:$0x1]
    %v1510 = vld [vmem:[%s1392 + $0x22] sm:$0xff]
    %v1511 = vld [vmem:[%s1392 + $0x2a] sm:$0x1]
    %v1512 = vld [vmem:[%s1392 + $0x32] sm:$0xff]
    %v1513 = vld [vmem:[%s1392 + $0x3a] sm:$0x1]
    %v1514 = vld [vmem:[%s1392 + $0x42] sm:$0xff]
    %v1515 = vld [vmem:[%s1392 + $0x4a] sm:$0x1]
    %v1516 = vld [vmem:[%s1392 + $0x52] sm:$0xff]
    %v1517 = vld [vmem:[%s1392 + $0x5a] sm:$0x1]
    %v1518 = vld [vmem:[%s1392 + $0x62] sm:$0xff]
    %v1519 = vld [vmem:[%s1392 + $0x6a] sm:$0x1]
    %v1520 = vld [vmem:[%s1392 + $0x72] sm:$0xff]
    %v1521 = vld [vmem:[%s1392 + $0x7a] sm:$0x1]
    %v1522 = vld [vmem:[%s1392 + $0x82] sm:$0xff]
    %v1523 = vld [vmem:[%s1392 + $0x8a] sm:$0x1]
    %v1524 = vld [vmem:[%s1411 + $0x2] sm:$0x1]
    %v1525 = vperm.slane %v1524, 0
    %v1526 = vmul.f32 %v1506, %v1525
    %v1527 = vmul.f32 %v1507, %v1525
    %v1528 = vmul.f32 %v1508, %v1525
    %v1529 = vmul.f32 %v1509, %v1525
    %v1530 = vmul.f32 %v1510, %v1525
    %v1531 = vmul.f32 %v1511, %v1525
    %v1532 = vmul.f32 %v1512, %v1525
    %v1533 = vmul.f32 %v1513, %v1525
    %v1534 = vmul.f32 %v1514, %v1525
    %v1535 = vmul.f32 %v1515, %v1525
    %v1536 = vmul.f32 %v1516, %v1525
    %v1537 = vmul.f32 %v1517, %v1525
    %v1538 = vmul.f32 %v1518, %v1525
    %v1539 = vmul.f32 %v1519, %v1525
    %v1540 = vmul.f32 %v1520, %v1525
    %v1541 = vmul.f32 %v1521, %v1525
    %v1542 = vmul.f32 %v1522, %v1525
    %v1543 = vmul.f32 %v1523, %v1525
    %v1544 = vadd.f32 %v1488, %v1526
    %v1545 = vadd.f32 %v1489, %v1527
    %v1546 = vadd.f32 %v1490, %v1528
    %v1547 = vadd.f32 %v1491, %v1529
    %v1548 = vadd.f32 %v1492, %v1530
    %v1549 = vadd.f32 %v1493, %v1531
    %v1550 = vadd.f32 %v1494, %v1532
    %v1551 = vadd.f32 %v1495, %v1533
    %v1552 = vadd.f32 %v1496, %v1534
    %v1553 = vadd.f32 %v1497, %v1535
    %v1554 = vadd.f32 %v1498, %v1536
    %v1555 = vadd.f32 %v1499, %v1537
    %v1556 = vadd.f32 %v1500, %v1538
    %v1557 = vadd.f32 %v1501, %v1539
    %v1558 = vadd.f32 %v1502, %v1540
    %v1559 = vadd.f32 %v1503, %v1541
    %v1560 = vadd.f32 %v1504, %v1542
    %v1561 = vadd.f32 %v1505, %v1543
    %v1562 = vld [vmem:[%s1392 + $0x3] sm:$0xff]
    %v1563 = vld [vmem:[%s1392 + $0xb] sm:$0x1]
    %v1564 = vld [vmem:[%s1392 + $0x13] sm:$0xff]
    %v1565 = vld [vmem:[%s1392 + $0x1b] sm:$0x1]
    %v1566 = vld [vmem:[%s1392 + $0x23] sm:$0xff]
    %v1567 = vld [vmem:[%s1392 + $0x2b] sm:$0x1]
    %v1568 = vld [vmem:[%s1392 + $0x33] sm:$0xff]
    %v1569 = vld [vmem:[%s1392 + $0x3b] sm:$0x1]
    %v1570 = vld [vmem:[%s1392 + $0x43] sm:$0xff]
    %v1571 = vld [vmem:[%s1392 + $0x4b] sm:$0x1]
    %v1572 = vld [vmem:[%s1392 + $0x53] sm:$0xff]
    %v1573 = vld [vmem:[%s1392 + $0x5b] sm:$0x1]
    %v1574 = vld [vmem:[%s1392 + $0x63] sm:$0xff]
    %v1575 = vld [vmem:[%s1392 + $0x6b] sm:$0x1]
    %v1576 = vld [vmem:[%s1392 + $0x73] sm:$0xff]
    %v1577 = vld [vmem:[%s1392 + $0x7b] sm:$0x1]
    %v1578 = vld [vmem:[%s1392 + $0x83] sm:$0xff]
    %v1579 = vld [vmem:[%s1392 + $0x8b] sm:$0x1]
    %v1580 = vld [vmem:[%s1411 + $0x3] sm:$0x1]
    %v1581 = vperm.slane %v1580, 0
    %v1582 = vmul.f32 %v1562, %v1581
    %v1583 = vmul.f32 %v1563, %v1581
    %v1584 = vmul.f32 %v1564, %v1581
    %v1585 = vmul.f32 %v1565, %v1581
    %v1586 = vmul.f32 %v1566, %v1581
    %v1587 = vmul.f32 %v1567, %v1581
    %v1588 = vmul.f32 %v1568, %v1581
    %v1589 = vmul.f32 %v1569, %v1581
    %v1590 = vmul.f32 %v1570, %v1581
    %v1591 = vmul.f32 %v1571, %v1581
    %v1592 = vmul.f32 %v1572, %v1581
    %v1593 = vmul.f32 %v1573, %v1581
    %v1594 = vmul.f32 %v1574, %v1581
    %v1595 = vmul.f32 %v1575, %v1581
    %v1596 = vmul.f32 %v1576, %v1581
    %v1597 = vmul.f32 %v1577, %v1581
    %v1598 = vmul.f32 %v1578, %v1581
    %v1599 = vmul.f32 %v1579, %v1581
    %v1600 = vadd.f32 %v1544, %v1582
    %v1601 = vadd.f32 %v1545, %v1583
    %v1602 = vadd.f32 %v1546, %v1584
    %v1603 = vadd.f32 %v1547, %v1585
    %v1604 = vadd.f32 %v1548, %v1586
    %v1605 = vadd.f32 %v1549, %v1587
    %v1606 = vadd.f32 %v1550, %v1588
    %v1607 = vadd.f32 %v1551, %v1589
    %v1608 = vadd.f32 %v1552, %v1590
    %v1609 = vadd.f32 %v1553, %v1591
    %v1610 = vadd.f32 %v1554, %v1592
    %v1611 = vadd.f32 %v1555, %v1593
    %v1612 = vadd.f32 %v1556, %v1594
    %v1613 = vadd.f32 %v1557, %v1595
    %v1614 = vadd.f32 %v1558, %v1596
    %v1615 = vadd.f32 %v1559, %v1597
    %v1616 = vadd.f32 %v1560, %v1598
    %v1617 = vadd.f32 %v1561, %v1599
    %v1618 = vld [vmem:[%s1392 + $0x4] sm:$0xff]
    %v1619 = vld [vmem:[%s1392 + $0xc] sm:$0x1]
    %v1620 = vld [vmem:[%s1392 + $0x14] sm:$0xff]
    %v1621 = vld [vmem:[%s1392 + $0x1c] sm:$0x1]
    %v1622 = vld [vmem:[%s1392 + $0x24] sm:$0xff]
    %v1623 = vld [vmem:[%s1392 + $0x2c] sm:$0x1]
    %v1624 = vld [vmem:[%s1392 + $0x34] sm:$0xff]
    %v1625 = vld [vmem:[%s1392 + $0x3c] sm:$0x1]
    %v1626 = vld [vmem:[%s1392 + $0x44] sm:$0xff]
    %v1627 = vld [vmem:[%s1392 + $0x4c] sm:$0x1]
    %v1628 = vld [vmem:[%s1392 + $0x54] sm:$0xff]
    %v1629 = vld [vmem:[%s1392 + $0x5c] sm:$0x1]
    %v1630 = vld [vmem:[%s1392 + $0x64] sm:$0xff]
    %v1631 = vld [vmem:[%s1392 + $0x6c] sm:$0x1]
    %v1632 = vld [vmem:[%s1392 + $0x74] sm:$0xff]
    %v1633 = vld [vmem:[%s1392 + $0x7c] sm:$0x1]
    %v1634 = vld [vmem:[%s1392 + $0x84] sm:$0xff]
    %v1635 = vld [vmem:[%s1392 + $0x8c] sm:$0x1]
    %v1636 = vld [vmem:[%s1411 + $0x4] sm:$0x1]
    %v1637 = vperm.slane %v1636, 0
    %v1638 = vmul.f32 %v1618, %v1637
    %v1639 = vmul.f32 %v1619, %v1637
    %v1640 = vmul.f32 %v1620, %v1637
    %v1641 = vmul.f32 %v1621, %v1637
    %v1642 = vmul.f32 %v1622, %v1637
    %v1643 = vmul.f32 %v1623, %v1637
    %v1644 = vmul.f32 %v1624, %v1637
    %v1645 = vmul.f32 %v1625, %v1637
    %v1646 = vmul.f32 %v1626, %v1637
    %v1647 = vmul.f32 %v1627, %v1637
    %v1648 = vmul.f32 %v1628, %v1637
    %v1649 = vmul.f32 %v1629, %v1637
    %v1650 = vmul.f32 %v1630, %v1637
    %v1651 = vmul.f32 %v1631, %v1637
    %v1652 = vmul.f32 %v1632, %v1637
    %v1653 = vmul.f32 %v1633, %v1637
    %v1654 = vmul.f32 %v1634, %v1637
    %v1655 = vmul.f32 %v1635, %v1637
    %v1656 = vadd.f32 %v1600, %v1638
    %v1657 = vadd.f32 %v1601, %v1639
    %v1658 = vadd.f32 %v1602, %v1640
    %v1659 = vadd.f32 %v1603, %v1641
    %v1660 = vadd.f32 %v1604, %v1642
    %v1661 = vadd.f32 %v1605, %v1643
    %v1662 = vadd.f32 %v1606, %v1644
    %v1663 = vadd.f32 %v1607, %v1645
    %v1664 = vadd.f32 %v1608, %v1646
    %v1665 = vadd.f32 %v1609, %v1647
    %v1666 = vadd.f32 %v1610, %v1648
    %v1667 = vadd.f32 %v1611, %v1649
    %v1668 = vadd.f32 %v1612, %v1650
    %v1669 = vadd.f32 %v1613, %v1651
    %v1670 = vadd.f32 %v1614, %v1652
    %v1671 = vadd.f32 %v1615, %v1653
    %v1672 = vadd.f32 %v1616, %v1654
    %v1673 = vadd.f32 %v1617, %v1655
    %v1674 = vld [vmem:[%s1392 + $0x5] sm:$0xff]
    %v1675 = vld [vmem:[%s1392 + $0xd] sm:$0x1]
    %v1676 = vld [vmem:[%s1392 + $0x15] sm:$0xff]
    %v1677 = vld [vmem:[%s1392 + $0x1d] sm:$0x1]
    %v1678 = vld [vmem:[%s1392 + $0x25] sm:$0xff]
    %v1679 = vld [vmem:[%s1392 + $0x2d] sm:$0x1]
    %v1680 = vld [vmem:[%s1392 + $0x35] sm:$0xff]
    %v1681 = vld [vmem:[%s1392 + $0x3d] sm:$0x1]
    %v1682 = vld [vmem:[%s1392 + $0x45] sm:$0xff]
    %v1683 = vld [vmem:[%s1392 + $0x4d] sm:$0x1]
    %v1684 = vld [vmem:[%s1392 + $0x55] sm:$0xff]
    %v1685 = vld [vmem:[%s1392 + $0x5d] sm:$0x1]
    %v1686 = vld [vmem:[%s1392 + $0x65] sm:$0xff]
    %v1687 = vld [vmem:[%s1392 + $0x6d] sm:$0x1]
    %v1688 = vld [vmem:[%s1392 + $0x75] sm:$0xff]
    %v1689 = vld [vmem:[%s1392 + $0x7d] sm:$0x1]
    %v1690 = vld [vmem:[%s1392 + $0x85] sm:$0xff]
    %v1691 = vld [vmem:[%s1392 + $0x8d] sm:$0x1]
    %v1692 = vld [vmem:[%s1411 + $0x5] sm:$0x1]
    %v1693 = vperm.slane %v1692, 0
    %v1694 = vmul.f32 %v1674, %v1693
    %v1695 = vmul.f32 %v1675, %v1693
    %v1696 = vmul.f32 %v1676, %v1693
    %v1697 = vmul.f32 %v1677, %v1693
    %v1698 = vmul.f32 %v1678, %v1693
    %v1699 = vmul.f32 %v1679, %v1693
    %v1700 = vmul.f32 %v1680, %v1693
    %v1701 = vmul.f32 %v1681, %v1693
    %v1702 = vmul.f32 %v1682, %v1693
    %v1703 = vmul.f32 %v1683, %v1693
    %v1704 = vmul.f32 %v1684, %v1693
    %v1705 = vmul.f32 %v1685, %v1693
    %v1706 = vmul.f32 %v1686, %v1693
    %v1707 = vmul.f32 %v1687, %v1693
    %v1708 = vmul.f32 %v1688, %v1693
    %v1709 = vmul.f32 %v1689, %v1693
    %v1710 = vmul.f32 %v1690, %v1693
    %v1711 = vmul.f32 %v1691, %v1693
    %v1712 = vadd.f32 %v1656, %v1694
    %v1713 = vadd.f32 %v1657, %v1695
    %v1714 = vadd.f32 %v1658, %v1696
    %v1715 = vadd.f32 %v1659, %v1697
    %v1716 = vadd.f32 %v1660, %v1698
    %v1717 = vadd.f32 %v1661, %v1699
    %v1718 = vadd.f32 %v1662, %v1700
    %v1719 = vadd.f32 %v1663, %v1701
    %v1720 = vadd.f32 %v1664, %v1702
    %v1721 = vadd.f32 %v1665, %v1703
    %v1722 = vadd.f32 %v1666, %v1704
    %v1723 = vadd.f32 %v1667, %v1705
    %v1724 = vadd.f32 %v1668, %v1706
    %v1725 = vadd.f32 %v1669, %v1707
    %v1726 = vadd.f32 %v1670, %v1708
    %v1727 = vadd.f32 %v1671, %v1709
    %v1728 = vadd.f32 %v1672, %v1710
    %v1729 = vadd.f32 %v1673, %v1711
    %v1730 = vld [vmem:[%s1392 + $0x6] sm:$0xff]
    %v1731 = vld [vmem:[%s1392 + $0xe] sm:$0x1]
    %v1732 = vld [vmem:[%s1392 + $0x16] sm:$0xff]
    %v1733 = vld [vmem:[%s1392 + $0x1e] sm:$0x1]
    %v1734 = vld [vmem:[%s1392 + $0x26] sm:$0xff]
    %v1735 = vld [vmem:[%s1392 + $0x2e] sm:$0x1]
    %v1736 = vld [vmem:[%s1392 + $0x36] sm:$0xff]
    %v1737 = vld [vmem:[%s1392 + $0x3e] sm:$0x1]
    %v1738 = vld [vmem:[%s1392 + $0x46] sm:$0xff]
    %v1739 = vld [vmem:[%s1392 + $0x4e] sm:$0x1]
    %v1740 = vld [vmem:[%s1392 + $0x56] sm:$0xff]
    %v1741 = vld [vmem:[%s1392 + $0x5e] sm:$0x1]
    %v1742 = vld [vmem:[%s1392 + $0x66] sm:$0xff]
    %v1743 = vld [vmem:[%s1392 + $0x6e] sm:$0x1]
    %v1744 = vld [vmem:[%s1392 + $0x76] sm:$0xff]
    %v1745 = vld [vmem:[%s1392 + $0x7e] sm:$0x1]
    %v1746 = vld [vmem:[%s1392 + $0x86] sm:$0xff]
    %v1747 = vld [vmem:[%s1392 + $0x8e] sm:$0x1]
    %v1748 = vld [vmem:[%s1411 + $0x6] sm:$0x1]
    %v1749 = vperm.slane %v1748, 0
    %v1750 = vmul.f32 %v1730, %v1749
    %v1751 = vmul.f32 %v1731, %v1749
    %v1752 = vmul.f32 %v1732, %v1749
    %v1753 = vmul.f32 %v1733, %v1749
    %v1754 = vmul.f32 %v1734, %v1749
    %v1755 = vmul.f32 %v1735, %v1749
    %v1756 = vmul.f32 %v1736, %v1749
    %v1757 = vmul.f32 %v1737, %v1749
    %v1758 = vmul.f32 %v1738, %v1749
    %v1759 = vmul.f32 %v1739, %v1749
    %v1760 = vmul.f32 %v1740, %v1749
    %v1761 = vmul.f32 %v1741, %v1749
    %v1762 = vmul.f32 %v1742, %v1749
    %v1763 = vmul.f32 %v1743, %v1749
    %v1764 = vmul.f32 %v1744, %v1749
    %v1765 = vmul.f32 %v1745, %v1749
    %v1766 = vmul.f32 %v1746, %v1749
    %v1767 = vmul.f32 %v1747, %v1749
    %v1768 = vadd.f32 %v1712, %v1750
    %v1769 = vadd.f32 %v1713, %v1751
    %v1770 = vadd.f32 %v1714, %v1752
    %v1771 = vadd.f32 %v1715, %v1753
    %v1772 = vadd.f32 %v1716, %v1754
    %v1773 = vadd.f32 %v1717, %v1755
    %v1774 = vadd.f32 %v1718, %v1756
    %v1775 = vadd.f32 %v1719, %v1757
    %v1776 = vadd.f32 %v1720, %v1758
    %v1777 = vadd.f32 %v1721, %v1759
    %v1778 = vadd.f32 %v1722, %v1760
    %v1779 = vadd.f32 %v1723, %v1761
    %v1780 = vadd.f32 %v1724, %v1762
    %v1781 = vadd.f32 %v1725, %v1763
    %v1782 = vadd.f32 %v1726, %v1764
    %v1783 = vadd.f32 %v1727, %v1765
    %v1784 = vadd.f32 %v1728, %v1766
    %v1785 = vadd.f32 %v1729, %v1767
    %v1786 = vld [vmem:[%s1392 + $0x7] sm:$0xff]
    %v1787 = vld [vmem:[%s1392 + $0xf] sm:$0x1]
    %v1788 = vld [vmem:[%s1392 + $0x17] sm:$0xff]
    %v1789 = vld [vmem:[%s1392 + $0x1f] sm:$0x1]
    %v1790 = vld [vmem:[%s1392 + $0x27] sm:$0xff]
    %v1791 = vld [vmem:[%s1392 + $0x2f] sm:$0x1]
    %v1792 = vld [vmem:[%s1392 + $0x37] sm:$0xff]
    %v1793 = vld [vmem:[%s1392 + $0x3f] sm:$0x1]
    %v1794 = vld [vmem:[%s1392 + $0x47] sm:$0xff]
    %v1795 = vld [vmem:[%s1392 + $0x4f] sm:$0x1]
    %v1796 = vld [vmem:[%s1392 + $0x57] sm:$0xff]
    %v1797 = vld [vmem:[%s1392 + $0x5f] sm:$0x1]
    %v1798 = vld [vmem:[%s1392 + $0x67] sm:$0xff]
    %v1799 = vld [vmem:[%s1392 + $0x6f] sm:$0x1]
    %v1800 = vld [vmem:[%s1392 + $0x77] sm:$0xff]
    %v1801 = vld [vmem:[%s1392 + $0x7f] sm:$0x1]
    %v1802 = vld [vmem:[%s1392 + $0x87] sm:$0xff]
    %v1803 = vld [vmem:[%s1392 + $0x8f] sm:$0x1]
    %v1804 = vld [vmem:[%s1411 + $0x7] sm:$0x1]
    %v1805 = vperm.slane %v1804, 0
    %v1806 = vmul.f32 %v1786, %v1805
    %v1807 = vmul.f32 %v1787, %v1805
    %v1808 = vmul.f32 %v1788, %v1805
    %v1809 = vmul.f32 %v1789, %v1805
    %v1810 = vmul.f32 %v1790, %v1805
    %v1811 = vmul.f32 %v1791, %v1805
    %v1812 = vmul.f32 %v1792, %v1805
    %v1813 = vmul.f32 %v1793, %v1805
    %v1814 = vmul.f32 %v1794, %v1805
    %v1815 = vmul.f32 %v1795, %v1805
    %v1816 = vmul.f32 %v1796, %v1805
    %v1817 = vmul.f32 %v1797, %v1805
    %v1818 = vmul.f32 %v1798, %v1805
    %v1819 = vmul.f32 %v1799, %v1805
    %v1820 = vmul.f32 %v1800, %v1805
    %v1821 = vmul.f32 %v1801, %v1805
    %v1822 = vmul.f32 %v1802, %v1805
    %v1823 = vmul.f32 %v1803, %v1805
    %v1824 = vadd.f32 %v1768, %v1806
    %v1825 = vadd.f32 %v1769, %v1807
    %v1826 = vadd.f32 %v1770, %v1808
    %v1827 = vadd.f32 %v1771, %v1809
    %v1828 = vadd.f32 %v1772, %v1810
    %v1829 = vadd.f32 %v1773, %v1811
    %v1830 = vadd.f32 %v1774, %v1812
    %v1831 = vadd.f32 %v1775, %v1813
    %v1832 = vadd.f32 %v1776, %v1814
    %v1833 = vadd.f32 %v1777, %v1815
    %v1834 = vadd.f32 %v1778, %v1816
    %v1835 = vadd.f32 %v1779, %v1817
    %v1836 = vadd.f32 %v1780, %v1818
    %v1837 = vadd.f32 %v1781, %v1819
    %v1838 = vadd.f32 %v1782, %v1820
    %v1839 = vadd.f32 %v1783, %v1821
    %v1840 = vadd.f32 %v1784, %v1822
    %v1841 = vadd.f32 %v1785, %v1823
    %s1842 = scalar_lea.vmem [#allocation2], 64
    %v1843 = vld [vmem:[%s1842] sm:$0xff]
    %v1844 = vld [vmem:[%s1842 + $0x8] sm:$0x1]
    %v1845 = vld [vmem:[%s1842 + $0x10] sm:$0xff]
    %v1846 = vld [vmem:[%s1842 + $0x18] sm:$0x1]
    %v1847 = vld [vmem:[%s1842 + $0x20] sm:$0xff]
    %v1848 = vld [vmem:[%s1842 + $0x28] sm:$0x1]
    %v1849 = vld [vmem:[%s1842 + $0x30] sm:$0xff]
    %v1850 = vld [vmem:[%s1842 + $0x38] sm:$0x1]
    %v1851 = vld [vmem:[%s1842 + $0x40] sm:$0xff]
    %v1852 = vld [vmem:[%s1842 + $0x48] sm:$0x1]
    %v1853 = vld [vmem:[%s1842 + $0x50] sm:$0xff]
    %v1854 = vld [vmem:[%s1842 + $0x58] sm:$0x1]
    %v1855 = vld [vmem:[%s1842 + $0x60] sm:$0xff]
    %v1856 = vld [vmem:[%s1842 + $0x68] sm:$0x1]
    %v1857 = vld [vmem:[%s1842 + $0x70] sm:$0xff]
    %v1858 = vld [vmem:[%s1842 + $0x78] sm:$0x1]
    %v1859 = vld [vmem:[%s1842 + $0x80] sm:$0xff]
    %v1860 = vld [vmem:[%s1842 + $0x88] sm:$0x1]
    %s1861 = scalar_lea.vmem [#allocation5], 32
    %v1862 = vld [vmem:[%s1861] sm:$0x1]
    %v1863 = vperm.slane %v1862, 0
    %v1864 = vmul.f32 %v1843, %v1863
    %v1865 = vmul.f32 %v1844, %v1863
    %v1866 = vmul.f32 %v1845, %v1863
    %v1867 = vmul.f32 %v1846, %v1863
    %v1868 = vmul.f32 %v1847, %v1863
    %v1869 = vmul.f32 %v1848, %v1863
    %v1870 = vmul.f32 %v1849, %v1863
    %v1871 = vmul.f32 %v1850, %v1863
    %v1872 = vmul.f32 %v1851, %v1863
    %v1873 = vmul.f32 %v1852, %v1863
    %v1874 = vmul.f32 %v1853, %v1863
    %v1875 = vmul.f32 %v1854, %v1863
    %v1876 = vmul.f32 %v1855, %v1863
    %v1877 = vmul.f32 %v1856, %v1863
    %v1878 = vmul.f32 %v1857, %v1863
    %v1879 = vmul.f32 %v1858, %v1863
    %v1880 = vmul.f32 %v1859, %v1863
    %v1881 = vmul.f32 %v1860, %v1863
    %v1882 = vadd.f32 %v1824, %v1864
    %v1883 = vadd.f32 %v1825, %v1865
    %v1884 = vadd.f32 %v1826, %v1866
    %v1885 = vadd.f32 %v1827, %v1867
    %v1886 = vadd.f32 %v1828, %v1868
    %v1887 = vadd.f32 %v1829, %v1869
    %v1888 = vadd.f32 %v1830, %v1870
    %v1889 = vadd.f32 %v1831, %v1871
    %v1890 = vadd.f32 %v1832, %v1872
    %v1891 = vadd.f32 %v1833, %v1873
    %v1892 = vadd.f32 %v1834, %v1874
    %v1893 = vadd.f32 %v1835, %v1875
    %v1894 = vadd.f32 %v1836, %v1876
    %v1895 = vadd.f32 %v1837, %v1877
    %v1896 = vadd.f32 %v1838, %v1878
    %v1897 = vadd.f32 %v1839, %v1879
    %v1898 = vadd.f32 %v1840, %v1880
    %v1899 = vadd.f32 %v1841, %v1881
    %v1900 = vld [vmem:[%s1842 + $0x1] sm:$0xff]
    %v1901 = vld [vmem:[%s1842 + $0x9] sm:$0x1]
    %v1902 = vld [vmem:[%s1842 + $0x11] sm:$0xff]
    %v1903 = vld [vmem:[%s1842 + $0x19] sm:$0x1]
    %v1904 = vld [vmem:[%s1842 + $0x21] sm:$0xff]
    %v1905 = vld [vmem:[%s1842 + $0x29] sm:$0x1]
    %v1906 = vld [vmem:[%s1842 + $0x31] sm:$0xff]
    %v1907 = vld [vmem:[%s1842 + $0x39] sm:$0x1]
    %v1908 = vld [vmem:[%s1842 + $0x41] sm:$0xff]
    %v1909 = vld [vmem:[%s1842 + $0x49] sm:$0x1]
    %v1910 = vld [vmem:[%s1842 + $0x51] sm:$0xff]
    %v1911 = vld [vmem:[%s1842 + $0x59] sm:$0x1]
    %v1912 = vld [vmem:[%s1842 + $0x61] sm:$0xff]
    %v1913 = vld [vmem:[%s1842 + $0x69] sm:$0x1]
    %v1914 = vld [vmem:[%s1842 + $0x71] sm:$0xff]
    %v1915 = vld [vmem:[%s1842 + $0x79] sm:$0x1]
    %v1916 = vld [vmem:[%s1842 + $0x81] sm:$0xff]
    %v1917 = vld [vmem:[%s1842 + $0x89] sm:$0x1]
    %v1918 = vld [vmem:[%s1861 + $0x1] sm:$0x1]
    %v1919 = vperm.slane %v1918, 0
    %v1920 = vmul.f32 %v1900, %v1919
    %v1921 = vmul.f32 %v1901, %v1919
    %v1922 = vmul.f32 %v1902, %v1919
    %v1923 = vmul.f32 %v1903, %v1919
    %v1924 = vmul.f32 %v1904, %v1919
    %v1925 = vmul.f32 %v1905, %v1919
    %v1926 = vmul.f32 %v1906, %v1919
    %v1927 = vmul.f32 %v1907, %v1919
    %v1928 = vmul.f32 %v1908, %v1919
    %v1929 = vmul.f32 %v1909, %v1919
    %v1930 = vmul.f32 %v1910, %v1919
    %v1931 = vmul.f32 %v1911, %v1919
    %v1932 = vmul.f32 %v1912, %v1919
    %v1933 = vmul.f32 %v1913, %v1919
    %v1934 = vmul.f32 %v1914, %v1919
    %v1935 = vmul.f32 %v1915, %v1919
    %v1936 = vmul.f32 %v1916, %v1919
    %v1937 = vmul.f32 %v1917, %v1919
    %v1938 = vadd.f32 %v1882, %v1920
    %v1939 = vadd.f32 %v1883, %v1921
    %v1940 = vadd.f32 %v1884, %v1922
    %v1941 = vadd.f32 %v1885, %v1923
    %v1942 = vadd.f32 %v1886, %v1924
    %v1943 = vadd.f32 %v1887, %v1925
    %v1944 = vadd.f32 %v1888, %v1926
    %v1945 = vadd.f32 %v1889, %v1927
    %v1946 = vadd.f32 %v1890, %v1928
    %v1947 = vadd.f32 %v1891, %v1929
    %v1948 = vadd.f32 %v1892, %v1930
    %v1949 = vadd.f32 %v1893, %v1931
    %v1950 = vadd.f32 %v1894, %v1932
    %v1951 = vadd.f32 %v1895, %v1933
    %v1952 = vadd.f32 %v1896, %v1934
    %v1953 = vadd.f32 %v1897, %v1935
    %v1954 = vadd.f32 %v1898, %v1936
    %v1955 = vadd.f32 %v1899, %v1937
    %v1956 = vld [vmem:[%s1842 + $0x2] sm:$0xff]
    %v1957 = vld [vmem:[%s1842 + $0xa] sm:$0x1]
    %v1958 = vld [vmem:[%s1842 + $0x12] sm:$0xff]
    %v1959 = vld [vmem:[%s1842 + $0x1a] sm:$0x1]
    %v1960 = vld [vmem:[%s1842 + $0x22] sm:$0xff]
    %v1961 = vld [vmem:[%s1842 + $0x2a] sm:$0x1]
    %v1962 = vld [vmem:[%s1842 + $0x32] sm:$0xff]
    %v1963 = vld [vmem:[%s1842 + $0x3a] sm:$0x1]
    %v1964 = vld [vmem:[%s1842 + $0x42] sm:$0xff]
    %v1965 = vld [vmem:[%s1842 + $0x4a] sm:$0x1]
    %v1966 = vld [vmem:[%s1842 + $0x52] sm:$0xff]
    %v1967 = vld [vmem:[%s1842 + $0x5a] sm:$0x1]
    %v1968 = vld [vmem:[%s1842 + $0x62] sm:$0xff]
    %v1969 = vld [vmem:[%s1842 + $0x6a] sm:$0x1]
    %v1970 = vld [vmem:[%s1842 + $0x72] sm:$0xff]
    %v1971 = vld [vmem:[%s1842 + $0x7a] sm:$0x1]
    %v1972 = vld [vmem:[%s1842 + $0x82] sm:$0xff]
    %v1973 = vld [vmem:[%s1842 + $0x8a] sm:$0x1]
    %v1974 = vld [vmem:[%s1861 + $0x2] sm:$0x1]
    %v1975 = vperm.slane %v1974, 0
    %v1976 = vmul.f32 %v1956, %v1975
    %v1977 = vmul.f32 %v1957, %v1975
    %v1978 = vmul.f32 %v1958, %v1975
    %v1979 = vmul.f32 %v1959, %v1975
    %v1980 = vmul.f32 %v1960, %v1975
    %v1981 = vmul.f32 %v1961, %v1975
    %v1982 = vmul.f32 %v1962, %v1975
    %v1983 = vmul.f32 %v1963, %v1975
    %v1984 = vmul.f32 %v1964, %v1975
    %v1985 = vmul.f32 %v1965, %v1975
    %v1986 = vmul.f32 %v1966, %v1975
    %v1987 = vmul.f32 %v1967, %v1975
    %v1988 = vmul.f32 %v1968, %v1975
    %v1989 = vmul.f32 %v1969, %v1975
    %v1990 = vmul.f32 %v1970, %v1975
    %v1991 = vmul.f32 %v1971, %v1975
    %v1992 = vmul.f32 %v1972, %v1975
    %v1993 = vmul.f32 %v1973, %v1975
    %v1994 = vadd.f32 %v1938, %v1976
    %v1995 = vadd.f32 %v1939, %v1977
    %v1996 = vadd.f32 %v1940, %v1978
    %v1997 = vadd.f32 %v1941, %v1979
    %v1998 = vadd.f32 %v1942, %v1980
    %v1999 = vadd.f32 %v1943, %v1981
    %v2000 = vadd.f32 %v1944, %v1982
    %v2001 = vadd.f32 %v1945, %v1983
    %v2002 = vadd.f32 %v1946, %v1984
    %v2003 = vadd.f32 %v1947, %v1985
    %v2004 = vadd.f32 %v1948, %v1986
    %v2005 = vadd.f32 %v1949, %v1987
    %v2006 = vadd.f32 %v1950, %v1988
    %v2007 = vadd.f32 %v1951, %v1989
    %v2008 = vadd.f32 %v1952, %v1990
    %v2009 = vadd.f32 %v1953, %v1991
    %v2010 = vadd.f32 %v1954, %v1992
    %v2011 = vadd.f32 %v1955, %v1993
    %v2012 = vld [vmem:[%s1842 + $0x3] sm:$0xff]
    %v2013 = vld [vmem:[%s1842 + $0xb] sm:$0x1]
    %v2014 = vld [vmem:[%s1842 + $0x13] sm:$0xff]
    %v2015 = vld [vmem:[%s1842 + $0x1b] sm:$0x1]
    %v2016 = vld [vmem:[%s1842 + $0x23] sm:$0xff]
    %v2017 = vld [vmem:[%s1842 + $0x2b] sm:$0x1]
    %v2018 = vld [vmem:[%s1842 + $0x33] sm:$0xff]
    %v2019 = vld [vmem:[%s1842 + $0x3b] sm:$0x1]
    %v2020 = vld [vmem:[%s1842 + $0x43] sm:$0xff]
    %v2021 = vld [vmem:[%s1842 + $0x4b] sm:$0x1]
    %v2022 = vld [vmem:[%s1842 + $0x53] sm:$0xff]
    %v2023 = vld [vmem:[%s1842 + $0x5b] sm:$0x1]
    %v2024 = vld [vmem:[%s1842 + $0x63] sm:$0xff]
    %v2025 = vld [vmem:[%s1842 + $0x6b] sm:$0x1]
    %v2026 = vld [vmem:[%s1842 + $0x73] sm:$0xff]
    %v2027 = vld [vmem:[%s1842 + $0x7b] sm:$0x1]
    %v2028 = vld [vmem:[%s1842 + $0x83] sm:$0xff]
    %v2029 = vld [vmem:[%s1842 + $0x8b] sm:$0x1]
    %v2030 = vld [vmem:[%s1861 + $0x3] sm:$0x1]
    %v2031 = vperm.slane %v2030, 0
    %v2032 = vmul.f32 %v2012, %v2031
    %v2033 = vmul.f32 %v2013, %v2031
    %v2034 = vmul.f32 %v2014, %v2031
    %v2035 = vmul.f32 %v2015, %v2031
    %v2036 = vmul.f32 %v2016, %v2031
    %v2037 = vmul.f32 %v2017, %v2031
    %v2038 = vmul.f32 %v2018, %v2031
    %v2039 = vmul.f32 %v2019, %v2031
    %v2040 = vmul.f32 %v2020, %v2031
    %v2041 = vmul.f32 %v2021, %v2031
    %v2042 = vmul.f32 %v2022, %v2031
    %v2043 = vmul.f32 %v2023, %v2031
    %v2044 = vmul.f32 %v2024, %v2031
    %v2045 = vmul.f32 %v2025, %v2031
    %v2046 = vmul.f32 %v2026, %v2031
    %v2047 = vmul.f32 %v2027, %v2031
    %v2048 = vmul.f32 %v2028, %v2031
    %v2049 = vmul.f32 %v2029, %v2031
    %v2050 = vadd.f32 %v1994, %v2032
    %v2051 = vadd.f32 %v1995, %v2033
    %v2052 = vadd.f32 %v1996, %v2034
    %v2053 = vadd.f32 %v1997, %v2035
    %v2054 = vadd.f32 %v1998, %v2036
    %v2055 = vadd.f32 %v1999, %v2037
    %v2056 = vadd.f32 %v2000, %v2038
    %v2057 = vadd.f32 %v2001, %v2039
    %v2058 = vadd.f32 %v2002, %v2040
    %v2059 = vadd.f32 %v2003, %v2041
    %v2060 = vadd.f32 %v2004, %v2042
    %v2061 = vadd.f32 %v2005, %v2043
    %v2062 = vadd.f32 %v2006, %v2044
    %v2063 = vadd.f32 %v2007, %v2045
    %v2064 = vadd.f32 %v2008, %v2046
    %v2065 = vadd.f32 %v2009, %v2047
    %v2066 = vadd.f32 %v2010, %v2048
    %v2067 = vadd.f32 %v2011, %v2049
    %v2068 = vld [vmem:[%s1842 + $0x4] sm:$0xff]
    %v2069 = vld [vmem:[%s1842 + $0xc] sm:$0x1]
    %v2070 = vld [vmem:[%s1842 + $0x14] sm:$0xff]
    %v2071 = vld [vmem:[%s1842 + $0x1c] sm:$0x1]
    %v2072 = vld [vmem:[%s1842 + $0x24] sm:$0xff]
    %v2073 = vld [vmem:[%s1842 + $0x2c] sm:$0x1]
    %v2074 = vld [vmem:[%s1842 + $0x34] sm:$0xff]
    %v2075 = vld [vmem:[%s1842 + $0x3c] sm:$0x1]
    %v2076 = vld [vmem:[%s1842 + $0x44] sm:$0xff]
    %v2077 = vld [vmem:[%s1842 + $0x4c] sm:$0x1]
    %v2078 = vld [vmem:[%s1842 + $0x54] sm:$0xff]
    %v2079 = vld [vmem:[%s1842 + $0x5c] sm:$0x1]
    %v2080 = vld [vmem:[%s1842 + $0x64] sm:$0xff]
    %v2081 = vld [vmem:[%s1842 + $0x6c] sm:$0x1]
    %v2082 = vld [vmem:[%s1842 + $0x74] sm:$0xff]
    %v2083 = vld [vmem:[%s1842 + $0x7c] sm:$0x1]
    %v2084 = vld [vmem:[%s1842 + $0x84] sm:$0xff]
    %v2085 = vld [vmem:[%s1842 + $0x8c] sm:$0x1]
    %v2086 = vld [vmem:[%s1861 + $0x4] sm:$0x1]
    %v2087 = vperm.slane %v2086, 0
    %v2088 = vmul.f32 %v2068, %v2087
    %v2089 = vmul.f32 %v2069, %v2087
    %v2090 = vmul.f32 %v2070, %v2087
    %v2091 = vmul.f32 %v2071, %v2087
    %v2092 = vmul.f32 %v2072, %v2087
    %v2093 = vmul.f32 %v2073, %v2087
    %v2094 = vmul.f32 %v2074, %v2087
    %v2095 = vmul.f32 %v2075, %v2087
    %v2096 = vmul.f32 %v2076, %v2087
    %v2097 = vmul.f32 %v2077, %v2087
    %v2098 = vmul.f32 %v2078, %v2087
    %v2099 = vmul.f32 %v2079, %v2087
    %v2100 = vmul.f32 %v2080, %v2087
    %v2101 = vmul.f32 %v2081, %v2087
    %v2102 = vmul.f32 %v2082, %v2087
    %v2103 = vmul.f32 %v2083, %v2087
    %v2104 = vmul.f32 %v2084, %v2087
    %v2105 = vmul.f32 %v2085, %v2087
    %v2106 = vadd.f32 %v2050, %v2088
    %v2107 = vadd.f32 %v2051, %v2089
    %v2108 = vadd.f32 %v2052, %v2090
    %v2109 = vadd.f32 %v2053, %v2091
    %v2110 = vadd.f32 %v2054, %v2092
    %v2111 = vadd.f32 %v2055, %v2093
    %v2112 = vadd.f32 %v2056, %v2094
    %v2113 = vadd.f32 %v2057, %v2095
    %v2114 = vadd.f32 %v2058, %v2096
    %v2115 = vadd.f32 %v2059, %v2097
    %v2116 = vadd.f32 %v2060, %v2098
    %v2117 = vadd.f32 %v2061, %v2099
    %v2118 = vadd.f32 %v2062, %v2100
    %v2119 = vadd.f32 %v2063, %v2101
    %v2120 = vadd.f32 %v2064, %v2102
    %v2121 = vadd.f32 %v2065, %v2103
    %v2122 = vadd.f32 %v2066, %v2104
    %v2123 = vadd.f32 %v2067, %v2105
    %v2124 = vld [vmem:[%s1842 + $0x5] sm:$0xff]
    %v2125 = vld [vmem:[%s1842 + $0xd] sm:$0x1]
    %v2126 = vld [vmem:[%s1842 + $0x15] sm:$0xff]
    %v2127 = vld [vmem:[%s1842 + $0x1d] sm:$0x1]
    %v2128 = vld [vmem:[%s1842 + $0x25] sm:$0xff]
    %v2129 = vld [vmem:[%s1842 + $0x2d] sm:$0x1]
    %v2130 = vld [vmem:[%s1842 + $0x35] sm:$0xff]
    %v2131 = vld [vmem:[%s1842 + $0x3d] sm:$0x1]
    %v2132 = vld [vmem:[%s1842 + $0x45] sm:$0xff]
    %v2133 = vld [vmem:[%s1842 + $0x4d] sm:$0x1]
    %v2134 = vld [vmem:[%s1842 + $0x55] sm:$0xff]
    %v2135 = vld [vmem:[%s1842 + $0x5d] sm:$0x1]
    %v2136 = vld [vmem:[%s1842 + $0x65] sm:$0xff]
    %v2137 = vld [vmem:[%s1842 + $0x6d] sm:$0x1]
    %v2138 = vld [vmem:[%s1842 + $0x75] sm:$0xff]
    %v2139 = vld [vmem:[%s1842 + $0x7d] sm:$0x1]
    %v2140 = vld [vmem:[%s1842 + $0x85] sm:$0xff]
    %v2141 = vld [vmem:[%s1842 + $0x8d] sm:$0x1]
    %v2142 = vld [vmem:[%s1861 + $0x5] sm:$0x1]
    %v2143 = vperm.slane %v2142, 0
    %v2144 = vmul.f32 %v2124, %v2143
    %v2145 = vmul.f32 %v2125, %v2143
    %v2146 = vmul.f32 %v2126, %v2143
    %v2147 = vmul.f32 %v2127, %v2143
    %v2148 = vmul.f32 %v2128, %v2143
    %v2149 = vmul.f32 %v2129, %v2143
    %v2150 = vmul.f32 %v2130, %v2143
    %v2151 = vmul.f32 %v2131, %v2143
    %v2152 = vmul.f32 %v2132, %v2143
    %v2153 = vmul.f32 %v2133, %v2143
    %v2154 = vmul.f32 %v2134, %v2143
    %v2155 = vmul.f32 %v2135, %v2143
    %v2156 = vmul.f32 %v2136, %v2143
    %v2157 = vmul.f32 %v2137, %v2143
    %v2158 = vmul.f32 %v2138, %v2143
    %v2159 = vmul.f32 %v2139, %v2143
    %v2160 = vmul.f32 %v2140, %v2143
    %v2161 = vmul.f32 %v2141, %v2143
    %v2162 = vadd.f32 %v2106, %v2144
    %v2163 = vadd.f32 %v2107, %v2145
    %v2164 = vadd.f32 %v2108, %v2146
    %v2165 = vadd.f32 %v2109, %v2147
    %v2166 = vadd.f32 %v2110, %v2148
    %v2167 = vadd.f32 %v2111, %v2149
    %v2168 = vadd.f32 %v2112, %v2150
    %v2169 = vadd.f32 %v2113, %v2151
    %v2170 = vadd.f32 %v2114, %v2152
    %v2171 = vadd.f32 %v2115, %v2153
    %v2172 = vadd.f32 %v2116, %v2154
    %v2173 = vadd.f32 %v2117, %v2155
    %v2174 = vadd.f32 %v2118, %v2156
    %v2175 = vadd.f32 %v2119, %v2157
    %v2176 = vadd.f32 %v2120, %v2158
    %v2177 = vadd.f32 %v2121, %v2159
    %v2178 = vadd.f32 %v2122, %v2160
    %v2179 = vadd.f32 %v2123, %v2161
    %v2180 = vld [vmem:[%s1842 + $0x6] sm:$0xff]
    %v2181 = vld [vmem:[%s1842 + $0xe] sm:$0x1]
    %v2182 = vld [vmem:[%s1842 + $0x16] sm:$0xff]
    %v2183 = vld [vmem:[%s1842 + $0x1e] sm:$0x1]
    %v2184 = vld [vmem:[%s1842 + $0x26] sm:$0xff]
    %v2185 = vld [vmem:[%s1842 + $0x2e] sm:$0x1]
    %v2186 = vld [vmem:[%s1842 + $0x36] sm:$0xff]
    %v2187 = vld [vmem:[%s1842 + $0x3e] sm:$0x1]
    %v2188 = vld [vmem:[%s1842 + $0x46] sm:$0xff]
    %v2189 = vld [vmem:[%s1842 + $0x4e] sm:$0x1]
    %v2190 = vld [vmem:[%s1842 + $0x56] sm:$0xff]
    %v2191 = vld [vmem:[%s1842 + $0x5e] sm:$0x1]
    %v2192 = vld [vmem:[%s1842 + $0x66] sm:$0xff]
    %v2193 = vld [vmem:[%s1842 + $0x6e] sm:$0x1]
    %v2194 = vld [vmem:[%s1842 + $0x76] sm:$0xff]
    %v2195 = vld [vmem:[%s1842 + $0x7e] sm:$0x1]
    %v2196 = vld [vmem:[%s1842 + $0x86] sm:$0xff]
    %v2197 = vld [vmem:[%s1842 + $0x8e] sm:$0x1]
    %v2198 = vld [vmem:[%s1861 + $0x6] sm:$0x1]
    %v2199 = vperm.slane %v2198, 0
    %v2200 = vmul.f32 %v2180, %v2199
    %v2201 = vmul.f32 %v2181, %v2199
    %v2202 = vmul.f32 %v2182, %v2199
    %v2203 = vmul.f32 %v2183, %v2199
    %v2204 = vmul.f32 %v2184, %v2199
    %v2205 = vmul.f32 %v2185, %v2199
    %v2206 = vmul.f32 %v2186, %v2199
    %v2207 = vmul.f32 %v2187, %v2199
    %v2208 = vmul.f32 %v2188, %v2199
    %v2209 = vmul.f32 %v2189, %v2199
    %v2210 = vmul.f32 %v2190, %v2199
    %v2211 = vmul.f32 %v2191, %v2199
    %v2212 = vmul.f32 %v2192, %v2199
    %v2213 = vmul.f32 %v2193, %v2199
    %v2214 = vmul.f32 %v2194, %v2199
    %v2215 = vmul.f32 %v2195, %v2199
    %v2216 = vmul.f32 %v2196, %v2199
    %v2217 = vmul.f32 %v2197, %v2199
    %v2218 = vadd.f32 %v2162, %v2200
    %v2219 = vadd.f32 %v2163, %v2201
    %v2220 = vadd.f32 %v2164, %v2202
    %v2221 = vadd.f32 %v2165, %v2203
    %v2222 = vadd.f32 %v2166, %v2204
    %v2223 = vadd.f32 %v2167, %v2205
    %v2224 = vadd.f32 %v2168, %v2206
    %v2225 = vadd.f32 %v2169, %v2207
    %v2226 = vadd.f32 %v2170, %v2208
    %v2227 = vadd.f32 %v2171, %v2209
    %v2228 = vadd.f32 %v2172, %v2210
    %v2229 = vadd.f32 %v2173, %v2211
    %v2230 = vadd.f32 %v2174, %v2212
    %v2231 = vadd.f32 %v2175, %v2213
    %v2232 = vadd.f32 %v2176, %v2214
    %v2233 = vadd.f32 %v2177, %v2215
    %v2234 = vadd.f32 %v2178, %v2216
    %v2235 = vadd.f32 %v2179, %v2217
    %v2236 = vld [vmem:[%s1842 + $0x7] sm:$0xff]
    %v2237 = vld [vmem:[%s1842 + $0xf] sm:$0x1]
    %v2238 = vld [vmem:[%s1842 + $0x17] sm:$0xff]
    %v2239 = vld [vmem:[%s1842 + $0x1f] sm:$0x1]
    %v2240 = vld [vmem:[%s1842 + $0x27] sm:$0xff]
    %v2241 = vld [vmem:[%s1842 + $0x2f] sm:$0x1]
    %v2242 = vld [vmem:[%s1842 + $0x37] sm:$0xff]
    %v2243 = vld [vmem:[%s1842 + $0x3f] sm:$0x1]
    %v2244 = vld [vmem:[%s1842 + $0x47] sm:$0xff]
    %v2245 = vld [vmem:[%s1842 + $0x4f] sm:$0x1]
    %v2246 = vld [vmem:[%s1842 + $0x57] sm:$0xff]
    %v2247 = vld [vmem:[%s1842 + $0x5f] sm:$0x1]
    %v2248 = vld [vmem:[%s1842 + $0x67] sm:$0xff]
    %v2249 = vld [vmem:[%s1842 + $0x6f] sm:$0x1]
    %v2250 = vld [vmem:[%s1842 + $0x77] sm:$0xff]
    %v2251 = vld [vmem:[%s1842 + $0x7f] sm:$0x1]
    %v2252 = vld [vmem:[%s1842 + $0x87] sm:$0xff]
    %v2253 = vld [vmem:[%s1842 + $0x8f] sm:$0x1]
    %v2254 = vld [vmem:[%s1861 + $0x7] sm:$0x1]
    %v2255 = vperm.slane %v2254, 0
    %v2256 = vmul.f32 %v2236, %v2255
    %v2257 = vmul.f32 %v2237, %v2255
    %v2258 = vmul.f32 %v2238, %v2255
    %v2259 = vmul.f32 %v2239, %v2255
    %v2260 = vmul.f32 %v2240, %v2255
    %v2261 = vmul.f32 %v2241, %v2255
    %v2262 = vmul.f32 %v2242, %v2255
    %v2263 = vmul.f32 %v2243, %v2255
    %v2264 = vmul.f32 %v2244, %v2255
    %v2265 = vmul.f32 %v2245, %v2255
    %v2266 = vmul.f32 %v2246, %v2255
    %v2267 = vmul.f32 %v2247, %v2255
    %v2268 = vmul.f32 %v2248, %v2255
    %v2269 = vmul.f32 %v2249, %v2255
    %v2270 = vmul.f32 %v2250, %v2255
    %v2271 = vmul.f32 %v2251, %v2255
    %v2272 = vmul.f32 %v2252, %v2255
    %v2273 = vmul.f32 %v2253, %v2255
    %v2274 = vadd.f32 %v2218, %v2256
    %v2275 = vadd.f32 %v2219, %v2257
    %v2276 = vadd.f32 %v2220, %v2258
    %v2277 = vadd.f32 %v2221, %v2259
    %v2278 = vadd.f32 %v2222, %v2260
    %v2279 = vadd.f32 %v2223, %v2261
    %v2280 = vadd.f32 %v2224, %v2262
    %v2281 = vadd.f32 %v2225, %v2263
    %v2282 = vadd.f32 %v2226, %v2264
    %v2283 = vadd.f32 %v2227, %v2265
    %v2284 = vadd.f32 %v2228, %v2266
    %v2285 = vadd.f32 %v2229, %v2267
    %v2286 = vadd.f32 %v2230, %v2268
    %v2287 = vadd.f32 %v2231, %v2269
    %v2288 = vadd.f32 %v2232, %v2270
    %v2289 = vadd.f32 %v2233, %v2271
    %v2290 = vadd.f32 %v2234, %v2272
    %v2291 = vadd.f32 %v2235, %v2273
    %s2292 = scalar_lea.vmem [#allocation2], 80
    %v2293 = vld [vmem:[%s2292] sm:$0xff]
    %v2294 = vld [vmem:[%s2292 + $0x8] sm:$0x1]
    %v2295 = vld [vmem:[%s2292 + $0x10] sm:$0xff]
    %v2296 = vld [vmem:[%s2292 + $0x18] sm:$0x1]
    %v2297 = vld [vmem:[%s2292 + $0x20] sm:$0xff]
    %v2298 = vld [vmem:[%s2292 + $0x28] sm:$0x1]
    %v2299 = vld [vmem:[%s2292 + $0x30] sm:$0xff]
    %v2300 = vld [vmem:[%s2292 + $0x38] sm:$0x1]
    %v2301 = vld [vmem:[%s2292 + $0x40] sm:$0xff]
    %v2302 = vld [vmem:[%s2292 + $0x48] sm:$0x1]
    %v2303 = vld [vmem:[%s2292 + $0x50] sm:$0xff]
    %v2304 = vld [vmem:[%s2292 + $0x58] sm:$0x1]
    %v2305 = vld [vmem:[%s2292 + $0x60] sm:$0xff]
    %v2306 = vld [vmem:[%s2292 + $0x68] sm:$0x1]
    %v2307 = vld [vmem:[%s2292 + $0x70] sm:$0xff]
    %v2308 = vld [vmem:[%s2292 + $0x78] sm:$0x1]
    %v2309 = vld [vmem:[%s2292 + $0x80] sm:$0xff]
    %v2310 = vld [vmem:[%s2292 + $0x88] sm:$0x1]
    %s2311 = scalar_lea.vmem [#allocation5], 40
    %v2312 = vld [vmem:[%s2311] sm:$0x1]
    %v2313 = vperm.slane %v2312, 0
    %v2314 = vmul.f32 %v2293, %v2313
    %v2315 = vmul.f32 %v2294, %v2313
    %v2316 = vmul.f32 %v2295, %v2313
    %v2317 = vmul.f32 %v2296, %v2313
    %v2318 = vmul.f32 %v2297, %v2313
    %v2319 = vmul.f32 %v2298, %v2313
    %v2320 = vmul.f32 %v2299, %v2313
    %v2321 = vmul.f32 %v2300, %v2313
    %v2322 = vmul.f32 %v2301, %v2313
    %v2323 = vmul.f32 %v2302, %v2313
    %v2324 = vmul.f32 %v2303, %v2313
    %v2325 = vmul.f32 %v2304, %v2313
    %v2326 = vmul.f32 %v2305, %v2313
    %v2327 = vmul.f32 %v2306, %v2313
    %v2328 = vmul.f32 %v2307, %v2313
    %v2329 = vmul.f32 %v2308, %v2313
    %v2330 = vmul.f32 %v2309, %v2313
    %v2331 = vmul.f32 %v2310, %v2313
    %v2332 = vadd.f32 %v2274, %v2314
    %v2333 = vadd.f32 %v2275, %v2315
    %v2334 = vadd.f32 %v2276, %v2316
    %v2335 = vadd.f32 %v2277, %v2317
    %v2336 = vadd.f32 %v2278, %v2318
    %v2337 = vadd.f32 %v2279, %v2319
    %v2338 = vadd.f32 %v2280, %v2320
    %v2339 = vadd.f32 %v2281, %v2321
    %v2340 = vadd.f32 %v2282, %v2322
    %v2341 = vadd.f32 %v2283, %v2323
    %v2342 = vadd.f32 %v2284, %v2324
    %v2343 = vadd.f32 %v2285, %v2325
    %v2344 = vadd.f32 %v2286, %v2326
    %v2345 = vadd.f32 %v2287, %v2327
    %v2346 = vadd.f32 %v2288, %v2328
    %v2347 = vadd.f32 %v2289, %v2329
    %v2348 = vadd.f32 %v2290, %v2330
    %v2349 = vadd.f32 %v2291, %v2331
    %v2350 = vld [vmem:[%s2292 + $0x1] sm:$0xff]
    %v2351 = vld [vmem:[%s2292 + $0x9] sm:$0x1]
    %v2352 = vld [vmem:[%s2292 + $0x11] sm:$0xff]
    %v2353 = vld [vmem:[%s2292 + $0x19] sm:$0x1]
    %v2354 = vld [vmem:[%s2292 + $0x21] sm:$0xff]
    %v2355 = vld [vmem:[%s2292 + $0x29] sm:$0x1]
    %v2356 = vld [vmem:[%s2292 + $0x31] sm:$0xff]
    %v2357 = vld [vmem:[%s2292 + $0x39] sm:$0x1]
    %v2358 = vld [vmem:[%s2292 + $0x41] sm:$0xff]
    %v2359 = vld [vmem:[%s2292 + $0x49] sm:$0x1]
    %v2360 = vld [vmem:[%s2292 + $0x51] sm:$0xff]
    %v2361 = vld [vmem:[%s2292 + $0x59] sm:$0x1]
    %v2362 = vld [vmem:[%s2292 + $0x61] sm:$0xff]
    %v2363 = vld [vmem:[%s2292 + $0x69] sm:$0x1]
    %v2364 = vld [vmem:[%s2292 + $0x71] sm:$0xff]
    %v2365 = vld [vmem:[%s2292 + $0x79] sm:$0x1]
    %v2366 = vld [vmem:[%s2292 + $0x81] sm:$0xff]
    %v2367 = vld [vmem:[%s2292 + $0x89] sm:$0x1]
    %v2368 = vld [vmem:[%s2311 + $0x1] sm:$0x1]
    %v2369 = vperm.slane %v2368, 0
    %v2370 = vmul.f32 %v2350, %v2369
    %v2371 = vmul.f32 %v2351, %v2369
    %v2372 = vmul.f32 %v2352, %v2369
    %v2373 = vmul.f32 %v2353, %v2369
    %v2374 = vmul.f32 %v2354, %v2369
    %v2375 = vmul.f32 %v2355, %v2369
    %v2376 = vmul.f32 %v2356, %v2369
    %v2377 = vmul.f32 %v2357, %v2369
    %v2378 = vmul.f32 %v2358, %v2369
    %v2379 = vmul.f32 %v2359, %v2369
    %v2380 = vmul.f32 %v2360, %v2369
    %v2381 = vmul.f32 %v2361, %v2369
    %v2382 = vmul.f32 %v2362, %v2369
    %v2383 = vmul.f32 %v2363, %v2369
    %v2384 = vmul.f32 %v2364, %v2369
    %v2385 = vmul.f32 %v2365, %v2369
    %v2386 = vmul.f32 %v2366, %v2369
    %v2387 = vmul.f32 %v2367, %v2369
    %v2388 = vadd.f32 %v2332, %v2370
    %v2389 = vadd.f32 %v2333, %v2371
    %v2390 = vadd.f32 %v2334, %v2372
    %v2391 = vadd.f32 %v2335, %v2373
    %v2392 = vadd.f32 %v2336, %v2374
    %v2393 = vadd.f32 %v2337, %v2375
    %v2394 = vadd.f32 %v2338, %v2376
    %v2395 = vadd.f32 %v2339, %v2377
    %v2396 = vadd.f32 %v2340, %v2378
    %v2397 = vadd.f32 %v2341, %v2379
    %v2398 = vadd.f32 %v2342, %v2380
    %v2399 = vadd.f32 %v2343, %v2381
    %v2400 = vadd.f32 %v2344, %v2382
    %v2401 = vadd.f32 %v2345, %v2383
    %v2402 = vadd.f32 %v2346, %v2384
    %v2403 = vadd.f32 %v2347, %v2385
    %v2404 = vadd.f32 %v2348, %v2386
    %v2405 = vadd.f32 %v2349, %v2387
    %v2406 = vld [vmem:[%s2292 + $0x2] sm:$0xff]
    %v2407 = vld [vmem:[%s2292 + $0xa] sm:$0x1]
    %v2408 = vld [vmem:[%s2292 + $0x12] sm:$0xff]
    %v2409 = vld [vmem:[%s2292 + $0x1a] sm:$0x1]
    %v2410 = vld [vmem:[%s2292 + $0x22] sm:$0xff]
    %v2411 = vld [vmem:[%s2292 + $0x2a] sm:$0x1]
    %v2412 = vld [vmem:[%s2292 + $0x32] sm:$0xff]
    %v2413 = vld [vmem:[%s2292 + $0x3a] sm:$0x1]
    %v2414 = vld [vmem:[%s2292 + $0x42] sm:$0xff]
    %v2415 = vld [vmem:[%s2292 + $0x4a] sm:$0x1]
    %v2416 = vld [vmem:[%s2292 + $0x52] sm:$0xff]
    %v2417 = vld [vmem:[%s2292 + $0x5a] sm:$0x1]
    %v2418 = vld [vmem:[%s2292 + $0x62] sm:$0xff]
    %v2419 = vld [vmem:[%s2292 + $0x6a] sm:$0x1]
    %v2420 = vld [vmem:[%s2292 + $0x72] sm:$0xff]
    %v2421 = vld [vmem:[%s2292 + $0x7a] sm:$0x1]
    %v2422 = vld [vmem:[%s2292 + $0x82] sm:$0xff]
    %v2423 = vld [vmem:[%s2292 + $0x8a] sm:$0x1]
    %v2424 = vld [vmem:[%s2311 + $0x2] sm:$0x1]
    %v2425 = vperm.slane %v2424, 0
    %v2426 = vmul.f32 %v2406, %v2425
    %v2427 = vmul.f32 %v2407, %v2425
    %v2428 = vmul.f32 %v2408, %v2425
    %v2429 = vmul.f32 %v2409, %v2425
    %v2430 = vmul.f32 %v2410, %v2425
    %v2431 = vmul.f32 %v2411, %v2425
    %v2432 = vmul.f32 %v2412, %v2425
    %v2433 = vmul.f32 %v2413, %v2425
    %v2434 = vmul.f32 %v2414, %v2425
    %v2435 = vmul.f32 %v2415, %v2425
    %v2436 = vmul.f32 %v2416, %v2425
    %v2437 = vmul.f32 %v2417, %v2425
    %v2438 = vmul.f32 %v2418, %v2425
    %v2439 = vmul.f32 %v2419, %v2425
    %v2440 = vmul.f32 %v2420, %v2425
    %v2441 = vmul.f32 %v2421, %v2425
    %v2442 = vmul.f32 %v2422, %v2425
    %v2443 = vmul.f32 %v2423, %v2425
    %v2444 = vadd.f32 %v2388, %v2426
    %v2445 = vadd.f32 %v2389, %v2427
    %v2446 = vadd.f32 %v2390, %v2428
    %v2447 = vadd.f32 %v2391, %v2429
    %v2448 = vadd.f32 %v2392, %v2430
    %v2449 = vadd.f32 %v2393, %v2431
    %v2450 = vadd.f32 %v2394, %v2432
    %v2451 = vadd.f32 %v2395, %v2433
    %v2452 = vadd.f32 %v2396, %v2434
    %v2453 = vadd.f32 %v2397, %v2435
    %v2454 = vadd.f32 %v2398, %v2436
    %v2455 = vadd.f32 %v2399, %v2437
    %v2456 = vadd.f32 %v2400, %v2438
    %v2457 = vadd.f32 %v2401, %v2439
    %v2458 = vadd.f32 %v2402, %v2440
    %v2459 = vadd.f32 %v2403, %v2441
    %v2460 = vadd.f32 %v2404, %v2442
    %v2461 = vadd.f32 %v2405, %v2443
    %v2462 = vld [vmem:[%s2292 + $0x3] sm:$0xff]
    %v2463 = vld [vmem:[%s2292 + $0xb] sm:$0x1]
    %v2464 = vld [vmem:[%s2292 + $0x13] sm:$0xff]
    %v2465 = vld [vmem:[%s2292 + $0x1b] sm:$0x1]
    %v2466 = vld [vmem:[%s2292 + $0x23] sm:$0xff]
    %v2467 = vld [vmem:[%s2292 + $0x2b] sm:$0x1]
    %v2468 = vld [vmem:[%s2292 + $0x33] sm:$0xff]
    %v2469 = vld [vmem:[%s2292 + $0x3b] sm:$0x1]
    %v2470 = vld [vmem:[%s2292 + $0x43] sm:$0xff]
    %v2471 = vld [vmem:[%s2292 + $0x4b] sm:$0x1]
    %v2472 = vld [vmem:[%s2292 + $0x53] sm:$0xff]
    %v2473 = vld [vmem:[%s2292 + $0x5b] sm:$0x1]
    %v2474 = vld [vmem:[%s2292 + $0x63] sm:$0xff]
    %v2475 = vld [vmem:[%s2292 + $0x6b] sm:$0x1]
    %v2476 = vld [vmem:[%s2292 + $0x73] sm:$0xff]
    %v2477 = vld [vmem:[%s2292 + $0x7b] sm:$0x1]
    %v2478 = vld [vmem:[%s2292 + $0x83] sm:$0xff]
    %v2479 = vld [vmem:[%s2292 + $0x8b] sm:$0x1]
    %v2480 = vld [vmem:[%s2311 + $0x3] sm:$0x1]
    %v2481 = vperm.slane %v2480, 0
    %v2482 = vmul.f32 %v2462, %v2481
    %v2483 = vmul.f32 %v2463, %v2481
    %v2484 = vmul.f32 %v2464, %v2481
    %v2485 = vmul.f32 %v2465, %v2481
    %v2486 = vmul.f32 %v2466, %v2481
    %v2487 = vmul.f32 %v2467, %v2481
    %v2488 = vmul.f32 %v2468, %v2481
    %v2489 = vmul.f32 %v2469, %v2481
    %v2490 = vmul.f32 %v2470, %v2481
    %v2491 = vmul.f32 %v2471, %v2481
    %v2492 = vmul.f32 %v2472, %v2481
    %v2493 = vmul.f32 %v2473, %v2481
    %v2494 = vmul.f32 %v2474, %v2481
    %v2495 = vmul.f32 %v2475, %v2481
    %v2496 = vmul.f32 %v2476, %v2481
    %v2497 = vmul.f32 %v2477, %v2481
    %v2498 = vmul.f32 %v2478, %v2481
    %v2499 = vmul.f32 %v2479, %v2481
    %v2500 = vadd.f32 %v2444, %v2482
    %v2501 = vadd.f32 %v2445, %v2483
    %v2502 = vadd.f32 %v2446, %v2484
    %v2503 = vadd.f32 %v2447, %v2485
    %v2504 = vadd.f32 %v2448, %v2486
    %v2505 = vadd.f32 %v2449, %v2487
    %v2506 = vadd.f32 %v2450, %v2488
    %v2507 = vadd.f32 %v2451, %v2489
    %v2508 = vadd.f32 %v2452, %v2490
    %v2509 = vadd.f32 %v2453, %v2491
    %v2510 = vadd.f32 %v2454, %v2492
    %v2511 = vadd.f32 %v2455, %v2493
    %v2512 = vadd.f32 %v2456, %v2494
    %v2513 = vadd.f32 %v2457, %v2495
    %v2514 = vadd.f32 %v2458, %v2496
    %v2515 = vadd.f32 %v2459, %v2497
    %v2516 = vadd.f32 %v2460, %v2498
    %v2517 = vadd.f32 %v2461, %v2499
    %v2518 = vld [vmem:[%s2292 + $0x4] sm:$0xff]
    %v2519 = vld [vmem:[%s2292 + $0xc] sm:$0x1]
    %v2520 = vld [vmem:[%s2292 + $0x14] sm:$0xff]
    %v2521 = vld [vmem:[%s2292 + $0x1c] sm:$0x1]
    %v2522 = vld [vmem:[%s2292 + $0x24] sm:$0xff]
    %v2523 = vld [vmem:[%s2292 + $0x2c] sm:$0x1]
    %v2524 = vld [vmem:[%s2292 + $0x34] sm:$0xff]
    %v2525 = vld [vmem:[%s2292 + $0x3c] sm:$0x1]
    %v2526 = vld [vmem:[%s2292 + $0x44] sm:$0xff]
    %v2527 = vld [vmem:[%s2292 + $0x4c] sm:$0x1]
    %v2528 = vld [vmem:[%s2292 + $0x54] sm:$0xff]
    %v2529 = vld [vmem:[%s2292 + $0x5c] sm:$0x1]
    %v2530 = vld [vmem:[%s2292 + $0x64] sm:$0xff]
    %v2531 = vld [vmem:[%s2292 + $0x6c] sm:$0x1]
    %v2532 = vld [vmem:[%s2292 + $0x74] sm:$0xff]
    %v2533 = vld [vmem:[%s2292 + $0x7c] sm:$0x1]
    %v2534 = vld [vmem:[%s2292 + $0x84] sm:$0xff]
    %v2535 = vld [vmem:[%s2292 + $0x8c] sm:$0x1]
    %v2536 = vld [vmem:[%s2311 + $0x4] sm:$0x1]
    %v2537 = vperm.slane %v2536, 0
    %v2538 = vmul.f32 %v2518, %v2537
    %v2539 = vmul.f32 %v2519, %v2537
    %v2540 = vmul.f32 %v2520, %v2537
    %v2541 = vmul.f32 %v2521, %v2537
    %v2542 = vmul.f32 %v2522, %v2537
    %v2543 = vmul.f32 %v2523, %v2537
    %v2544 = vmul.f32 %v2524, %v2537
    %v2545 = vmul.f32 %v2525, %v2537
    %v2546 = vmul.f32 %v2526, %v2537
    %v2547 = vmul.f32 %v2527, %v2537
    %v2548 = vmul.f32 %v2528, %v2537
    %v2549 = vmul.f32 %v2529, %v2537
    %v2550 = vmul.f32 %v2530, %v2537
    %v2551 = vmul.f32 %v2531, %v2537
    %v2552 = vmul.f32 %v2532, %v2537
    %v2553 = vmul.f32 %v2533, %v2537
    %v2554 = vmul.f32 %v2534, %v2537
    %v2555 = vmul.f32 %v2535, %v2537
    %v2556 = vadd.f32 %v2500, %v2538
    %v2557 = vadd.f32 %v2501, %v2539
    %v2558 = vadd.f32 %v2502, %v2540
    %v2559 = vadd.f32 %v2503, %v2541
    %v2560 = vadd.f32 %v2504, %v2542
    %v2561 = vadd.f32 %v2505, %v2543
    %v2562 = vadd.f32 %v2506, %v2544
    %v2563 = vadd.f32 %v2507, %v2545
    %v2564 = vadd.f32 %v2508, %v2546
    %v2565 = vadd.f32 %v2509, %v2547
    %v2566 = vadd.f32 %v2510, %v2548
    %v2567 = vadd.f32 %v2511, %v2549
    %v2568 = vadd.f32 %v2512, %v2550
    %v2569 = vadd.f32 %v2513, %v2551
    %v2570 = vadd.f32 %v2514, %v2552
    %v2571 = vadd.f32 %v2515, %v2553
    %v2572 = vadd.f32 %v2516, %v2554
    %v2573 = vadd.f32 %v2517, %v2555
    %v2574 = vld [vmem:[%s2292 + $0x5] sm:$0xff]
    %v2575 = vld [vmem:[%s2292 + $0xd] sm:$0x1]
    %v2576 = vld [vmem:[%s2292 + $0x15] sm:$0xff]
    %v2577 = vld [vmem:[%s2292 + $0x1d] sm:$0x1]
    %v2578 = vld [vmem:[%s2292 + $0x25] sm:$0xff]
    %v2579 = vld [vmem:[%s2292 + $0x2d] sm:$0x1]
    %v2580 = vld [vmem:[%s2292 + $0x35] sm:$0xff]
    %v2581 = vld [vmem:[%s2292 + $0x3d] sm:$0x1]
    %v2582 = vld [vmem:[%s2292 + $0x45] sm:$0xff]
    %v2583 = vld [vmem:[%s2292 + $0x4d] sm:$0x1]
    %v2584 = vld [vmem:[%s2292 + $0x55] sm:$0xff]
    %v2585 = vld [vmem:[%s2292 + $0x5d] sm:$0x1]
    %v2586 = vld [vmem:[%s2292 + $0x65] sm:$0xff]
    %v2587 = vld [vmem:[%s2292 + $0x6d] sm:$0x1]
    %v2588 = vld [vmem:[%s2292 + $0x75] sm:$0xff]
    %v2589 = vld [vmem:[%s2292 + $0x7d] sm:$0x1]
    %v2590 = vld [vmem:[%s2292 + $0x85] sm:$0xff]
    %v2591 = vld [vmem:[%s2292 + $0x8d] sm:$0x1]
    %v2592 = vld [vmem:[%s2311 + $0x5] sm:$0x1]
    %v2593 = vperm.slane %v2592, 0
    %v2594 = vmul.f32 %v2574, %v2593
    %v2595 = vmul.f32 %v2575, %v2593
    %v2596 = vmul.f32 %v2576, %v2593
    %v2597 = vmul.f32 %v2577, %v2593
    %v2598 = vmul.f32 %v2578, %v2593
    %v2599 = vmul.f32 %v2579, %v2593
    %v2600 = vmul.f32 %v2580, %v2593
    %v2601 = vmul.f32 %v2581, %v2593
    %v2602 = vmul.f32 %v2582, %v2593
    %v2603 = vmul.f32 %v2583, %v2593
    %v2604 = vmul.f32 %v2584, %v2593
    %v2605 = vmul.f32 %v2585, %v2593
    %v2606 = vmul.f32 %v2586, %v2593
    %v2607 = vmul.f32 %v2587, %v2593
    %v2608 = vmul.f32 %v2588, %v2593
    %v2609 = vmul.f32 %v2589, %v2593
    %v2610 = vmul.f32 %v2590, %v2593
    %v2611 = vmul.f32 %v2591, %v2593
    %v2612 = vadd.f32 %v2556, %v2594
    %v2613 = vadd.f32 %v2557, %v2595
    %v2614 = vadd.f32 %v2558, %v2596
    %v2615 = vadd.f32 %v2559, %v2597
    %v2616 = vadd.f32 %v2560, %v2598
    %v2617 = vadd.f32 %v2561, %v2599
    %v2618 = vadd.f32 %v2562, %v2600
    %v2619 = vadd.f32 %v2563, %v2601
    %v2620 = vadd.f32 %v2564, %v2602
    %v2621 = vadd.f32 %v2565, %v2603
    %v2622 = vadd.f32 %v2566, %v2604
    %v2623 = vadd.f32 %v2567, %v2605
    %v2624 = vadd.f32 %v2568, %v2606
    %v2625 = vadd.f32 %v2569, %v2607
    %v2626 = vadd.f32 %v2570, %v2608
    %v2627 = vadd.f32 %v2571, %v2609
    %v2628 = vadd.f32 %v2572, %v2610
    %v2629 = vadd.f32 %v2573, %v2611
    %v2630 = vld [vmem:[%s2292 + $0x6] sm:$0xff]
    %v2631 = vld [vmem:[%s2292 + $0xe] sm:$0x1]
    %v2632 = vld [vmem:[%s2292 + $0x16] sm:$0xff]
    %v2633 = vld [vmem:[%s2292 + $0x1e] sm:$0x1]
    %v2634 = vld [vmem:[%s2292 + $0x26] sm:$0xff]
    %v2635 = vld [vmem:[%s2292 + $0x2e] sm:$0x1]
    %v2636 = vld [vmem:[%s2292 + $0x36] sm:$0xff]
    %v2637 = vld [vmem:[%s2292 + $0x3e] sm:$0x1]
    %v2638 = vld [vmem:[%s2292 + $0x46] sm:$0xff]
    %v2639 = vld [vmem:[%s2292 + $0x4e] sm:$0x1]
    %v2640 = vld [vmem:[%s2292 + $0x56] sm:$0xff]
    %v2641 = vld [vmem:[%s2292 + $0x5e] sm:$0x1]
    %v2642 = vld [vmem:[%s2292 + $0x66] sm:$0xff]
    %v2643 = vld [vmem:[%s2292 + $0x6e] sm:$0x1]
    %v2644 = vld [vmem:[%s2292 + $0x76] sm:$0xff]
    %v2645 = vld [vmem:[%s2292 + $0x7e] sm:$0x1]
    %v2646 = vld [vmem:[%s2292 + $0x86] sm:$0xff]
    %v2647 = vld [vmem:[%s2292 + $0x8e] sm:$0x1]
    %v2648 = vld [vmem:[%s2311 + $0x6] sm:$0x1]
    %v2649 = vperm.slane %v2648, 0
    %v2650 = vmul.f32 %v2630, %v2649
    %v2651 = vmul.f32 %v2631, %v2649
    %v2652 = vmul.f32 %v2632, %v2649
    %v2653 = vmul.f32 %v2633, %v2649
    %v2654 = vmul.f32 %v2634, %v2649
    %v2655 = vmul.f32 %v2635, %v2649
    %v2656 = vmul.f32 %v2636, %v2649
    %v2657 = vmul.f32 %v2637, %v2649
    %v2658 = vmul.f32 %v2638, %v2649
    %v2659 = vmul.f32 %v2639, %v2649
    %v2660 = vmul.f32 %v2640, %v2649
    %v2661 = vmul.f32 %v2641, %v2649
    %v2662 = vmul.f32 %v2642, %v2649
    %v2663 = vmul.f32 %v2643, %v2649
    %v2664 = vmul.f32 %v2644, %v2649
    %v2665 = vmul.f32 %v2645, %v2649
    %v2666 = vmul.f32 %v2646, %v2649
    %v2667 = vmul.f32 %v2647, %v2649
    %v2668 = vadd.f32 %v2612, %v2650
    %v2669 = vadd.f32 %v2613, %v2651
    %v2670 = vadd.f32 %v2614, %v2652
    %v2671 = vadd.f32 %v2615, %v2653
    %v2672 = vadd.f32 %v2616, %v2654
    %v2673 = vadd.f32 %v2617, %v2655
    %v2674 = vadd.f32 %v2618, %v2656
    %v2675 = vadd.f32 %v2619, %v2657
    %v2676 = vadd.f32 %v2620, %v2658
    %v2677 = vadd.f32 %v2621, %v2659
    %v2678 = vadd.f32 %v2622, %v2660
    %v2679 = vadd.f32 %v2623, %v2661
    %v2680 = vadd.f32 %v2624, %v2662
    %v2681 = vadd.f32 %v2625, %v2663
    %v2682 = vadd.f32 %v2626, %v2664
    %v2683 = vadd.f32 %v2627, %v2665
    %v2684 = vadd.f32 %v2628, %v2666
    %v2685 = vadd.f32 %v2629, %v2667
    %v2686 = vld [vmem:[%s2292 + $0x7] sm:$0xff]
    %v2687 = vld [vmem:[%s2292 + $0xf] sm:$0x1]
    %v2688 = vld [vmem:[%s2292 + $0x17] sm:$0xff]
    %v2689 = vld [vmem:[%s2292 + $0x1f] sm:$0x1]
    %v2690 = vld [vmem:[%s2292 + $0x27] sm:$0xff]
    %v2691 = vld [vmem:[%s2292 + $0x2f] sm:$0x1]
    %v2692 = vld [vmem:[%s2292 + $0x37] sm:$0xff]
    %v2693 = vld [vmem:[%s2292 + $0x3f] sm:$0x1]
    %v2694 = vld [vmem:[%s2292 + $0x47] sm:$0xff]
    %v2695 = vld [vmem:[%s2292 + $0x4f] sm:$0x1]
    %v2696 = vld [vmem:[%s2292 + $0x57] sm:$0xff]
    %v2697 = vld [vmem:[%s2292 + $0x5f] sm:$0x1]
    %v2698 = vld [vmem:[%s2292 + $0x67] sm:$0xff]
    %v2699 = vld [vmem:[%s2292 + $0x6f] sm:$0x1]
    %v2700 = vld [vmem:[%s2292 + $0x77] sm:$0xff]
    %v2701 = vld [vmem:[%s2292 + $0x7f] sm:$0x1]
    %v2702 = vld [vmem:[%s2292 + $0x87] sm:$0xff]
    %v2703 = vld [vmem:[%s2292 + $0x8f] sm:$0x1]
    %v2704 = vld [vmem:[%s2311 + $0x7] sm:$0x1]
    %v2705 = vperm.slane %v2704, 0
    %v2706 = vmul.f32 %v2686, %v2705
    %v2707 = vmul.f32 %v2687, %v2705
    %v2708 = vmul.f32 %v2688, %v2705
    %v2709 = vmul.f32 %v2689, %v2705
    %v2710 = vmul.f32 %v2690, %v2705
    %v2711 = vmul.f32 %v2691, %v2705
    %v2712 = vmul.f32 %v2692, %v2705
    %v2713 = vmul.f32 %v2693, %v2705
    %v2714 = vmul.f32 %v2694, %v2705
    %v2715 = vmul.f32 %v2695, %v2705
    %v2716 = vmul.f32 %v2696, %v2705
    %v2717 = vmul.f32 %v2697, %v2705
    %v2718 = vmul.f32 %v2698, %v2705
    %v2719 = vmul.f32 %v2699, %v2705
    %v2720 = vmul.f32 %v2700, %v2705
    %v2721 = vmul.f32 %v2701, %v2705
    %v2722 = vmul.f32 %v2702, %v2705
    %v2723 = vmul.f32 %v2703, %v2705
    %v2724 = vadd.f32 %v2668, %v2706
    %v2725 = vadd.f32 %v2669, %v2707
    %v2726 = vadd.f32 %v2670, %v2708
    %v2727 = vadd.f32 %v2671, %v2709
    %v2728 = vadd.f32 %v2672, %v2710
    %v2729 = vadd.f32 %v2673, %v2711
    %v2730 = vadd.f32 %v2674, %v2712
    %v2731 = vadd.f32 %v2675, %v2713
    %v2732 = vadd.f32 %v2676, %v2714
    %v2733 = vadd.f32 %v2677, %v2715
    %v2734 = vadd.f32 %v2678, %v2716
    %v2735 = vadd.f32 %v2679, %v2717
    %v2736 = vadd.f32 %v2680, %v2718
    %v2737 = vadd.f32 %v2681, %v2719
    %v2738 = vadd.f32 %v2682, %v2720
    %v2739 = vadd.f32 %v2683, %v2721
    %v2740 = vadd.f32 %v2684, %v2722
    %v2741 = vadd.f32 %v2685, %v2723
    %s2742 = scalar_lea.vmem [#allocation2], 96
    %v2743 = vld [vmem:[%s2742] sm:$0xff]
    %v2744 = vld [vmem:[%s2742 + $0x8] sm:$0x1]
    %v2745 = vld [vmem:[%s2742 + $0x10] sm:$0xff]
    %v2746 = vld [vmem:[%s2742 + $0x18] sm:$0x1]
    %v2747 = vld [vmem:[%s2742 + $0x20] sm:$0xff]
    %v2748 = vld [vmem:[%s2742 + $0x28] sm:$0x1]
    %v2749 = vld [vmem:[%s2742 + $0x30] sm:$0xff]
    %v2750 = vld [vmem:[%s2742 + $0x38] sm:$0x1]
    %v2751 = vld [vmem:[%s2742 + $0x40] sm:$0xff]
    %v2752 = vld [vmem:[%s2742 + $0x48] sm:$0x1]
    %v2753 = vld [vmem:[%s2742 + $0x50] sm:$0xff]
    %v2754 = vld [vmem:[%s2742 + $0x58] sm:$0x1]
    %v2755 = vld [vmem:[%s2742 + $0x60] sm:$0xff]
    %v2756 = vld [vmem:[%s2742 + $0x68] sm:$0x1]
    %v2757 = vld [vmem:[%s2742 + $0x70] sm:$0xff]
    %v2758 = vld [vmem:[%s2742 + $0x78] sm:$0x1]
    %v2759 = vld [vmem:[%s2742 + $0x80] sm:$0xff]
    %v2760 = vld [vmem:[%s2742 + $0x88] sm:$0x1]
    %s2761 = scalar_lea.vmem [#allocation5], 48
    %v2762 = vld [vmem:[%s2761] sm:$0x1]
    %v2763 = vperm.slane %v2762, 0
    %v2764 = vmul.f32 %v2743, %v2763
    %v2765 = vmul.f32 %v2744, %v2763
    %v2766 = vmul.f32 %v2745, %v2763
    %v2767 = vmul.f32 %v2746, %v2763
    %v2768 = vmul.f32 %v2747, %v2763
    %v2769 = vmul.f32 %v2748, %v2763
    %v2770 = vmul.f32 %v2749, %v2763
    %v2771 = vmul.f32 %v2750, %v2763
    %v2772 = vmul.f32 %v2751, %v2763
    %v2773 = vmul.f32 %v2752, %v2763
    %v2774 = vmul.f32 %v2753, %v2763
    %v2775 = vmul.f32 %v2754, %v2763
    %v2776 = vmul.f32 %v2755, %v2763
    %v2777 = vmul.f32 %v2756, %v2763
    %v2778 = vmul.f32 %v2757, %v2763
    %v2779 = vmul.f32 %v2758, %v2763
    %v2780 = vmul.f32 %v2759, %v2763
    %v2781 = vmul.f32 %v2760, %v2763
    %v2782 = vadd.f32 %v2724, %v2764
    %v2783 = vadd.f32 %v2725, %v2765
    %v2784 = vadd.f32 %v2726, %v2766
    %v2785 = vadd.f32 %v2727, %v2767
    %v2786 = vadd.f32 %v2728, %v2768
    %v2787 = vadd.f32 %v2729, %v2769
    %v2788 = vadd.f32 %v2730, %v2770
    %v2789 = vadd.f32 %v2731, %v2771
    %v2790 = vadd.f32 %v2732, %v2772
    %v2791 = vadd.f32 %v2733, %v2773
    %v2792 = vadd.f32 %v2734, %v2774
    %v2793 = vadd.f32 %v2735, %v2775
    %v2794 = vadd.f32 %v2736, %v2776
    %v2795 = vadd.f32 %v2737, %v2777
    %v2796 = vadd.f32 %v2738, %v2778
    %v2797 = vadd.f32 %v2739, %v2779
    %v2798 = vadd.f32 %v2740, %v2780
    %v2799 = vadd.f32 %v2741, %v2781
    %v2800 = vld [vmem:[%s2742 + $0x1] sm:$0xff]
    %v2801 = vld [vmem:[%s2742 + $0x9] sm:$0x1]
    %v2802 = vld [vmem:[%s2742 + $0x11] sm:$0xff]
    %v2803 = vld [vmem:[%s2742 + $0x19] sm:$0x1]
    %v2804 = vld [vmem:[%s2742 + $0x21] sm:$0xff]
    %v2805 = vld [vmem:[%s2742 + $0x29] sm:$0x1]
    %v2806 = vld [vmem:[%s2742 + $0x31] sm:$0xff]
    %v2807 = vld [vmem:[%s2742 + $0x39] sm:$0x1]
    %v2808 = vld [vmem:[%s2742 + $0x41] sm:$0xff]
    %v2809 = vld [vmem:[%s2742 + $0x49] sm:$0x1]
    %v2810 = vld [vmem:[%s2742 + $0x51] sm:$0xff]
    %v2811 = vld [vmem:[%s2742 + $0x59] sm:$0x1]
    %v2812 = vld [vmem:[%s2742 + $0x61] sm:$0xff]
    %v2813 = vld [vmem:[%s2742 + $0x69] sm:$0x1]
    %v2814 = vld [vmem:[%s2742 + $0x71] sm:$0xff]
    %v2815 = vld [vmem:[%s2742 + $0x79] sm:$0x1]
    %v2816 = vld [vmem:[%s2742 + $0x81] sm:$0xff]
    %v2817 = vld [vmem:[%s2742 + $0x89] sm:$0x1]
    %v2818 = vld [vmem:[%s2761 + $0x1] sm:$0x1]
    %v2819 = vperm.slane %v2818, 0
    %v2820 = vmul.f32 %v2800, %v2819
    %v2821 = vmul.f32 %v2801, %v2819
    %v2822 = vmul.f32 %v2802, %v2819
    %v2823 = vmul.f32 %v2803, %v2819
    %v2824 = vmul.f32 %v2804, %v2819
    %v2825 = vmul.f32 %v2805, %v2819
    %v2826 = vmul.f32 %v2806, %v2819
    %v2827 = vmul.f32 %v2807, %v2819
    %v2828 = vmul.f32 %v2808, %v2819
    %v2829 = vmul.f32 %v2809, %v2819
    %v2830 = vmul.f32 %v2810, %v2819
    %v2831 = vmul.f32 %v2811, %v2819
    %v2832 = vmul.f32 %v2812, %v2819
    %v2833 = vmul.f32 %v2813, %v2819
    %v2834 = vmul.f32 %v2814, %v2819
    %v2835 = vmul.f32 %v2815, %v2819
    %v2836 = vmul.f32 %v2816, %v2819
    %v2837 = vmul.f32 %v2817, %v2819
    %v2838 = vadd.f32 %v2782, %v2820
    %v2839 = vadd.f32 %v2783, %v2821
    %v2840 = vadd.f32 %v2784, %v2822
    %v2841 = vadd.f32 %v2785, %v2823
    %v2842 = vadd.f32 %v2786, %v2824
    %v2843 = vadd.f32 %v2787, %v2825
    %v2844 = vadd.f32 %v2788, %v2826
    %v2845 = vadd.f32 %v2789, %v2827
    %v2846 = vadd.f32 %v2790, %v2828
    %v2847 = vadd.f32 %v2791, %v2829
    %v2848 = vadd.f32 %v2792, %v2830
    %v2849 = vadd.f32 %v2793, %v2831
    %v2850 = vadd.f32 %v2794, %v2832
    %v2851 = vadd.f32 %v2795, %v2833
    %v2852 = vadd.f32 %v2796, %v2834
    %v2853 = vadd.f32 %v2797, %v2835
    %v2854 = vadd.f32 %v2798, %v2836
    %v2855 = vadd.f32 %v2799, %v2837
    %v2856 = vld [vmem:[%s2742 + $0x2] sm:$0xff]
    %v2857 = vld [vmem:[%s2742 + $0xa] sm:$0x1]
    %v2858 = vld [vmem:[%s2742 + $0x12] sm:$0xff]
    %v2859 = vld [vmem:[%s2742 + $0x1a] sm:$0x1]
    %v2860 = vld [vmem:[%s2742 + $0x22] sm:$0xff]
    %v2861 = vld [vmem:[%s2742 + $0x2a] sm:$0x1]
    %v2862 = vld [vmem:[%s2742 + $0x32] sm:$0xff]
    %v2863 = vld [vmem:[%s2742 + $0x3a] sm:$0x1]
    %v2864 = vld [vmem:[%s2742 + $0x42] sm:$0xff]
    %v2865 = vld [vmem:[%s2742 + $0x4a] sm:$0x1]
    %v2866 = vld [vmem:[%s2742 + $0x52] sm:$0xff]
    %v2867 = vld [vmem:[%s2742 + $0x5a] sm:$0x1]
    %v2868 = vld [vmem:[%s2742 + $0x62] sm:$0xff]
    %v2869 = vld [vmem:[%s2742 + $0x6a] sm:$0x1]
    %v2870 = vld [vmem:[%s2742 + $0x72] sm:$0xff]
    %v2871 = vld [vmem:[%s2742 + $0x7a] sm:$0x1]
    %v2872 = vld [vmem:[%s2742 + $0x82] sm:$0xff]
    %v2873 = vld [vmem:[%s2742 + $0x8a] sm:$0x1]
    %v2874 = vld [vmem:[%s2761 + $0x2] sm:$0x1]
    %v2875 = vperm.slane %v2874, 0
    %v2876 = vmul.f32 %v2856, %v2875
    %v2877 = vmul.f32 %v2857, %v2875
    %v2878 = vmul.f32 %v2858, %v2875
    %v2879 = vmul.f32 %v2859, %v2875
    %v2880 = vmul.f32 %v2860, %v2875
    %v2881 = vmul.f32 %v2861, %v2875
    %v2882 = vmul.f32 %v2862, %v2875
    %v2883 = vmul.f32 %v2863, %v2875
    %v2884 = vmul.f32 %v2864, %v2875
    %v2885 = vmul.f32 %v2865, %v2875
    %v2886 = vmul.f32 %v2866, %v2875
    %v2887 = vmul.f32 %v2867, %v2875
    %v2888 = vmul.f32 %v2868, %v2875
    %v2889 = vmul.f32 %v2869, %v2875
    %v2890 = vmul.f32 %v2870, %v2875
    %v2891 = vmul.f32 %v2871, %v2875
    %v2892 = vmul.f32 %v2872, %v2875
    %v2893 = vmul.f32 %v2873, %v2875
    %v2894 = vadd.f32 %v2838, %v2876
    %v2895 = vadd.f32 %v2839, %v2877
    %v2896 = vadd.f32 %v2840, %v2878
    %v2897 = vadd.f32 %v2841, %v2879
    %v2898 = vadd.f32 %v2842, %v2880
    %v2899 = vadd.f32 %v2843, %v2881
    %v2900 = vadd.f32 %v2844, %v2882
    %v2901 = vadd.f32 %v2845, %v2883
    %v2902 = vadd.f32 %v2846, %v2884
    %v2903 = vadd.f32 %v2847, %v2885
    %v2904 = vadd.f32 %v2848, %v2886
    %v2905 = vadd.f32 %v2849, %v2887
    %v2906 = vadd.f32 %v2850, %v2888
    %v2907 = vadd.f32 %v2851, %v2889
    %v2908 = vadd.f32 %v2852, %v2890
    %v2909 = vadd.f32 %v2853, %v2891
    %v2910 = vadd.f32 %v2854, %v2892
    %v2911 = vadd.f32 %v2855, %v2893
    %v2912 = vld [vmem:[%s2742 + $0x3] sm:$0xff]
    %v2913 = vld [vmem:[%s2742 + $0xb] sm:$0x1]
    %v2914 = vld [vmem:[%s2742 + $0x13] sm:$0xff]
    %v2915 = vld [vmem:[%s2742 + $0x1b] sm:$0x1]
    %v2916 = vld [vmem:[%s2742 + $0x23] sm:$0xff]
    %v2917 = vld [vmem:[%s2742 + $0x2b] sm:$0x1]
    %v2918 = vld [vmem:[%s2742 + $0x33] sm:$0xff]
    %v2919 = vld [vmem:[%s2742 + $0x3b] sm:$0x1]
    %v2920 = vld [vmem:[%s2742 + $0x43] sm:$0xff]
    %v2921 = vld [vmem:[%s2742 + $0x4b] sm:$0x1]
    %v2922 = vld [vmem:[%s2742 + $0x53] sm:$0xff]
    %v2923 = vld [vmem:[%s2742 + $0x5b] sm:$0x1]
    %v2924 = vld [vmem:[%s2742 + $0x63] sm:$0xff]
    %v2925 = vld [vmem:[%s2742 + $0x6b] sm:$0x1]
    %v2926 = vld [vmem:[%s2742 + $0x73] sm:$0xff]
    %v2927 = vld [vmem:[%s2742 + $0x7b] sm:$0x1]
    %v2928 = vld [vmem:[%s2742 + $0x83] sm:$0xff]
    %v2929 = vld [vmem:[%s2742 + $0x8b] sm:$0x1]
    %v2930 = vld [vmem:[%s2761 + $0x3] sm:$0x1]
    %v2931 = vperm.slane %v2930, 0
    %v2932 = vmul.f32 %v2912, %v2931
    %v2933 = vmul.f32 %v2913, %v2931
    %v2934 = vmul.f32 %v2914, %v2931
    %v2935 = vmul.f32 %v2915, %v2931
    %v2936 = vmul.f32 %v2916, %v2931
    %v2937 = vmul.f32 %v2917, %v2931
    %v2938 = vmul.f32 %v2918, %v2931
    %v2939 = vmul.f32 %v2919, %v2931
    %v2940 = vmul.f32 %v2920, %v2931
    %v2941 = vmul.f32 %v2921, %v2931
    %v2942 = vmul.f32 %v2922, %v2931
    %v2943 = vmul.f32 %v2923, %v2931
    %v2944 = vmul.f32 %v2924, %v2931
    %v2945 = vmul.f32 %v2925, %v2931
    %v2946 = vmul.f32 %v2926, %v2931
    %v2947 = vmul.f32 %v2927, %v2931
    %v2948 = vmul.f32 %v2928, %v2931
    %v2949 = vmul.f32 %v2929, %v2931
    %v2950 = vadd.f32 %v2894, %v2932
    %v2951 = vadd.f32 %v2895, %v2933
    %v2952 = vadd.f32 %v2896, %v2934
    %v2953 = vadd.f32 %v2897, %v2935
    %v2954 = vadd.f32 %v2898, %v2936
    %v2955 = vadd.f32 %v2899, %v2937
    %v2956 = vadd.f32 %v2900, %v2938
    %v2957 = vadd.f32 %v2901, %v2939
    %v2958 = vadd.f32 %v2902, %v2940
    %v2959 = vadd.f32 %v2903, %v2941
    %v2960 = vadd.f32 %v2904, %v2942
    %v2961 = vadd.f32 %v2905, %v2943
    %v2962 = vadd.f32 %v2906, %v2944
    %v2963 = vadd.f32 %v2907, %v2945
    %v2964 = vadd.f32 %v2908, %v2946
    %v2965 = vadd.f32 %v2909, %v2947
    %v2966 = vadd.f32 %v2910, %v2948
    %v2967 = vadd.f32 %v2911, %v2949
    %v2968 = vld [vmem:[%s2742 + $0x4] sm:$0xff]
    %v2969 = vld [vmem:[%s2742 + $0xc] sm:$0x1]
    %v2970 = vld [vmem:[%s2742 + $0x14] sm:$0xff]
    %v2971 = vld [vmem:[%s2742 + $0x1c] sm:$0x1]
    %v2972 = vld [vmem:[%s2742 + $0x24] sm:$0xff]
    %v2973 = vld [vmem:[%s2742 + $0x2c] sm:$0x1]
    %v2974 = vld [vmem:[%s2742 + $0x34] sm:$0xff]
    %v2975 = vld [vmem:[%s2742 + $0x3c] sm:$0x1]
    %v2976 = vld [vmem:[%s2742 + $0x44] sm:$0xff]
    %v2977 = vld [vmem:[%s2742 + $0x4c] sm:$0x1]
    %v2978 = vld [vmem:[%s2742 + $0x54] sm:$0xff]
    %v2979 = vld [vmem:[%s2742 + $0x5c] sm:$0x1]
    %v2980 = vld [vmem:[%s2742 + $0x64] sm:$0xff]
    %v2981 = vld [vmem:[%s2742 + $0x6c] sm:$0x1]
    %v2982 = vld [vmem:[%s2742 + $0x74] sm:$0xff]
    %v2983 = vld [vmem:[%s2742 + $0x7c] sm:$0x1]
    %v2984 = vld [vmem:[%s2742 + $0x84] sm:$0xff]
    %v2985 = vld [vmem:[%s2742 + $0x8c] sm:$0x1]
    %v2986 = vld [vmem:[%s2761 + $0x4] sm:$0x1]
    %v2987 = vperm.slane %v2986, 0
    %v2988 = vmul.f32 %v2968, %v2987
    %v2989 = vmul.f32 %v2969, %v2987
    %v2990 = vmul.f32 %v2970, %v2987
    %v2991 = vmul.f32 %v2971, %v2987
    %v2992 = vmul.f32 %v2972, %v2987
    %v2993 = vmul.f32 %v2973, %v2987
    %v2994 = vmul.f32 %v2974, %v2987
    %v2995 = vmul.f32 %v2975, %v2987
    %v2996 = vmul.f32 %v2976, %v2987
    %v2997 = vmul.f32 %v2977, %v2987
    %v2998 = vmul.f32 %v2978, %v2987
    %v2999 = vmul.f32 %v2979, %v2987
    %v3000 = vmul.f32 %v2980, %v2987
    %v3001 = vmul.f32 %v2981, %v2987
    %v3002 = vmul.f32 %v2982, %v2987
    %v3003 = vmul.f32 %v2983, %v2987
    %v3004 = vmul.f32 %v2984, %v2987
    %v3005 = vmul.f32 %v2985, %v2987
    %v3006 = vadd.f32 %v2950, %v2988
    %v3007 = vadd.f32 %v2951, %v2989
    %v3008 = vadd.f32 %v2952, %v2990
    %v3009 = vadd.f32 %v2953, %v2991
    %v3010 = vadd.f32 %v2954, %v2992
    %v3011 = vadd.f32 %v2955, %v2993
    %v3012 = vadd.f32 %v2956, %v2994
    %v3013 = vadd.f32 %v2957, %v2995
    %v3014 = vadd.f32 %v2958, %v2996
    %v3015 = vadd.f32 %v2959, %v2997
    %v3016 = vadd.f32 %v2960, %v2998
    %v3017 = vadd.f32 %v2961, %v2999
    %v3018 = vadd.f32 %v2962, %v3000
    %v3019 = vadd.f32 %v2963, %v3001
    %v3020 = vadd.f32 %v2964, %v3002
    %v3021 = vadd.f32 %v2965, %v3003
    %v3022 = vadd.f32 %v2966, %v3004
    %v3023 = vadd.f32 %v2967, %v3005
    %v3024 = vld [vmem:[%s2742 + $0x5] sm:$0xff]
    %v3025 = vld [vmem:[%s2742 + $0xd] sm:$0x1]
    %v3026 = vld [vmem:[%s2742 + $0x15] sm:$0xff]
    %v3027 = vld [vmem:[%s2742 + $0x1d] sm:$0x1]
    %v3028 = vld [vmem:[%s2742 + $0x25] sm:$0xff]
    %v3029 = vld [vmem:[%s2742 + $0x2d] sm:$0x1]
    %v3030 = vld [vmem:[%s2742 + $0x35] sm:$0xff]
    %v3031 = vld [vmem:[%s2742 + $0x3d] sm:$0x1]
    %v3032 = vld [vmem:[%s2742 + $0x45] sm:$0xff]
    %v3033 = vld [vmem:[%s2742 + $0x4d] sm:$0x1]
    %v3034 = vld [vmem:[%s2742 + $0x55] sm:$0xff]
    %v3035 = vld [vmem:[%s2742 + $0x5d] sm:$0x1]
    %v3036 = vld [vmem:[%s2742 + $0x65] sm:$0xff]
    %v3037 = vld [vmem:[%s2742 + $0x6d] sm:$0x1]
    %v3038 = vld [vmem:[%s2742 + $0x75] sm:$0xff]
    %v3039 = vld [vmem:[%s2742 + $0x7d] sm:$0x1]
    %v3040 = vld [vmem:[%s2742 + $0x85] sm:$0xff]
    %v3041 = vld [vmem:[%s2742 + $0x8d] sm:$0x1]
    %v3042 = vld [vmem:[%s2761 + $0x5] sm:$0x1]
    %v3043 = vperm.slane %v3042, 0
    %v3044 = vmul.f32 %v3024, %v3043
    %v3045 = vmul.f32 %v3025, %v3043
    %v3046 = vmul.f32 %v3026, %v3043
    %v3047 = vmul.f32 %v3027, %v3043
    %v3048 = vmul.f32 %v3028, %v3043
    %v3049 = vmul.f32 %v3029, %v3043
    %v3050 = vmul.f32 %v3030, %v3043
    %v3051 = vmul.f32 %v3031, %v3043
    %v3052 = vmul.f32 %v3032, %v3043
    %v3053 = vmul.f32 %v3033, %v3043
    %v3054 = vmul.f32 %v3034, %v3043
    %v3055 = vmul.f32 %v3035, %v3043
    %v3056 = vmul.f32 %v3036, %v3043
    %v3057 = vmul.f32 %v3037, %v3043
    %v3058 = vmul.f32 %v3038, %v3043
    %v3059 = vmul.f32 %v3039, %v3043
    %v3060 = vmul.f32 %v3040, %v3043
    %v3061 = vmul.f32 %v3041, %v3043
    %v3062 = vadd.f32 %v3006, %v3044
    %v3063 = vadd.f32 %v3007, %v3045
    %v3064 = vadd.f32 %v3008, %v3046
    %v3065 = vadd.f32 %v3009, %v3047
    %v3066 = vadd.f32 %v3010, %v3048
    %v3067 = vadd.f32 %v3011, %v3049
    %v3068 = vadd.f32 %v3012, %v3050
    %v3069 = vadd.f32 %v3013, %v3051
    %v3070 = vadd.f32 %v3014, %v3052
    %v3071 = vadd.f32 %v3015, %v3053
    %v3072 = vadd.f32 %v3016, %v3054
    %v3073 = vadd.f32 %v3017, %v3055
    %v3074 = vadd.f32 %v3018, %v3056
    %v3075 = vadd.f32 %v3019, %v3057
    %v3076 = vadd.f32 %v3020, %v3058
    %v3077 = vadd.f32 %v3021, %v3059
    %v3078 = vadd.f32 %v3022, %v3060
    %v3079 = vadd.f32 %v3023, %v3061
    %v3080 = vld [vmem:[%s2742 + $0x6] sm:$0xff]
    %v3081 = vld [vmem:[%s2742 + $0xe] sm:$0x1]
    %v3082 = vld [vmem:[%s2742 + $0x16] sm:$0xff]
    %v3083 = vld [vmem:[%s2742 + $0x1e] sm:$0x1]
    %v3084 = vld [vmem:[%s2742 + $0x26] sm:$0xff]
    %v3085 = vld [vmem:[%s2742 + $0x2e] sm:$0x1]
    %v3086 = vld [vmem:[%s2742 + $0x36] sm:$0xff]
    %v3087 = vld [vmem:[%s2742 + $0x3e] sm:$0x1]
    %v3088 = vld [vmem:[%s2742 + $0x46] sm:$0xff]
    %v3089 = vld [vmem:[%s2742 + $0x4e] sm:$0x1]
    %v3090 = vld [vmem:[%s2742 + $0x56] sm:$0xff]
    %v3091 = vld [vmem:[%s2742 + $0x5e] sm:$0x1]
    %v3092 = vld [vmem:[%s2742 + $0x66] sm:$0xff]
    %v3093 = vld [vmem:[%s2742 + $0x6e] sm:$0x1]
    %v3094 = vld [vmem:[%s2742 + $0x76] sm:$0xff]
    %v3095 = vld [vmem:[%s2742 + $0x7e] sm:$0x1]
    %v3096 = vld [vmem:[%s2742 + $0x86] sm:$0xff]
    %v3097 = vld [vmem:[%s2742 + $0x8e] sm:$0x1]
    %v3098 = vld [vmem:[%s2761 + $0x6] sm:$0x1]
    %v3099 = vperm.slane %v3098, 0
    %v3100 = vmul.f32 %v3080, %v3099
    %v3101 = vmul.f32 %v3081, %v3099
    %v3102 = vmul.f32 %v3082, %v3099
    %v3103 = vmul.f32 %v3083, %v3099
    %v3104 = vmul.f32 %v3084, %v3099
    %v3105 = vmul.f32 %v3085, %v3099
    %v3106 = vmul.f32 %v3086, %v3099
    %v3107 = vmul.f32 %v3087, %v3099
    %v3108 = vmul.f32 %v3088, %v3099
    %v3109 = vmul.f32 %v3089, %v3099
    %v3110 = vmul.f32 %v3090, %v3099
    %v3111 = vmul.f32 %v3091, %v3099
    %v3112 = vmul.f32 %v3092, %v3099
    %v3113 = vmul.f32 %v3093, %v3099
    %v3114 = vmul.f32 %v3094, %v3099
    %v3115 = vmul.f32 %v3095, %v3099
    %v3116 = vmul.f32 %v3096, %v3099
    %v3117 = vmul.f32 %v3097, %v3099
    %v3118 = vadd.f32 %v3062, %v3100
    %v3119 = vadd.f32 %v3063, %v3101
    %v3120 = vadd.f32 %v3064, %v3102
    %v3121 = vadd.f32 %v3065, %v3103
    %v3122 = vadd.f32 %v3066, %v3104
    %v3123 = vadd.f32 %v3067, %v3105
    %v3124 = vadd.f32 %v3068, %v3106
    %v3125 = vadd.f32 %v3069, %v3107
    %v3126 = vadd.f32 %v3070, %v3108
    %v3127 = vadd.f32 %v3071, %v3109
    %v3128 = vadd.f32 %v3072, %v3110
    %v3129 = vadd.f32 %v3073, %v3111
    %v3130 = vadd.f32 %v3074, %v3112
    %v3131 = vadd.f32 %v3075, %v3113
    %v3132 = vadd.f32 %v3076, %v3114
    %v3133 = vadd.f32 %v3077, %v3115
    %v3134 = vadd.f32 %v3078, %v3116
    %v3135 = vadd.f32 %v3079, %v3117
    %v3136 = vld [vmem:[%s2742 + $0x7] sm:$0xff]
    %v3137 = vld [vmem:[%s2742 + $0xf] sm:$0x1]
    %v3138 = vld [vmem:[%s2742 + $0x17] sm:$0xff]
    %v3139 = vld [vmem:[%s2742 + $0x1f] sm:$0x1]
    %v3140 = vld [vmem:[%s2742 + $0x27] sm:$0xff]
    %v3141 = vld [vmem:[%s2742 + $0x2f] sm:$0x1]
    %v3142 = vld [vmem:[%s2742 + $0x37] sm:$0xff]
    %v3143 = vld [vmem:[%s2742 + $0x3f] sm:$0x1]
    %v3144 = vld [vmem:[%s2742 + $0x47] sm:$0xff]
    %v3145 = vld [vmem:[%s2742 + $0x4f] sm:$0x1]
    %v3146 = vld [vmem:[%s2742 + $0x57] sm:$0xff]
    %v3147 = vld [vmem:[%s2742 + $0x5f] sm:$0x1]
    %v3148 = vld [vmem:[%s2742 + $0x67] sm:$0xff]
    %v3149 = vld [vmem:[%s2742 + $0x6f] sm:$0x1]
    %v3150 = vld [vmem:[%s2742 + $0x77] sm:$0xff]
    %v3151 = vld [vmem:[%s2742 + $0x7f] sm:$0x1]
    %v3152 = vld [vmem:[%s2742 + $0x87] sm:$0xff]
    %v3153 = vld [vmem:[%s2742 + $0x8f] sm:$0x1]
    %v3154 = vld [vmem:[%s2761 + $0x7] sm:$0x1]
    %v3155 = vperm.slane %v3154, 0
    %v3156 = vmul.f32 %v3136, %v3155
    %v3157 = vmul.f32 %v3137, %v3155
    %v3158 = vmul.f32 %v3138, %v3155
    %v3159 = vmul.f32 %v3139, %v3155
    %v3160 = vmul.f32 %v3140, %v3155
    %v3161 = vmul.f32 %v3141, %v3155
    %v3162 = vmul.f32 %v3142, %v3155
    %v3163 = vmul.f32 %v3143, %v3155
    %v3164 = vmul.f32 %v3144, %v3155
    %v3165 = vmul.f32 %v3145, %v3155
    %v3166 = vmul.f32 %v3146, %v3155
    %v3167 = vmul.f32 %v3147, %v3155
    %v3168 = vmul.f32 %v3148, %v3155
    %v3169 = vmul.f32 %v3149, %v3155
    %v3170 = vmul.f32 %v3150, %v3155
    %v3171 = vmul.f32 %v3151, %v3155
    %v3172 = vmul.f32 %v3152, %v3155
    %v3173 = vmul.f32 %v3153, %v3155
    %v3174 = vadd.f32 %v3118, %v3156
    %v3175 = vadd.f32 %v3119, %v3157
    %v3176 = vadd.f32 %v3120, %v3158
    %v3177 = vadd.f32 %v3121, %v3159
    %v3178 = vadd.f32 %v3122, %v3160
    %v3179 = vadd.f32 %v3123, %v3161
    %v3180 = vadd.f32 %v3124, %v3162
    %v3181 = vadd.f32 %v3125, %v3163
    %v3182 = vadd.f32 %v3126, %v3164
    %v3183 = vadd.f32 %v3127, %v3165
    %v3184 = vadd.f32 %v3128, %v3166
    %v3185 = vadd.f32 %v3129, %v3167
    %v3186 = vadd.f32 %v3130, %v3168
    %v3187 = vadd.f32 %v3131, %v3169
    %v3188 = vadd.f32 %v3132, %v3170
    %v3189 = vadd.f32 %v3133, %v3171
    %v3190 = vadd.f32 %v3134, %v3172
    %v3191 = vadd.f32 %v3135, %v3173
    %s3192 = scalar_lea.vmem [#allocation2], 112
    %v3193 = vld [vmem:[%s3192] sm:$0xff]
    %v3194 = vld [vmem:[%s3192 + $0x8] sm:$0x1]
    %v3195 = vld [vmem:[%s3192 + $0x10] sm:$0xff]
    %v3196 = vld [vmem:[%s3192 + $0x18] sm:$0x1]
    %v3197 = vld [vmem:[%s3192 + $0x20] sm:$0xff]
    %v3198 = vld [vmem:[%s3192 + $0x28] sm:$0x1]
    %v3199 = vld [vmem:[%s3192 + $0x30] sm:$0xff]
    %v3200 = vld [vmem:[%s3192 + $0x38] sm:$0x1]
    %v3201 = vld [vmem:[%s3192 + $0x40] sm:$0xff]
    %v3202 = vld [vmem:[%s3192 + $0x48] sm:$0x1]
    %v3203 = vld [vmem:[%s3192 + $0x50] sm:$0xff]
    %v3204 = vld [vmem:[%s3192 + $0x58] sm:$0x1]
    %v3205 = vld [vmem:[%s3192 + $0x60] sm:$0xff]
    %v3206 = vld [vmem:[%s3192 + $0x68] sm:$0x1]
    %v3207 = vld [vmem:[%s3192 + $0x70] sm:$0xff]
    %v3208 = vld [vmem:[%s3192 + $0x78] sm:$0x1]
    %v3209 = vld [vmem:[%s3192 + $0x80] sm:$0xff]
    %v3210 = vld [vmem:[%s3192 + $0x88] sm:$0x1]
    %s3211 = scalar_lea.vmem [#allocation5], 56
    %v3212 = vld [vmem:[%s3211] sm:$0x1]
    %v3213 = vperm.slane %v3212, 0
    %v3214 = vmul.f32 %v3193, %v3213
    %v3215 = vmul.f32 %v3194, %v3213
    %v3216 = vmul.f32 %v3195, %v3213
    %v3217 = vmul.f32 %v3196, %v3213
    %v3218 = vmul.f32 %v3197, %v3213
    %v3219 = vmul.f32 %v3198, %v3213
    %v3220 = vmul.f32 %v3199, %v3213
    %v3221 = vmul.f32 %v3200, %v3213
    %v3222 = vmul.f32 %v3201, %v3213
    %v3223 = vmul.f32 %v3202, %v3213
    %v3224 = vmul.f32 %v3203, %v3213
    %v3225 = vmul.f32 %v3204, %v3213
    %v3226 = vmul.f32 %v3205, %v3213
    %v3227 = vmul.f32 %v3206, %v3213
    %v3228 = vmul.f32 %v3207, %v3213
    %v3229 = vmul.f32 %v3208, %v3213
    %v3230 = vmul.f32 %v3209, %v3213
    %v3231 = vmul.f32 %v3210, %v3213
    %v3232 = vadd.f32 %v3174, %v3214
    %v3233 = vadd.f32 %v3175, %v3215
    %v3234 = vadd.f32 %v3176, %v3216
    %v3235 = vadd.f32 %v3177, %v3217
    %v3236 = vadd.f32 %v3178, %v3218
    %v3237 = vadd.f32 %v3179, %v3219
    %v3238 = vadd.f32 %v3180, %v3220
    %v3239 = vadd.f32 %v3181, %v3221
    %v3240 = vadd.f32 %v3182, %v3222
    %v3241 = vadd.f32 %v3183, %v3223
    %v3242 = vadd.f32 %v3184, %v3224
    %v3243 = vadd.f32 %v3185, %v3225
    %v3244 = vadd.f32 %v3186, %v3226
    %v3245 = vadd.f32 %v3187, %v3227
    %v3246 = vadd.f32 %v3188, %v3228
    %v3247 = vadd.f32 %v3189, %v3229
    %v3248 = vadd.f32 %v3190, %v3230
    %v3249 = vadd.f32 %v3191, %v3231
    %v3250 = vld [vmem:[%s3192 + $0x1] sm:$0xff]
    %v3251 = vld [vmem:[%s3192 + $0x9] sm:$0x1]
    %v3252 = vld [vmem:[%s3192 + $0x11] sm:$0xff]
    %v3253 = vld [vmem:[%s3192 + $0x19] sm:$0x1]
    %v3254 = vld [vmem:[%s3192 + $0x21] sm:$0xff]
    %v3255 = vld [vmem:[%s3192 + $0x29] sm:$0x1]
    %v3256 = vld [vmem:[%s3192 + $0x31] sm:$0xff]
    %v3257 = vld [vmem:[%s3192 + $0x39] sm:$0x1]
    %v3258 = vld [vmem:[%s3192 + $0x41] sm:$0xff]
    %v3259 = vld [vmem:[%s3192 + $0x49] sm:$0x1]
    %v3260 = vld [vmem:[%s3192 + $0x51] sm:$0xff]
    %v3261 = vld [vmem:[%s3192 + $0x59] sm:$0x1]
    %v3262 = vld [vmem:[%s3192 + $0x61] sm:$0xff]
    %v3263 = vld [vmem:[%s3192 + $0x69] sm:$0x1]
    %v3264 = vld [vmem:[%s3192 + $0x71] sm:$0xff]
    %v3265 = vld [vmem:[%s3192 + $0x79] sm:$0x1]
    %v3266 = vld [vmem:[%s3192 + $0x81] sm:$0xff]
    %v3267 = vld [vmem:[%s3192 + $0x89] sm:$0x1]
    %v3268 = vld [vmem:[%s3211 + $0x1] sm:$0x1]
    %v3269 = vperm.slane %v3268, 0
    %v3270 = vmul.f32 %v3250, %v3269
    %v3271 = vmul.f32 %v3251, %v3269
    %v3272 = vmul.f32 %v3252, %v3269
    %v3273 = vmul.f32 %v3253, %v3269
    %v3274 = vmul.f32 %v3254, %v3269
    %v3275 = vmul.f32 %v3255, %v3269
    %v3276 = vmul.f32 %v3256, %v3269
    %v3277 = vmul.f32 %v3257, %v3269
    %v3278 = vmul.f32 %v3258, %v3269
    %v3279 = vmul.f32 %v3259, %v3269
    %v3280 = vmul.f32 %v3260, %v3269
    %v3281 = vmul.f32 %v3261, %v3269
    %v3282 = vmul.f32 %v3262, %v3269
    %v3283 = vmul.f32 %v3263, %v3269
    %v3284 = vmul.f32 %v3264, %v3269
    %v3285 = vmul.f32 %v3265, %v3269
    %v3286 = vmul.f32 %v3266, %v3269
    %v3287 = vmul.f32 %v3267, %v3269
    %v3288 = vadd.f32 %v3232, %v3270
    %v3289 = vadd.f32 %v3233, %v3271
    %v3290 = vadd.f32 %v3234, %v3272
    %v3291 = vadd.f32 %v3235, %v3273
    %v3292 = vadd.f32 %v3236, %v3274
    %v3293 = vadd.f32 %v3237, %v3275
    %v3294 = vadd.f32 %v3238, %v3276
    %v3295 = vadd.f32 %v3239, %v3277
    %v3296 = vadd.f32 %v3240, %v3278
    %v3297 = vadd.f32 %v3241, %v3279
    %v3298 = vadd.f32 %v3242, %v3280
    %v3299 = vadd.f32 %v3243, %v3281
    %v3300 = vadd.f32 %v3244, %v3282
    %v3301 = vadd.f32 %v3245, %v3283
    %v3302 = vadd.f32 %v3246, %v3284
    %v3303 = vadd.f32 %v3247, %v3285
    %v3304 = vadd.f32 %v3248, %v3286
    %v3305 = vadd.f32 %v3249, %v3287
    %v3306 = vld [vmem:[%s3192 + $0x2] sm:$0xff]
    %v3307 = vld [vmem:[%s3192 + $0xa] sm:$0x1]
    %v3308 = vld [vmem:[%s3192 + $0x12] sm:$0xff]
    %v3309 = vld [vmem:[%s3192 + $0x1a] sm:$0x1]
    %v3310 = vld [vmem:[%s3192 + $0x22] sm:$0xff]
    %v3311 = vld [vmem:[%s3192 + $0x2a] sm:$0x1]
    %v3312 = vld [vmem:[%s3192 + $0x32] sm:$0xff]
    %v3313 = vld [vmem:[%s3192 + $0x3a] sm:$0x1]
    %v3314 = vld [vmem:[%s3192 + $0x42] sm:$0xff]
    %v3315 = vld [vmem:[%s3192 + $0x4a] sm:$0x1]
    %v3316 = vld [vmem:[%s3192 + $0x52] sm:$0xff]
    %v3317 = vld [vmem:[%s3192 + $0x5a] sm:$0x1]
    %v3318 = vld [vmem:[%s3192 + $0x62] sm:$0xff]
    %v3319 = vld [vmem:[%s3192 + $0x6a] sm:$0x1]
    %v3320 = vld [vmem:[%s3192 + $0x72] sm:$0xff]
    %v3321 = vld [vmem:[%s3192 + $0x7a] sm:$0x1]
    %v3322 = vld [vmem:[%s3192 + $0x82] sm:$0xff]
    %v3323 = vld [vmem:[%s3192 + $0x8a] sm:$0x1]
    %v3324 = vld [vmem:[%s3211 + $0x2] sm:$0x1]
    %v3325 = vperm.slane %v3324, 0
    %v3326 = vmul.f32 %v3306, %v3325
    %v3327 = vmul.f32 %v3307, %v3325
    %v3328 = vmul.f32 %v3308, %v3325
    %v3329 = vmul.f32 %v3309, %v3325
    %v3330 = vmul.f32 %v3310, %v3325
    %v3331 = vmul.f32 %v3311, %v3325
    %v3332 = vmul.f32 %v3312, %v3325
    %v3333 = vmul.f32 %v3313, %v3325
    %v3334 = vmul.f32 %v3314, %v3325
    %v3335 = vmul.f32 %v3315, %v3325
    %v3336 = vmul.f32 %v3316, %v3325
    %v3337 = vmul.f32 %v3317, %v3325
    %v3338 = vmul.f32 %v3318, %v3325
    %v3339 = vmul.f32 %v3319, %v3325
    %v3340 = vmul.f32 %v3320, %v3325
    %v3341 = vmul.f32 %v3321, %v3325
    %v3342 = vmul.f32 %v3322, %v3325
    %v3343 = vmul.f32 %v3323, %v3325
    %v3344 = vadd.f32 %v3288, %v3326
    %v3345 = vadd.f32 %v3289, %v3327
    %v3346 = vadd.f32 %v3290, %v3328
    %v3347 = vadd.f32 %v3291, %v3329
    %v3348 = vadd.f32 %v3292, %v3330
    %v3349 = vadd.f32 %v3293, %v3331
    %v3350 = vadd.f32 %v3294, %v3332
    %v3351 = vadd.f32 %v3295, %v3333
    %v3352 = vadd.f32 %v3296, %v3334
    %v3353 = vadd.f32 %v3297, %v3335
    %v3354 = vadd.f32 %v3298, %v3336
    %v3355 = vadd.f32 %v3299, %v3337
    %v3356 = vadd.f32 %v3300, %v3338
    %v3357 = vadd.f32 %v3301, %v3339
    %v3358 = vadd.f32 %v3302, %v3340
    %v3359 = vadd.f32 %v3303, %v3341
    %v3360 = vadd.f32 %v3304, %v3342
    %v3361 = vadd.f32 %v3305, %v3343
    %v3362 = vld [vmem:[%s3192 + $0x3] sm:$0xff]
    %v3363 = vld [vmem:[%s3192 + $0xb] sm:$0x1]
    %v3364 = vld [vmem:[%s3192 + $0x13] sm:$0xff]
    %v3365 = vld [vmem:[%s3192 + $0x1b] sm:$0x1]
    %v3366 = vld [vmem:[%s3192 + $0x23] sm:$0xff]
    %v3367 = vld [vmem:[%s3192 + $0x2b] sm:$0x1]
    %v3368 = vld [vmem:[%s3192 + $0x33] sm:$0xff]
    %v3369 = vld [vmem:[%s3192 + $0x3b] sm:$0x1]
    %v3370 = vld [vmem:[%s3192 + $0x43] sm:$0xff]
    %v3371 = vld [vmem:[%s3192 + $0x4b] sm:$0x1]
    %v3372 = vld [vmem:[%s3192 + $0x53] sm:$0xff]
    %v3373 = vld [vmem:[%s3192 + $0x5b] sm:$0x1]
    %v3374 = vld [vmem:[%s3192 + $0x63] sm:$0xff]
    %v3375 = vld [vmem:[%s3192 + $0x6b] sm:$0x1]
    %v3376 = vld [vmem:[%s3192 + $0x73] sm:$0xff]
    %v3377 = vld [vmem:[%s3192 + $0x7b] sm:$0x1]
    %v3378 = vld [vmem:[%s3192 + $0x83] sm:$0xff]
    %v3379 = vld [vmem:[%s3192 + $0x8b] sm:$0x1]
    %v3380 = vld [vmem:[%s3211 + $0x3] sm:$0x1]
    %v3381 = vperm.slane %v3380, 0
    %v3382 = vmul.f32 %v3362, %v3381
    %v3383 = vmul.f32 %v3363, %v3381
    %v3384 = vmul.f32 %v3364, %v3381
    %v3385 = vmul.f32 %v3365, %v3381
    %v3386 = vmul.f32 %v3366, %v3381
    %v3387 = vmul.f32 %v3367, %v3381
    %v3388 = vmul.f32 %v3368, %v3381
    %v3389 = vmul.f32 %v3369, %v3381
    %v3390 = vmul.f32 %v3370, %v3381
    %v3391 = vmul.f32 %v3371, %v3381
    %v3392 = vmul.f32 %v3372, %v3381
    %v3393 = vmul.f32 %v3373, %v3381
    %v3394 = vmul.f32 %v3374, %v3381
    %v3395 = vmul.f32 %v3375, %v3381
    %v3396 = vmul.f32 %v3376, %v3381
    %v3397 = vmul.f32 %v3377, %v3381
    %v3398 = vmul.f32 %v3378, %v3381
    %v3399 = vmul.f32 %v3379, %v3381
    %v3400 = vadd.f32 %v3344, %v3382
    %v3401 = vadd.f32 %v3345, %v3383
    %v3402 = vadd.f32 %v3346, %v3384
    %v3403 = vadd.f32 %v3347, %v3385
    %v3404 = vadd.f32 %v3348, %v3386
    %v3405 = vadd.f32 %v3349, %v3387
    %v3406 = vadd.f32 %v3350, %v3388
    %v3407 = vadd.f32 %v3351, %v3389
    %v3408 = vadd.f32 %v3352, %v3390
    %v3409 = vadd.f32 %v3353, %v3391
    %v3410 = vadd.f32 %v3354, %v3392
    %v3411 = vadd.f32 %v3355, %v3393
    %v3412 = vadd.f32 %v3356, %v3394
    %v3413 = vadd.f32 %v3357, %v3395
    %v3414 = vadd.f32 %v3358, %v3396
    %v3415 = vadd.f32 %v3359, %v3397
    %v3416 = vadd.f32 %v3360, %v3398
    %v3417 = vadd.f32 %v3361, %v3399
    %v3418 = vld [vmem:[%s3192 + $0x4] sm:$0xff]
    %v3419 = vld [vmem:[%s3192 + $0xc] sm:$0x1]
    %v3420 = vld [vmem:[%s3192 + $0x14] sm:$0xff]
    %v3421 = vld [vmem:[%s3192 + $0x1c] sm:$0x1]
    %v3422 = vld [vmem:[%s3192 + $0x24] sm:$0xff]
    %v3423 = vld [vmem:[%s3192 + $0x2c] sm:$0x1]
    %v3424 = vld [vmem:[%s3192 + $0x34] sm:$0xff]
    %v3425 = vld [vmem:[%s3192 + $0x3c] sm:$0x1]
    %v3426 = vld [vmem:[%s3192 + $0x44] sm:$0xff]
    %v3427 = vld [vmem:[%s3192 + $0x4c] sm:$0x1]
    %v3428 = vld [vmem:[%s3192 + $0x54] sm:$0xff]
    %v3429 = vld [vmem:[%s3192 + $0x5c] sm:$0x1]
    %v3430 = vld [vmem:[%s3192 + $0x64] sm:$0xff]
    %v3431 = vld [vmem:[%s3192 + $0x6c] sm:$0x1]
    %v3432 = vld [vmem:[%s3192 + $0x74] sm:$0xff]
    %v3433 = vld [vmem:[%s3192 + $0x7c] sm:$0x1]
    %v3434 = vld [vmem:[%s3192 + $0x84] sm:$0xff]
    %v3435 = vld [vmem:[%s3192 + $0x8c] sm:$0x1]
    %v3436 = vld [vmem:[%s3211 + $0x4] sm:$0x1]
    %v3437 = vperm.slane %v3436, 0
    %v3438 = vmul.f32 %v3418, %v3437
    %v3439 = vmul.f32 %v3419, %v3437
    %v3440 = vmul.f32 %v3420, %v3437
    %v3441 = vmul.f32 %v3421, %v3437
    %v3442 = vmul.f32 %v3422, %v3437
    %v3443 = vmul.f32 %v3423, %v3437
    %v3444 = vmul.f32 %v3424, %v3437
    %v3445 = vmul.f32 %v3425, %v3437
    %v3446 = vmul.f32 %v3426, %v3437
    %v3447 = vmul.f32 %v3427, %v3437
    %v3448 = vmul.f32 %v3428, %v3437
    %v3449 = vmul.f32 %v3429, %v3437
    %v3450 = vmul.f32 %v3430, %v3437
    %v3451 = vmul.f32 %v3431, %v3437
    %v3452 = vmul.f32 %v3432, %v3437
    %v3453 = vmul.f32 %v3433, %v3437
    %v3454 = vmul.f32 %v3434, %v3437
    %v3455 = vmul.f32 %v3435, %v3437
    %v3456 = vadd.f32 %v3400, %v3438
    %v3457 = vadd.f32 %v3401, %v3439
    %v3458 = vadd.f32 %v3402, %v3440
    %v3459 = vadd.f32 %v3403, %v3441
    %v3460 = vadd.f32 %v3404, %v3442
    %v3461 = vadd.f32 %v3405, %v3443
    %v3462 = vadd.f32 %v3406, %v3444
    %v3463 = vadd.f32 %v3407, %v3445
    %v3464 = vadd.f32 %v3408, %v3446
    %v3465 = vadd.f32 %v3409, %v3447
    %v3466 = vadd.f32 %v3410, %v3448
    %v3467 = vadd.f32 %v3411, %v3449
    %v3468 = vadd.f32 %v3412, %v3450
    %v3469 = vadd.f32 %v3413, %v3451
    %v3470 = vadd.f32 %v3414, %v3452
    %v3471 = vadd.f32 %v3415, %v3453
    %v3472 = vadd.f32 %v3416, %v3454
    %v3473 = vadd.f32 %v3417, %v3455
    %v3474 = vld [vmem:[%s3192 + $0x5] sm:$0xff]
    %v3475 = vld [vmem:[%s3192 + $0xd] sm:$0x1]
    %v3476 = vld [vmem:[%s3192 + $0x15] sm:$0xff]
    %v3477 = vld [vmem:[%s3192 + $0x1d] sm:$0x1]
    %v3478 = vld [vmem:[%s3192 + $0x25] sm:$0xff]
    %v3479 = vld [vmem:[%s3192 + $0x2d] sm:$0x1]
    %v3480 = vld [vmem:[%s3192 + $0x35] sm:$0xff]
    %v3481 = vld [vmem:[%s3192 + $0x3d] sm:$0x1]
    %v3482 = vld [vmem:[%s3192 + $0x45] sm:$0xff]
    %v3483 = vld [vmem:[%s3192 + $0x4d] sm:$0x1]
    %v3484 = vld [vmem:[%s3192 + $0x55] sm:$0xff]
    %v3485 = vld [vmem:[%s3192 + $0x5d] sm:$0x1]
    %v3486 = vld [vmem:[%s3192 + $0x65] sm:$0xff]
    %v3487 = vld [vmem:[%s3192 + $0x6d] sm:$0x1]
    %v3488 = vld [vmem:[%s3192 + $0x75] sm:$0xff]
    %v3489 = vld [vmem:[%s3192 + $0x7d] sm:$0x1]
    %v3490 = vld [vmem:[%s3192 + $0x85] sm:$0xff]
    %v3491 = vld [vmem:[%s3192 + $0x8d] sm:$0x1]
    %v3492 = vld [vmem:[%s3211 + $0x5] sm:$0x1]
    %v3493 = vperm.slane %v3492, 0
    %v3494 = vmul.f32 %v3474, %v3493
    %v3495 = vmul.f32 %v3475, %v3493
    %v3496 = vmul.f32 %v3476, %v3493
    %v3497 = vmul.f32 %v3477, %v3493
    %v3498 = vmul.f32 %v3478, %v3493
    %v3499 = vmul.f32 %v3479, %v3493
    %v3500 = vmul.f32 %v3480, %v3493
    %v3501 = vmul.f32 %v3481, %v3493
    %v3502 = vmul.f32 %v3482, %v3493
    %v3503 = vmul.f32 %v3483, %v3493
    %v3504 = vmul.f32 %v3484, %v3493
    %v3505 = vmul.f32 %v3485, %v3493
    %v3506 = vmul.f32 %v3486, %v3493
    %v3507 = vmul.f32 %v3487, %v3493
    %v3508 = vmul.f32 %v3488, %v3493
    %v3509 = vmul.f32 %v3489, %v3493
    %v3510 = vmul.f32 %v3490, %v3493
    %v3511 = vmul.f32 %v3491, %v3493
    %v3512 = vadd.f32 %v3456, %v3494
    %v3513 = vadd.f32 %v3457, %v3495
    %v3514 = vadd.f32 %v3458, %v3496
    %v3515 = vadd.f32 %v3459, %v3497
    %v3516 = vadd.f32 %v3460, %v3498
    %v3517 = vadd.f32 %v3461, %v3499
    %v3518 = vadd.f32 %v3462, %v3500
    %v3519 = vadd.f32 %v3463, %v3501
    %v3520 = vadd.f32 %v3464, %v3502
    %v3521 = vadd.f32 %v3465, %v3503
    %v3522 = vadd.f32 %v3466, %v3504
    %v3523 = vadd.f32 %v3467, %v3505
    %v3524 = vadd.f32 %v3468, %v3506
    %v3525 = vadd.f32 %v3469, %v3507
    %v3526 = vadd.f32 %v3470, %v3508
    %v3527 = vadd.f32 %v3471, %v3509
    %v3528 = vadd.f32 %v3472, %v3510
    %v3529 = vadd.f32 %v3473, %v3511
    %v3530 = vld [vmem:[%s3192 + $0x6] sm:$0xff]
    %v3531 = vld [vmem:[%s3192 + $0xe] sm:$0x1]
    %v3532 = vld [vmem:[%s3192 + $0x16] sm:$0xff]
    %v3533 = vld [vmem:[%s3192 + $0x1e] sm:$0x1]
    %v3534 = vld [vmem:[%s3192 + $0x26] sm:$0xff]
    %v3535 = vld [vmem:[%s3192 + $0x2e] sm:$0x1]
    %v3536 = vld [vmem:[%s3192 + $0x36] sm:$0xff]
    %v3537 = vld [vmem:[%s3192 + $0x3e] sm:$0x1]
    %v3538 = vld [vmem:[%s3192 + $0x46] sm:$0xff]
    %v3539 = vld [vmem:[%s3192 + $0x4e] sm:$0x1]
    %v3540 = vld [vmem:[%s3192 + $0x56] sm:$0xff]
    %v3541 = vld [vmem:[%s3192 + $0x5e] sm:$0x1]
    %v3542 = vld [vmem:[%s3192 + $0x66] sm:$0xff]
    %v3543 = vld [vmem:[%s3192 + $0x6e] sm:$0x1]
    %v3544 = vld [vmem:[%s3192 + $0x76] sm:$0xff]
    %v3545 = vld [vmem:[%s3192 + $0x7e] sm:$0x1]
    %v3546 = vld [vmem:[%s3192 + $0x86] sm:$0xff]
    %v3547 = vld [vmem:[%s3192 + $0x8e] sm:$0x1]
    %v3548 = vld [vmem:[%s3211 + $0x6] sm:$0x1]
    %v3549 = vperm.slane %v3548, 0
    %v3550 = vmul.f32 %v3530, %v3549
    %v3551 = vmul.f32 %v3531, %v3549
    %v3552 = vmul.f32 %v3532, %v3549
    %v3553 = vmul.f32 %v3533, %v3549
    %v3554 = vmul.f32 %v3534, %v3549
    %v3555 = vmul.f32 %v3535, %v3549
    %v3556 = vmul.f32 %v3536, %v3549
    %v3557 = vmul.f32 %v3537, %v3549
    %v3558 = vmul.f32 %v3538, %v3549
    %v3559 = vmul.f32 %v3539, %v3549
    %v3560 = vmul.f32 %v3540, %v3549
    %v3561 = vmul.f32 %v3541, %v3549
    %v3562 = vmul.f32 %v3542, %v3549
    %v3563 = vmul.f32 %v3543, %v3549
    %v3564 = vmul.f32 %v3544, %v3549
    %v3565 = vmul.f32 %v3545, %v3549
    %v3566 = vmul.f32 %v3546, %v3549
    %v3567 = vmul.f32 %v3547, %v3549
    %v3568 = vadd.f32 %v3512, %v3550
    %v3569 = vadd.f32 %v3513, %v3551
    %v3570 = vadd.f32 %v3514, %v3552
    %v3571 = vadd.f32 %v3515, %v3553
    %v3572 = vadd.f32 %v3516, %v3554
    %v3573 = vadd.f32 %v3517, %v3555
    %v3574 = vadd.f32 %v3518, %v3556
    %v3575 = vadd.f32 %v3519, %v3557
    %v3576 = vadd.f32 %v3520, %v3558
    %v3577 = vadd.f32 %v3521, %v3559
    %v3578 = vadd.f32 %v3522, %v3560
    %v3579 = vadd.f32 %v3523, %v3561
    %v3580 = vadd.f32 %v3524, %v3562
    %v3581 = vadd.f32 %v3525, %v3563
    %v3582 = vadd.f32 %v3526, %v3564
    %v3583 = vadd.f32 %v3527, %v3565
    %v3584 = vadd.f32 %v3528, %v3566
    %v3585 = vadd.f32 %v3529, %v3567
    %v3586 = vld [vmem:[%s3192 + $0x7] sm:$0xff]
    %v3587 = vld [vmem:[%s3192 + $0xf] sm:$0x1]
    %v3588 = vld [vmem:[%s3192 + $0x17] sm:$0xff]
    %v3589 = vld [vmem:[%s3192 + $0x1f] sm:$0x1]
    %v3590 = vld [vmem:[%s3192 + $0x27] sm:$0xff]
    %v3591 = vld [vmem:[%s3192 + $0x2f] sm:$0x1]
    %v3592 = vld [vmem:[%s3192 + $0x37] sm:$0xff]
    %v3593 = vld [vmem:[%s3192 + $0x3f] sm:$0x1]
    %v3594 = vld [vmem:[%s3192 + $0x47] sm:$0xff]
    %v3595 = vld [vmem:[%s3192 + $0x4f] sm:$0x1]
    %v3596 = vld [vmem:[%s3192 + $0x57] sm:$0xff]
    %v3597 = vld [vmem:[%s3192 + $0x5f] sm:$0x1]
    %v3598 = vld [vmem:[%s3192 + $0x67] sm:$0xff]
    %v3599 = vld [vmem:[%s3192 + $0x6f] sm:$0x1]
    %v3600 = vld [vmem:[%s3192 + $0x77] sm:$0xff]
    %v3601 = vld [vmem:[%s3192 + $0x7f] sm:$0x1]
    %v3602 = vld [vmem:[%s3192 + $0x87] sm:$0xff]
    %v3603 = vld [vmem:[%s3192 + $0x8f] sm:$0x1]
    %v3604 = vld [vmem:[%s3211 + $0x7] sm:$0x1]
    %v3605 = vperm.slane %v3604, 0
    %v3606 = vmul.f32 %v3586, %v3605
    %v3607 = vmul.f32 %v3587, %v3605
    %v3608 = vmul.f32 %v3588, %v3605
    %v3609 = vmul.f32 %v3589, %v3605
    %v3610 = vmul.f32 %v3590, %v3605
    %v3611 = vmul.f32 %v3591, %v3605
    %v3612 = vmul.f32 %v3592, %v3605
    %v3613 = vmul.f32 %v3593, %v3605
    %v3614 = vmul.f32 %v3594, %v3605
    %v3615 = vmul.f32 %v3595, %v3605
    %v3616 = vmul.f32 %v3596, %v3605
    %v3617 = vmul.f32 %v3597, %v3605
    %v3618 = vmul.f32 %v3598, %v3605
    %v3619 = vmul.f32 %v3599, %v3605
    %v3620 = vmul.f32 %v3600, %v3605
    %v3621 = vmul.f32 %v3601, %v3605
    %v3622 = vmul.f32 %v3602, %v3605
    %v3623 = vmul.f32 %v3603, %v3605
    %v3624 = vadd.f32 %v3568, %v3606
    %v3625 = vadd.f32 %v3569, %v3607
    %v3626 = vadd.f32 %v3570, %v3608
    %v3627 = vadd.f32 %v3571, %v3609
    %v3628 = vadd.f32 %v3572, %v3610
    %v3629 = vadd.f32 %v3573, %v3611
    %v3630 = vadd.f32 %v3574, %v3612
    %v3631 = vadd.f32 %v3575, %v3613
    %v3632 = vadd.f32 %v3576, %v3614
    %v3633 = vadd.f32 %v3577, %v3615
    %v3634 = vadd.f32 %v3578, %v3616
    %v3635 = vadd.f32 %v3579, %v3617
    %v3636 = vadd.f32 %v3580, %v3618
    %v3637 = vadd.f32 %v3581, %v3619
    %v3638 = vadd.f32 %v3582, %v3620
    %v3639 = vadd.f32 %v3583, %v3621
    %v3640 = vadd.f32 %v3584, %v3622
    %v3641 = vadd.f32 %v3585, %v3623
    %3642 = vst [vmem:[#allocation7] sm:$0xff] %v3624
    %3643 = vst [vmem:[#allocation7 + $0x8] sm:$0x1] %v3625
    %3644 = vst [vmem:[#allocation7 + $0x10] sm:$0xff] %v3626
    %3645 = vst [vmem:[#allocation7 + $0x18] sm:$0x1] %v3627
    %3646 = vst [vmem:[#allocation7 + $0x20] sm:$0xff] %v3628
    %3647 = vst [vmem:[#allocation7 + $0x28] sm:$0x1] %v3629
    %3648 = vst [vmem:[#allocation7 + $0x30] sm:$0xff] %v3630
    %3649 = vst [vmem:[#allocation7 + $0x38] sm:$0x1] %v3631
    %3650 = vst [vmem:[#allocation7 + $0x40] sm:$0xff] %v3632
    %3651 = vst [vmem:[#allocation7 + $0x48] sm:$0x1] %v3633
    %3652 = vst [vmem:[#allocation7 + $0x50] sm:$0xff] %v3634
    %3653 = vst [vmem:[#allocation7 + $0x58] sm:$0x1] %v3635
    %3654 = vst [vmem:[#allocation7 + $0x60] sm:$0xff] %v3636
    %3655 = vst [vmem:[#allocation7 + $0x68] sm:$0x1] %v3637
    %3656 = vst [vmem:[#allocation7 + $0x70] sm:$0xff] %v3638
    %3657 = vst [vmem:[#allocation7 + $0x78] sm:$0x1] %v3639
    %3658 = vst [vmem:[#allocation7 + $0x80] sm:$0xff] %v3640
    %3659 = vst [vmem:[#allocation7 + $0x88] sm:$0x1] %v3641
    // Predicated region
    $region18: #{tpu_custom_call.1} parent=1 // pred_check
      _
    $region19: #{tpu_custom_call.1} parent=1 // pred_check_branch
      %3661 = sbr.rel (0) target = $region21
    $region20: #{tpu_custom_call.1} parent=1 // pred_region
      %3663 = vsyncadd [#allocation4], 0
      %s3664 = sshll.u32 [#allocation7], 4
      %s3665 = int_to_ptr.vmem [resolvable:$true] %s3664
      %s3666 = sshll.u32 %s2, 4
      %s3667 = int_to_ptr.hbm [resolvable:$true] %s3666
      %3672 = dma.vmem_to_hbm [thread:$0]  %s3665, 2304, %s3667, [#allocation4], 128, 128, 8
    $region21: #{tpu_custom_call.1} parent=1 // pred_fallthru
      _
    // Predicated region
    $region22: #{tpu_custom_call.1} parent=1 // pred_check
      _
    $region23: #{tpu_custom_call.1} parent=1 // pred_check_branch
      %3674 = sbr.rel (0) target = $region25
    $region24: #{tpu_custom_call.1} parent=1 // pred_region
      %3676 = dma.done [#allocation4], 2304
    $region25: #{tpu_custom_call.1} parent=1 // pred_fallthru
      _
    %3677 = vsyncpa [#allocation3], 1
    %3678 = vsyncpa [#allocation6], 1
    %3679 = vsyncpa [#allocation4], 1

</llo_original>
